<compile_context>
chip_gen: v6e
topology: v6e:2x2x1
jax: 0.10.0
libtpu: 0.0.40
codegen_flags: <defaults>
</compile_context>

<pallas_src>
import math
import jax
import jax.numpy as jnp
from jax.experimental import pallas as pl
from jax.experimental.pallas import tpu as pltpu  # noqa: F401  (kept for TPU-specific tweaks)

# ----- hyperparameters (opt dict of the PyTorch module) -----
S = 8              # bptt / sequence length
B = 2              # batch size
D = 32             # d_model
NHEAD = 2          # nhead
HEAD_DIM = D // NHEAD
DHID = 64          # d_hid
NLAYERS = 2        # nlayers
NTOKEN = 50        # vocab size
NTOKEN_PAD = 128   # lane-dense padded vocab width for the output store
BPTT = S
LN_EPS = 1e-5      # PyTorch nn.LayerNorm default
R = S * B          # flattened rows, r = s*B + b  (seq-major == PyTorch [S, B] layout)
EMB_SCALE = math.sqrt(D)


# ----------------- in-kernel math helpers -----------------
def _erf_poly(x):
    # Abramowitz & Stegun 7.1.26 polynomial erf (max abs err ~1.5e-7), so GELU matches
    # PyTorch's exact (erf-based) F.gelu to f32 noise without an erf lowering in Mosaic.
    a1, a2, a3, a4, a5 = 0.254829592, -0.284496736, 1.421413741, -1.453152027, 1.061405429
    p = 0.3275911
    sgn = jnp.where(x >= 0.0, 1.0, -1.0)
    ax = jnp.abs(x)
    t = 1.0 / (1.0 + p * ax)
    y = 1.0 - (((((a5 * t + a4) * t) + a3) * t + a2) * t + a1) * t * jnp.exp(-ax * ax)
    return sgn * y


def _gelu_exact(x):
    return 0.5 * x * (1.0 + _erf_poly(x * (1.0 / math.sqrt(2.0))))


def _layernorm(x, w, b):
    mu = jnp.mean(x, axis=-1, keepdims=True)
    var = jnp.mean(jnp.square(x - mu), axis=-1, keepdims=True)
    return (x - mu) * jax.lax.rsqrt(var + LN_EPS) * w + b


# ----------------- fused Pallas kernel (single invocation, no grid) -----------------
def fused_transformer_kernel(ids_ref, emb_ref, pe_ref,
                             wq_ref, bq_ref, wk_ref, bk_ref, wv_ref, bv_ref,
                             wo_ref, bo_ref,
                             n1w_ref, n1b_ref, n2w_ref, n2b_ref,
                             w1_ref, b1_ref, w2_ref, b2_ref,
                             fnw_ref, fnb_ref, lw_ref, lb_ref,
                             out_ref):
    """Whole forward pass for the [S*B, D] slab in one shot."""
    # --- embedding lookup via one-hot matmul (exact row copy); sqrt(D) pre-folded ---
    ids = ids_ref[...]                                                   # [R, 1] int32
    vocab_iota = jax.lax.broadcasted_iota(jnp.int32, (R, NTOKEN), 1)
    onehot = (vocab_iota == ids).astype(jnp.float32)                     # [R, NTOKEN]
    x = jnp.dot(onehot, emb_ref[...], preferred_element_type=jnp.float32)  # [R, D]

    # --- PositionalEncoding.forward: x = x + pe[:S]; dropout = identity in eval ---
    x = x + pe_ref[...]

    # Attention batch mask: row r holds (seq = r // B, batch = r % B); a row may only
    # attend to columns of the same batch element.
    row_b = jax.lax.broadcasted_iota(jnp.int32, (R, R), 0) % B
    col_b = jax.lax.broadcasted_iota(jnp.int32, (R, R), 1) % B
    neg_mask = jnp.where(row_b == col_b, 0.0, -1e30).astype(jnp.float32)

    for l in range(NLAYERS):                      # static unrolled layer loop
        # --- self-attention block (norm_first) ---
        xn = _layernorm(x, n1w_ref[l], n1b_ref[l])
        attn = jnp.zeros((R, D), jnp.float32)
        for h in range(NHEAD):                    # static head loop (2 iters)
            lh = l * NHEAD + h
            # Per-head projection slabs: every output starts at lane 0 (no lane slicing).
            qh = jnp.dot(xn, wq_ref[lh], preferred_element_type=jnp.float32) + bq_ref[lh]
            kh = jnp.dot(xn, wk_ref[lh], preferred_element_type=jnp.float32) + bk_ref[lh]
            vh = jnp.dot(xn, wv_ref[lh], preferred_element_type=jnp.float32) + bv_ref[lh]
            s = jax.lax.dot_general(qh, kh, (((1,), (1,)), ((), ())),
                                    preferred_element_type=jnp.float32)  # [R, R]
            s = s + neg_mask
            s = s - jnp.max(s, axis=-1, keepdims=True)
            e = jnp.exp(s)
            p = e / jnp.sum(e, axis=-1, keepdims=True)                   # exact softmax
            ctx = jnp.dot(p, vh, preferred_element_type=jnp.float32)     # [R, HEAD_DIM]
            # Per-head out-projection slab; sum over heads == concat(ctx) @ W_o.
            attn = attn + jnp.dot(ctx, wo_ref[lh], preferred_element_type=jnp.float32)
        x = x + attn + bo_ref[l]                  # residual (dropout1 = identity in eval)

        # --- feed-forward block (norm_first) ---
        xn2 = _layernorm(x, n2w_ref[l], n2b_ref[l])
        h1 = jnp.dot(xn2, w1_ref[l], preferred_element_type=jnp.float32) + b1_ref[l]
        h1 = _gelu_exact(h1)
        ff = jnp.dot(h1, w2_ref[l], preferred_element_type=jnp.float32) + b2_ref[l]
        x = x + ff                                # residual (dropout2 = identity in eval)

    # --- final LayerNorm + lane-padded vocab projection (unmasked 128-lane store) ---
    xn = _layernorm(x, fnw_ref[...], fnb_ref[...])
    out_ref[...] = jnp.dot(xn, lw_ref[...],
                           preferred_element_type=jnp.float32) + lb_ref[...]


# ----------------- pallas_call wrapper -----------------
def transformer_forward(src, params):
    """src: int32 [S, B]  ->  logits float32 [S, B, NTOKEN]."""
    ids = src.reshape(R, 1).astype(jnp.int32)     # row-major [S, B] flatten == r = s*B + b
    args = (ids, params["emb"], params["pe_rows"],
            params["wq"], params["bq"], params["wk"], params["bk"],
            params["wv"], params["bv"], params["wo"], params["bo"],
            params["n1w"], params["n1b"], params["n2w"], params["n2b"],
            params["w1_t"], params["b1"], params["w2_t"], params["b2"],
            params["norm_w"], params["norm_b"], params["lin_wt_pad"], params["lin_b_pad"])
    # No grid, no BlockSpecs: every array is a single whole-array VMEM block; no
    # pipeline machinery or double-buffering for a single-step kernel.
    out = pl.pallas_call(
        fused_transformer_kernel,
        out_shape=jax.ShapeDtypeStruct((R, NTOKEN_PAD), jnp.float32),
    )(*args)
    # Rows are already seq-major -> reshape is a view; slice off the lane padding.
    return out[:, :NTOKEN].reshape(S, B, NTOKEN)


# ----------------- parameter construction (plain JAX, done once) -----------------
def build_pe(max_len, d_model):
    position = jnp.arange(max_len, dtype=jnp.float32)[:, None]
    div_term = jnp.exp(jnp.arange(0, d_model, 2, dtype=jnp.float32)
                       * (-math.log(10000.0) / d_model))
    pe = jnp.zeros((max_len, 1, d_model), jnp.float32)
    pe = pe.at[:, 0, 0::2].set(jnp.sin(position * div_term))
    pe = pe.at[:, 0, 1::2].set(jnp.cos(position * div_term))
    return pe


def init_params(key):
    keys = jax.random.split(key, 8)
    attn_scale = 1.0 / math.sqrt(HEAD_DIM)

    # Embedding table with the sqrt(D) scale pre-folded (host-side precompute).
    emb = jax.random.normal(keys[0], (NTOKEN, D), jnp.float32) * 0.05 * EMB_SCALE

    # Per-(layer, head) projection slabs, flattened to a leading NLAYERS*NHEAD axis that
    # is indexed statically in-kernel.  1/sqrt(HEAD_DIM) is folded into W_q / b_q.
    wq = jax.random.normal(keys[1], (NLAYERS * NHEAD, D, HEAD_DIM), jnp.float32) * 0.05
    wq = wq * attn_scale
    bq = jnp.zeros((NLAYERS * NHEAD, 1, HEAD_DIM), jnp.float32)
    wk = jax.random.normal(keys[2], (NLAYERS * NHEAD, D, HEAD_DIM), jnp.float32) * 0.05
    bk = jnp.zeros((NLAYERS * NHEAD, 1, HEAD_DIM), jnp.float32)
    wv = jax.random.normal(keys[3], (NLAYERS * NHEAD, D, HEAD_DIM), jnp.float32) * 0.05
    bv = jnp.zeros((NLAYERS * NHEAD, 1, HEAD_DIM), jnp.float32)
    # Per-head out-projection slabs: sum_h ctx_h @ wo[h] == concat(ctx) @ W_o.
    wo = jax.random.normal(keys[4], (NLAYERS * NHEAD, HEAD_DIM, D), jnp.float32) * 0.05
    bo = jnp.zeros((NLAYERS, 1, D), jnp.float32)

    n1w = jnp.ones((NLAYERS, 1, D), jnp.float32)
    n1b = jnp.zeros((NLAYERS, 1, D), jnp.float32)
    n2w = jnp.ones((NLAYERS, 1, D), jnp.float32)
    n2b = jnp.zeros((NLAYERS, 1, D), jnp.float32)
    w1_t = jax.random.normal(keys[5], (NLAYERS, D, DHID), jnp.float32) * 0.05     # linear1^T
    b1 = jnp.zeros((NLAYERS, 1, DHID), jnp.float32)
    w2_t = jax.random.normal(keys[6], (NLAYERS, DHID, D), jnp.float32) * 0.05     # linear2^T
    b2 = jnp.zeros((NLAYERS, 1, D), jnp.float32)

    norm_w = jnp.ones((1, D), jnp.float32)
    norm_b = jnp.zeros((1, D), jnp.float32)
    lin_wt = jax.random.normal(keys[7], (D, NTOKEN), jnp.float32) * 0.05          # linear^T
    lin_wt_pad = jnp.zeros((D, NTOKEN_PAD), jnp.float32).at[:, :NTOKEN].set(lin_wt)
    lin_b_pad = jnp.zeros((1, NTOKEN_PAD), jnp.float32)   # zero-initialized bias, lane-padded

    # Positional encoding rows replicated to the flattened [S*B, D] layout (row r -> pe[r // B]).
    pe_rows = jnp.repeat(build_pe(BPTT, D)[:S, 0, :], B, axis=0)

    return {"emb": emb, "pe_rows": pe_rows,
            "wq": wq, "bq": bq, "wk": wk, "bk": bk, "wv": wv, "bv": bv,
            "wo": wo, "bo": bo,
            "n1w": n1w, "n1b": n1b, "n2w": n2w, "n2b": n2b,
            "w1_t": w1_t, "b1": b1, "w2_t": w2_t, "b2": b2,
            "norm_w": norm_w, "norm_b": norm_b,
            "lin_wt_pad": lin_wt_pad, "lin_b_pad": lin_b_pad}


if __name__ == "__main__":
    key = jax.random.PRNGKey(0)
    k_param, k_src = jax.random.split(key)
    params = init_params(k_param)
    # tokens in [0, NTOKEN-1); reserve NTOKEN-1 as '<mask>' (not present -> cls path inactive)
    src = jax.random.randint(k_src, (S, B), 0, NTOKEN - 1, dtype=jnp.int32)

    logits = transformer_forward(src, params)
    logits = jax.block_until_ready(logits)
    assert logits.shape == (S, B, NTOKEN)
    assert bool(jnp.all(jnp.isfinite(logits)))
    print("KERNEL_OK")
</pallas_src>

<mosaic_0001>
module attributes {stable_mosaic.version = 11 : i64} {
  func.func @fused_transformer_kernel(%arg0: memref<16x1xi32, #tpu.memory_space<vmem>>, %arg1: memref<50x32xf32, #tpu.memory_space<vmem>>, %arg2: memref<16x32xf32, #tpu.memory_space<vmem>>, %arg3: memref<4x32x16xf32, #tpu.memory_space<vmem>>, %arg4: memref<4x1x16xf32, #tpu.memory_space<vmem>>, %arg5: memref<4x32x16xf32, #tpu.memory_space<vmem>>, %arg6: memref<4x1x16xf32, #tpu.memory_space<vmem>>, %arg7: memref<4x32x16xf32, #tpu.memory_space<vmem>>, %arg8: memref<4x1x16xf32, #tpu.memory_space<vmem>>, %arg9: memref<4x16x32xf32, #tpu.memory_space<vmem>>, %arg10: memref<2x1x32xf32, #tpu.memory_space<vmem>>, %arg11: memref<2x1x32xf32, #tpu.memory_space<vmem>>, %arg12: memref<2x1x32xf32, #tpu.memory_space<vmem>>, %arg13: memref<2x1x32xf32, #tpu.memory_space<vmem>>, %arg14: memref<2x1x32xf32, #tpu.memory_space<vmem>>, %arg15: memref<2x32x64xf32, #tpu.memory_space<vmem>>, %arg16: memref<2x1x64xf32, #tpu.memory_space<vmem>>, %arg17: memref<2x64x32xf32, #tpu.memory_space<vmem>>, %arg18: memref<2x1x32xf32, #tpu.memory_space<vmem>>, %arg19: memref<1x32xf32, #tpu.memory_space<vmem>>, %arg20: memref<1x32xf32, #tpu.memory_space<vmem>>, %arg21: memref<32x128xf32, #tpu.memory_space<vmem>>, %arg22: memref<1x128xf32, #tpu.memory_space<vmem>>, %arg23: memref<16x128xf32, #tpu.memory_space<vmem>>) attributes {dimension_semantics = [], scalar_prefetch = 0 : i64, scratch_operands = 0 : i64, tpu.core_type = #tpu.core_type<tc>} {
    %c0 = arith.constant 0 : index
    %c0_0 = arith.constant 0 : index
    %0 = vector.load %arg0[%c0, %c0_0] : memref<16x1xi32, #tpu.memory_space<vmem>>, vector<16x1xi32>
    %1 = tpu.iota {dimensions = array<i32: 1>} : vector<16x50xi32>
    %2 = vector.broadcast %0 : vector<16x1xi32> to vector<16x50xi32>
    %3 = arith.cmpi eq, %1, %2 : vector<16x50xi32>
    %4 = arith.extui %3 : vector<16x50xi1> to vector<16x50xi32>
    %5 = arith.sitofp %4 : vector<16x50xi32> to vector<16x50xf32>
    %c0_1 = arith.constant 0 : index
    %c0_2 = arith.constant 0 : index
    %6 = vector.load %arg1[%c0_1, %c0_2] : memref<50x32xf32, #tpu.memory_space<vmem>>, vector<50x32xf32>
    %cst = arith.constant dense<0.000000e+00> : vector<16x32xf32>
    %7 = tpu.matmul %5, %6, %cst {dimension_numbers = #tpu.dot_dimension_numbers<[1], [0], [0], [1], [0, 0, 1, 1], [], []>} : vector<16x50xf32>, vector<50x32xf32>, vector<16x32xf32> -> vector<16x32xf32>
    %c0_3 = arith.constant 0 : index
    %c0_4 = arith.constant 0 : index
    %8 = vector.load %arg2[%c0_3, %c0_4] : memref<16x32xf32, #tpu.memory_space<vmem>>, vector<16x32xf32>
    %9 = arith.addf %7, %8 : vector<16x32xf32>
    %10 = tpu.iota {dimensions = array<i32: 0>} : vector<16x16xi32>
    %c2_i32 = arith.constant 2 : i32
    %c0_i32 = arith.constant 0 : i32
    %11 = arith.cmpi eq, %c2_i32, %c0_i32 : i32
    %c1_i32 = arith.constant 1 : i32
    %12 = arith.select %11, %c1_i32, %c2_i32 : i32
    %13 = vector.broadcast %12 : i32 to vector<16x16xi32>
    %14 = arith.remsi %10, %13 : vector<16x16xi32>
    %c0_i32_5 = arith.constant 0 : i32
    %15 = vector.broadcast %c0_i32_5 : i32 to vector<16x16xi32>
    %16 = arith.cmpi ne, %14, %15 : vector<16x16xi32>
    %c0_i32_6 = arith.constant 0 : i32
    %17 = vector.broadcast %c0_i32_6 : i32 to vector<16x16xi32>
    %18 = arith.cmpi slt, %14, %17 : vector<16x16xi32>
    %c0_i32_7 = arith.constant 0 : i32
    %19 = arith.cmpi slt, %12, %c0_i32_7 : i32
    %20 = vector.broadcast %19 : i1 to vector<16x16xi1>
    %21 = vector.broadcast %20 : vector<16x16xi1> to vector<16x16xi1>
    %22 = arith.xori %18, %21 : vector<16x16xi1>
    %23 = arith.andi %22, %16 : vector<16x16xi1>
    %24 = vector.broadcast %12 : i32 to vector<16x16xi32>
    %25 = arith.addi %14, %24 : vector<16x16xi32>
    %26 = arith.select %23, %25, %14 : vector<16x16xi1>, vector<16x16xi32>
    %27 = tpu.iota {dimensions = array<i32: 1>} : vector<16x16xi32>
    %c2_i32_8 = arith.constant 2 : i32
    %c0_i32_9 = arith.constant 0 : i32
    %28 = arith.cmpi eq, %c2_i32_8, %c0_i32_9 : i32
    %c1_i32_10 = arith.constant 1 : i32
    %29 = arith.select %28, %c1_i32_10, %c2_i32_8 : i32
    %30 = vector.broadcast %29 : i32 to vector<16x16xi32>
    %31 = arith.remsi %27, %30 : vector<16x16xi32>
    %c0_i32_11 = arith.constant 0 : i32
    %32 = vector.broadcast %c0_i32_11 : i32 to vector<16x16xi32>
    %33 = arith.cmpi ne, %31, %32 : vector<16x16xi32>
    %c0_i32_12 = arith.constant 0 : i32
    %34 = vector.broadcast %c0_i32_12 : i32 to vector<16x16xi32>
    %35 = arith.cmpi slt, %31, %34 : vector<16x16xi32>
    %c0_i32_13 = arith.constant 0 : i32
    %36 = arith.cmpi slt, %29, %c0_i32_13 : i32
    %37 = vector.broadcast %36 : i1 to vector<16x16xi1>
    %38 = vector.broadcast %37 : vector<16x16xi1> to vector<16x16xi1>
    %39 = arith.xori %35, %38 : vector<16x16xi1>
    %40 = arith.andi %39, %33 : vector<16x16xi1>
    %41 = vector.broadcast %29 : i32 to vector<16x16xi32>
    %42 = arith.addi %31, %41 : vector<16x16xi32>
    %43 = arith.select %40, %42, %31 : vector<16x16xi1>, vector<16x16xi32>
    %44 = arith.cmpi eq, %26, %43 : vector<16x16xi32>
    %cst_14 = arith.constant 0.000000e+00 : f32
    %cst_15 = arith.constant -1.000000e+30 : f32
    %45 = vector.broadcast %cst_14 : f32 to vector<16x16xf32>
    %46 = vector.broadcast %cst_15 : f32 to vector<16x16xf32>
    %47 = arith.select %44, %45, %46 : vector<16x16xi1>, vector<16x16xf32>
    %c0_16 = arith.constant 0 : index
    %c0_17 = arith.constant 0 : index
    %c0_18 = arith.constant 0 : index
    %48 = vector.load %arg11[%c0_16, %c0_17, %c0_18] : memref<2x1x32xf32, #tpu.memory_space<vmem>>, vector<1x1x32xf32>
    %49 = vector.shape_cast %48 : vector<1x1x32xf32> to vector<1x32xf32>
    %c0_19 = arith.constant 0 : index
    %c0_20 = arith.constant 0 : index
    %c0_21 = arith.constant 0 : index
    %50 = vector.load %arg12[%c0_19, %c0_20, %c0_21] : memref<2x1x32xf32, #tpu.memory_space<vmem>>, vector<1x1x32xf32>
    %51 = vector.shape_cast %50 : vector<1x1x32xf32> to vector<1x32xf32>
    %cst_22 = arith.constant dense<0.000000e+00> : vector<16xf32>
    %52 = vector.multi_reduction <add>, %9, %cst_22 [1] : vector<16x32xf32> to vector<16xf32>
    %53 = vector.shape_cast %52 : vector<16xf32> to vector<16x1xf32>
    %cst_23 = arith.constant 3.200000e+01 : f32
    %54 = vector.broadcast %cst_23 : f32 to vector<16x1xf32>
    %55 = arith.divf %53, %54 : vector<16x1xf32>
    %56 = vector.broadcast %55 : vector<16x1xf32> to vector<16x32xf32>
    %57 = arith.subf %9, %56 : vector<16x32xf32>
    %58 = arith.mulf %57, %57 : vector<16x32xf32>
    %cst_24 = arith.constant dense<0.000000e+00> : vector<16xf32>
    %59 = vector.multi_reduction <add>, %58, %cst_24 [1] : vector<16x32xf32> to vector<16xf32>
    %60 = vector.shape_cast %59 : vector<16xf32> to vector<16x1xf32>
    %cst_25 = arith.constant 3.200000e+01 : f32
    %61 = vector.broadcast %cst_25 : f32 to vector<16x1xf32>
    %62 = arith.divf %60, %61 : vector<16x1xf32>
    %63 = vector.broadcast %55 : vector<16x1xf32> to vector<16x32xf32>
    %64 = arith.subf %9, %63 : vector<16x32xf32>
    %cst_26 = arith.constant 9.99999974E-6 : f32
    %65 = vector.broadcast %cst_26 : f32 to vector<16x1xf32>
    %66 = arith.addf %62, %65 : vector<16x1xf32>
    %67 = math.rsqrt %66 : vector<16x1xf32>
    %68 = vector.broadcast %67 : vector<16x1xf32> to vector<16x32xf32>
    %69 = arith.mulf %64, %68 : vector<16x32xf32>
    %70 = vector.broadcast %49 : vector<1x32xf32> to vector<16x32xf32>
    %71 = arith.mulf %69, %70 : vector<16x32xf32>
    %72 = vector.broadcast %51 : vector<1x32xf32> to vector<16x32xf32>
    %73 = arith.addf %71, %72 : vector<16x32xf32>
    %cst_27 = arith.constant 0.000000e+00 : f32
    %74 = vector.broadcast %cst_27 : f32 to vector<16x32xf32>
    %c0_28 = arith.constant 0 : index
    %c0_29 = arith.constant 0 : index
    %c0_30 = arith.constant 0 : index
    %75 = vector.load %arg3[%c0_28, %c0_29, %c0_30] : memref<4x32x16xf32, #tpu.memory_space<vmem>>, vector<1x32x16xf32>
    %76 = vector.shape_cast %75 : vector<1x32x16xf32> to vector<32x16xf32>
    %cst_31 = arith.constant dense<0.000000e+00> : vector<16x16xf32>
    %77 = tpu.matmul %73, %76, %cst_31 {dimension_numbers = #tpu.dot_dimension_numbers<[1], [0], [0], [1], [0, 0, 1, 1], [], []>} : vector<16x32xf32>, vector<32x16xf32>, vector<16x16xf32> -> vector<16x16xf32>
    %c0_32 = arith.constant 0 : index
    %c0_33 = arith.constant 0 : index
    %c0_34 = arith.constant 0 : index
    %78 = vector.load %arg4[%c0_32, %c0_33, %c0_34] : memref<4x1x16xf32, #tpu.memory_space<vmem>>, vector<1x1x16xf32>
    %79 = vector.shape_cast %78 : vector<1x1x16xf32> to vector<1x16xf32>
    %80 = vector.broadcast %79 : vector<1x16xf32> to vector<16x16xf32>
    %81 = arith.addf %77, %80 : vector<16x16xf32>
    %c0_35 = arith.constant 0 : index
    %c0_36 = arith.constant 0 : index
    %c0_37 = arith.constant 0 : index
    %82 = vector.load %arg5[%c0_35, %c0_36, %c0_37] : memref<4x32x16xf32, #tpu.memory_space<vmem>>, vector<1x32x16xf32>
    %83 = vector.shape_cast %82 : vector<1x32x16xf32> to vector<32x16xf32>
    %cst_38 = arith.constant dense<0.000000e+00> : vector<16x16xf32>
    %84 = tpu.matmul %73, %83, %cst_38 {dimension_numbers = #tpu.dot_dimension_numbers<[1], [0], [0], [1], [0, 0, 1, 1], [], []>} : vector<16x32xf32>, vector<32x16xf32>, vector<16x16xf32> -> vector<16x16xf32>
    %c0_39 = arith.constant 0 : index
    %c0_40 = arith.constant 0 : index
    %c0_41 = arith.constant 0 : index
    %85 = vector.load %arg6[%c0_39, %c0_40, %c0_41] : memref<4x1x16xf32, #tpu.memory_space<vmem>>, vector<1x1x16xf32>
    %86 = vector.shape_cast %85 : vector<1x1x16xf32> to vector<1x16xf32>
    %87 = vector.broadcast %86 : vector<1x16xf32> to vector<16x16xf32>
    %88 = arith.addf %84, %87 : vector<16x16xf32>
    %c0_42 = arith.constant 0 : index
    %c0_43 = arith.constant 0 : index
    %c0_44 = arith.constant 0 : index
    %89 = vector.load %arg7[%c0_42, %c0_43, %c0_44] : memref<4x32x16xf32, #tpu.memory_space<vmem>>, vector<1x32x16xf32>
    %90 = vector.shape_cast %89 : vector<1x32x16xf32> to vector<32x16xf32>
    %cst_45 = arith.constant dense<0.000000e+00> : vector<16x16xf32>
    %91 = tpu.matmul %73, %90, %cst_45 {dimension_numbers = #tpu.dot_dimension_numbers<[1], [0], [0], [1], [0, 0, 1, 1], [], []>} : vector<16x32xf32>, vector<32x16xf32>, vector<16x16xf32> -> vector<16x16xf32>
    %c0_46 = arith.constant 0 : index
    %c0_47 = arith.constant 0 : index
    %c0_48 = arith.constant 0 : index
    %92 = vector.load %arg8[%c0_46, %c0_47, %c0_48] : memref<4x1x16xf32, #tpu.memory_space<vmem>>, vector<1x1x16xf32>
    %93 = vector.shape_cast %92 : vector<1x1x16xf32> to vector<1x16xf32>
    %94 = vector.broadcast %93 : vector<1x16xf32> to vector<16x16xf32>
    %95 = arith.addf %91, %94 : vector<16x16xf32>
    %cst_49 = arith.constant dense<0.000000e+00> : vector<16x16xf32>
    %96 = tpu.matmul %81, %88, %cst_49 {dimension_numbers = #tpu.dot_dimension_numbers<[1], [1], [0], [0], [0, 0, 1, 0], [], []>} : vector<16x16xf32>, vector<16x16xf32>, vector<16x16xf32> -> vector<16x16xf32>
    %97 = arith.addf %96, %47 : vector<16x16xf32>
    %cst_50 = arith.constant dense<0xFF800000> : vector<16xf32>
    %98 = vector.multi_reduction <maximumf>, %97, %cst_50 [1] : vector<16x16xf32> to vector<16xf32>
    %99 = vector.shape_cast %98 : vector<16xf32> to vector<16x1xf32>
    %100 = vector.broadcast %99 : vector<16x1xf32> to vector<16x16xf32>
    %101 = arith.subf %97, %100 : vector<16x16xf32>
    %102 = math.exp %101 : vector<16x16xf32>
    %cst_51 = arith.constant dense<0.000000e+00> : vector<16xf32>
    %103 = vector.multi_reduction <add>, %102, %cst_51 [1] : vector<16x16xf32> to vector<16xf32>
    %104 = vector.shape_cast %103 : vector<16xf32> to vector<16x1xf32>
    %105 = vector.broadcast %104 : vector<16x1xf32> to vector<16x16xf32>
    %106 = arith.divf %102, %105 : vector<16x16xf32>
    %cst_52 = arith.constant dense<0.000000e+00> : vector<16x16xf32>
    %107 = tpu.matmul %106, %95, %cst_52 {dimension_numbers = #tpu.dot_dimension_numbers<[1], [0], [0], [1], [0, 0, 1, 1], [], []>} : vector<16x16xf32>, vector<16x16xf32>, vector<16x16xf32> -> vector<16x16xf32>
    %c0_53 = arith.constant 0 : index
    %c0_54 = arith.constant 0 : index
    %c0_55 = arith.constant 0 : index
    %108 = vector.load %arg9[%c0_53, %c0_54, %c0_55] : memref<4x16x32xf32, #tpu.memory_space<vmem>>, vector<1x16x32xf32>
    %109 = vector.shape_cast %108 : vector<1x16x32xf32> to vector<16x32xf32>
    %cst_56 = arith.constant dense<0.000000e+00> : vector<16x32xf32>
    %110 = tpu.matmul %107, %109, %cst_56 {dimension_numbers = #tpu.dot_dimension_numbers<[1], [0], [0], [1], [0, 0, 1, 1], [], []>} : vector<16x16xf32>, vector<16x32xf32>, vector<16x32xf32> -> vector<16x32xf32>
    %111 = arith.addf %74, %110 : vector<16x32xf32>
    %c1 = arith.constant 1 : index
    %c0_57 = arith.constant 0 : index
    %c0_58 = arith.constant 0 : index
    %112 = vector.load %arg3[%c1, %c0_57, %c0_58] : memref<4x32x16xf32, #tpu.memory_space<vmem>>, vector<1x32x16xf32>
    %113 = vector.shape_cast %112 : vector<1x32x16xf32> to vector<32x16xf32>
    %cst_59 = arith.constant dense<0.000000e+00> : vector<16x16xf32>
    %114 = tpu.matmul %73, %113, %cst_59 {dimension_numbers = #tpu.dot_dimension_numbers<[1], [0], [0], [1], [0, 0, 1, 1], [], []>} : vector<16x32xf32>, vector<32x16xf32>, vector<16x16xf32> -> vector<16x16xf32>
    %c1_60 = arith.constant 1 : index
    %c0_61 = arith.constant 0 : index
    %c0_62 = arith.constant 0 : index
    %115 = vector.load %arg4[%c1_60, %c0_61, %c0_62] : memref<4x1x16xf32, #tpu.memory_space<vmem>>, vector<1x1x16xf32>
    %116 = vector.shape_cast %115 : vector<1x1x16xf32> to vector<1x16xf32>
    %117 = vector.broadcast %116 : vector<1x16xf32> to vector<16x16xf32>
    %118 = arith.addf %114, %117 : vector<16x16xf32>
    %c1_63 = arith.constant 1 : index
    %c0_64 = arith.constant 0 : index
    %c0_65 = arith.constant 0 : index
    %119 = vector.load %arg5[%c1_63, %c0_64, %c0_65] : memref<4x32x16xf32, #tpu.memory_space<vmem>>, vector<1x32x16xf32>
    %120 = vector.shape_cast %119 : vector<1x32x16xf32> to vector<32x16xf32>
    %cst_66 = arith.constant dense<0.000000e+00> : vector<16x16xf32>
    %121 = tpu.matmul %73, %120, %cst_66 {dimension_numbers = #tpu.dot_dimension_numbers<[1], [0], [0], [1], [0, 0, 1, 1], [], []>} : vector<16x32xf32>, vector<32x16xf32>, vector<16x16xf32> -> vector<16x16xf32>
    %c1_67 = arith.constant 1 : index
    %c0_68 = arith.constant 0 : index
    %c0_69 = arith.constant 0 : index
    %122 = vector.load %arg6[%c1_67, %c0_68, %c0_69] : memref<4x1x16xf32, #tpu.memory_space<vmem>>, vector<1x1x16xf32>
    %123 = vector.shape_cast %122 : vector<1x1x16xf32> to vector<1x16xf32>
    %124 = vector.broadcast %123 : vector<1x16xf32> to vector<16x16xf32>
    %125 = arith.addf %121, %124 : vector<16x16xf32>
    %c1_70 = arith.constant 1 : index
    %c0_71 = arith.constant 0 : index
    %c0_72 = arith.constant 0 : index
    %126 = vector.load %arg7[%c1_70, %c0_71, %c0_72] : memref<4x32x16xf32, #tpu.memory_space<vmem>>, vector<1x32x16xf32>
    %127 = vector.shape_cast %126 : vector<1x32x16xf32> to vector<32x16xf32>
    %cst_73 = arith.constant dense<0.000000e+00> : vector<16x16xf32>
    %128 = tpu.matmul %73, %127, %cst_73 {dimension_numbers = #tpu.dot_dimension_numbers<[1], [0], [0], [1], [0, 0, 1, 1], [], []>} : vector<16x32xf32>, vector<32x16xf32>, vector<16x16xf32> -> vector<16x16xf32>
    %c1_74 = arith.constant 1 : index
    %c0_75 = arith.constant 0 : index
    %c0_76 = arith.constant 0 : index
    %129 = vector.load %arg8[%c1_74, %c0_75, %c0_76] : memref<4x1x16xf32, #tpu.memory_space<vmem>>, vector<1x1x16xf32>
    %130 = vector.shape_cast %129 : vector<1x1x16xf32> to vector<1x16xf32>
    %131 = vector.broadcast %130 : vector<1x16xf32> to vector<16x16xf32>
    %132 = arith.addf %128, %131 : vector<16x16xf32>
    %cst_77 = arith.constant dense<0.000000e+00> : vector<16x16xf32>
    %133 = tpu.matmul %118, %125, %cst_77 {dimension_numbers = #tpu.dot_dimension_numbers<[1], [1], [0], [0], [0, 0, 1, 0], [], []>} : vector<16x16xf32>, vector<16x16xf32>, vector<16x16xf32> -> vector<16x16xf32>
    %134 = arith.addf %133, %47 : vector<16x16xf32>
    %cst_78 = arith.constant dense<0xFF800000> : vector<16xf32>
    %135 = vector.multi_reduction <maximumf>, %134, %cst_78 [1] : vector<16x16xf32> to vector<16xf32>
    %136 = vector.shape_cast %135 : vector<16xf32> to vector<16x1xf32>
    %137 = vector.broadcast %136 : vector<16x1xf32> to vector<16x16xf32>
    %138 = arith.subf %134, %137 : vector<16x16xf32>
    %139 = math.exp %138 : vector<16x16xf32>
    %cst_79 = arith.constant dense<0.000000e+00> : vector<16xf32>
    %140 = vector.multi_reduction <add>, %139, %cst_79 [1] : vector<16x16xf32> to vector<16xf32>
    %141 = vector.shape_cast %140 : vector<16xf32> to vector<16x1xf32>
    %142 = vector.broadcast %141 : vector<16x1xf32> to vector<16x16xf32>
    %143 = arith.divf %139, %142 : vector<16x16xf32>
    %cst_80 = arith.constant dense<0.000000e+00> : vector<16x16xf32>
    %144 = tpu.matmul %143, %132, %cst_80 {dimension_numbers = #tpu.dot_dimension_numbers<[1], [0], [0], [1], [0, 0, 1, 1], [], []>} : vector<16x16xf32>, vector<16x16xf32>, vector<16x16xf32> -> vector<16x16xf32>
    %c1_81 = arith.constant 1 : index
    %c0_82 = arith.constant 0 : index
    %c0_83 = arith.constant 0 : index
    %145 = vector.load %arg9[%c1_81, %c0_82, %c0_83] : memref<4x16x32xf32, #tpu.memory_space<vmem>>, vector<1x16x32xf32>
    %146 = vector.shape_cast %145 : vector<1x16x32xf32> to vector<16x32xf32>
    %cst_84 = arith.constant dense<0.000000e+00> : vector<16x32xf32>
    %147 = tpu.matmul %144, %146, %cst_84 {dimension_numbers = #tpu.dot_dimension_numbers<[1], [0], [0], [1], [0, 0, 1, 1], [], []>} : vector<16x16xf32>, vector<16x32xf32>, vector<16x32xf32> -> vector<16x32xf32>
    %148 = arith.addf %111, %147 : vector<16x32xf32>
    %149 = arith.addf %9, %148 : vector<16x32xf32>
    %c0_85 = arith.constant 0 : index
    %c0_86 = arith.constant 0 : index
    %c0_87 = arith.constant 0 : index
    %150 = vector.load %arg10[%c0_85, %c0_86, %c0_87] : memref<2x1x32xf32, #tpu.memory_space<vmem>>, vector<1x1x32xf32>
    %151 = vector.shape_cast %150 : vector<1x1x32xf32> to vector<1x32xf32>
    %152 = vector.broadcast %151 : vector<1x32xf32> to vector<16x32xf32>
    %153 = arith.addf %149, %152 : vector<16x32xf32>
    %c0_88 = arith.constant 0 : index
    %c0_89 = arith.constant 0 : index
    %c0_90 = arith.constant 0 : index
    %154 = vector.load %arg13[%c0_88, %c0_89, %c0_90] : memref<2x1x32xf32, #tpu.memory_space<vmem>>, vector<1x1x32xf32>
    %155 = vector.shape_cast %154 : vector<1x1x32xf32> to vector<1x32xf32>
    %c0_91 = arith.constant 0 : index
    %c0_92 = arith.constant 0 : index
    %c0_93 = arith.constant 0 : index
    %156 = vector.load %arg14[%c0_91, %c0_92, %c0_93] : memref<2x1x32xf32, #tpu.memory_space<vmem>>, vector<1x1x32xf32>
    %157 = vector.shape_cast %156 : vector<1x1x32xf32> to vector<1x32xf32>
    %cst_94 = arith.constant dense<0.000000e+00> : vector<16xf32>
    %158 = vector.multi_reduction <add>, %153, %cst_94 [1] : vector<16x32xf32> to vector<16xf32>
    %159 = vector.shape_cast %158 : vector<16xf32> to vector<16x1xf32>
    %cst_95 = arith.constant 3.200000e+01 : f32
    %160 = vector.broadcast %cst_95 : f32 to vector<16x1xf32>
    %161 = arith.divf %159, %160 : vector<16x1xf32>
    %162 = vector.broadcast %161 : vector<16x1xf32> to vector<16x32xf32>
    %163 = arith.subf %153, %162 : vector<16x32xf32>
    %164 = arith.mulf %163, %163 : vector<16x32xf32>
    %cst_96 = arith.constant dense<0.000000e+00> : vector<16xf32>
    %165 = vector.multi_reduction <add>, %164, %cst_96 [1] : vector<16x32xf32> to vector<16xf32>
    %166 = vector.shape_cast %165 : vector<16xf32> to vector<16x1xf32>
    %cst_97 = arith.constant 3.200000e+01 : f32
    %167 = vector.broadcast %cst_97 : f32 to vector<16x1xf32>
    %168 = arith.divf %166, %167 : vector<16x1xf32>
    %169 = vector.broadcast %161 : vector<16x1xf32> to vector<16x32xf32>
    %170 = arith.subf %153, %169 : vector<16x32xf32>
    %cst_98 = arith.constant 9.99999974E-6 : f32
    %171 = vector.broadcast %cst_98 : f32 to vector<16x1xf32>
    %172 = arith.addf %168, %171 : vector<16x1xf32>
    %173 = math.rsqrt %172 : vector<16x1xf32>
    %174 = vector.broadcast %173 : vector<16x1xf32> to vector<16x32xf32>
    %175 = arith.mulf %170, %174 : vector<16x32xf32>
    %176 = vector.broadcast %155 : vector<1x32xf32> to vector<16x32xf32>
    %177 = arith.mulf %175, %176 : vector<16x32xf32>
    %178 = vector.broadcast %157 : vector<1x32xf32> to vector<16x32xf32>
    %179 = arith.addf %177, %178 : vector<16x32xf32>
    %c0_99 = arith.constant 0 : index
    %c0_100 = arith.constant 0 : index
    %c0_101 = arith.constant 0 : index
    %180 = vector.load %arg15[%c0_99, %c0_100, %c0_101] : memref<2x32x64xf32, #tpu.memory_space<vmem>>, vector<1x32x64xf32>
    %181 = vector.shape_cast %180 : vector<1x32x64xf32> to vector<32x64xf32>
    %cst_102 = arith.constant dense<0.000000e+00> : vector<16x64xf32>
    %182 = tpu.matmul %179, %181, %cst_102 {dimension_numbers = #tpu.dot_dimension_numbers<[1], [0], [0], [1], [0, 0, 1, 1], [], []>} : vector<16x32xf32>, vector<32x64xf32>, vector<16x64xf32> -> vector<16x64xf32>
    %c0_103 = arith.constant 0 : index
    %c0_104 = arith.constant 0 : index
    %c0_105 = arith.constant 0 : index
    %183 = vector.load %arg16[%c0_103, %c0_104, %c0_105] : memref<2x1x64xf32, #tpu.memory_space<vmem>>, vector<1x1x64xf32>
    %184 = vector.shape_cast %183 : vector<1x1x64xf32> to vector<1x64xf32>
    %185 = vector.broadcast %184 : vector<1x64xf32> to vector<16x64xf32>
    %186 = arith.addf %182, %185 : vector<16x64xf32>
    %cst_106 = arith.constant 5.000000e-01 : f32
    %187 = vector.broadcast %cst_106 : f32 to vector<16x64xf32>
    %188 = arith.mulf %187, %186 : vector<16x64xf32>
    %cst_107 = arith.constant 0.707106769 : f32
    %189 = vector.broadcast %cst_107 : f32 to vector<16x64xf32>
    %190 = arith.mulf %186, %189 : vector<16x64xf32>
    %cst_108 = arith.constant 0.000000e+00 : f32
    %191 = vector.broadcast %cst_108 : f32 to vector<16x64xf32>
    %192 = arith.cmpf oge, %190, %191 : vector<16x64xf32>
    %cst_109 = arith.constant 1.000000e+00 : f32
    %cst_110 = arith.constant -1.000000e+00 : f32
    %193 = vector.broadcast %cst_109 : f32 to vector<16x64xf32>
    %194 = vector.broadcast %cst_110 : f32 to vector<16x64xf32>
    %195 = arith.select %192, %193, %194 : vector<16x64xi1>, vector<16x64xf32>
    %196 = math.absf %190 : vector<16x64xf32>
    %cst_111 = arith.constant 0.327591091 : f32
    %197 = vector.broadcast %cst_111 : f32 to vector<16x64xf32>
    %198 = arith.mulf %197, %196 : vector<16x64xf32>
    %cst_112 = arith.constant 1.000000e+00 : f32
    %199 = vector.broadcast %cst_112 : f32 to vector<16x64xf32>
    %200 = arith.addf %199, %198 : vector<16x64xf32>
    %cst_113 = arith.constant 1.000000e+00 : f32
    %201 = vector.broadcast %cst_113 : f32 to vector<16x64xf32>
    %202 = arith.divf %201, %200 : vector<16x64xf32>
    %cst_114 = arith.constant 1.06140542 : f32
    %203 = vector.broadcast %cst_114 : f32 to vector<16x64xf32>
    %204 = arith.mulf %203, %202 : vector<16x64xf32>
    %cst_115 = arith.constant -1.45315206 : f32
    %205 = vector.broadcast %cst_115 : f32 to vector<16x64xf32>
    %206 = arith.addf %204, %205 : vector<16x64xf32>
    %207 = arith.mulf %206, %202 : vector<16x64xf32>
    %cst_116 = arith.constant 1.42141378 : f32
    %208 = vector.broadcast %cst_116 : f32 to vector<16x64xf32>
    %209 = arith.addf %207, %208 : vector<16x64xf32>
    %210 = arith.mulf %209, %202 : vector<16x64xf32>
    %cst_117 = arith.constant -0.284496725 : f32
    %211 = vector.broadcast %cst_117 : f32 to vector<16x64xf32>
    %212 = arith.addf %210, %211 : vector<16x64xf32>
    %213 = arith.mulf %212, %202 : vector<16x64xf32>
    %cst_118 = arith.constant 0.254829586 : f32
    %214 = vector.broadcast %cst_118 : f32 to vector<16x64xf32>
    %215 = arith.addf %213, %214 : vector<16x64xf32>
    %216 = arith.mulf %215, %202 : vector<16x64xf32>
    %cst_119 = arith.constant 0.000000e+00 : f32
    %217 = vector.broadcast %cst_119 : f32 to vector<16x64xf32>
    %218 = arith.subf %217, %196 : vector<16x64xf32>
    %219 = arith.mulf %218, %196 : vector<16x64xf32>
    %220 = math.exp %219 : vector<16x64xf32>
    %221 = arith.mulf %216, %220 : vector<16x64xf32>
    %cst_120 = arith.constant 1.000000e+00 : f32
    %222 = vector.broadcast %cst_120 : f32 to vector<16x64xf32>
    %223 = arith.subf %222, %221 : vector<16x64xf32>
    %224 = arith.mulf %195, %223 : vector<16x64xf32>
    %cst_121 = arith.constant 1.000000e+00 : f32
    %225 = vector.broadcast %cst_121 : f32 to vector<16x64xf32>
    %226 = arith.addf %225, %224 : vector<16x64xf32>
    %227 = arith.mulf %188, %226 : vector<16x64xf32>
    %c0_122 = arith.constant 0 : index
    %c0_123 = arith.constant 0 : index
    %c0_124 = arith.constant 0 : index
    %228 = vector.load %arg17[%c0_122, %c0_123, %c0_124] : memref<2x64x32xf32, #tpu.memory_space<vmem>>, vector<1x64x32xf32>
    %229 = vector.shape_cast %228 : vector<1x64x32xf32> to vector<64x32xf32>
    %cst_125 = arith.constant dense<0.000000e+00> : vector<16x32xf32>
    %230 = tpu.matmul %227, %229, %cst_125 {dimension_numbers = #tpu.dot_dimension_numbers<[1], [0], [0], [1], [0, 0, 1, 1], [], []>} : vector<16x64xf32>, vector<64x32xf32>, vector<16x32xf32> -> vector<16x32xf32>
    %c0_126 = arith.constant 0 : index
    %c0_127 = arith.constant 0 : index
    %c0_128 = arith.constant 0 : index
    %231 = vector.load %arg18[%c0_126, %c0_127, %c0_128] : memref<2x1x32xf32, #tpu.memory_space<vmem>>, vector<1x1x32xf32>
    %232 = vector.shape_cast %231 : vector<1x1x32xf32> to vector<1x32xf32>
    %233 = vector.broadcast %232 : vector<1x32xf32> to vector<16x32xf32>
    %234 = arith.addf %230, %233 : vector<16x32xf32>
    %235 = arith.addf %153, %234 : vector<16x32xf32>
    %c1_129 = arith.constant 1 : index
    %c0_130 = arith.constant 0 : index
    %c0_131 = arith.constant 0 : index
    %236 = vector.load %arg11[%c1_129, %c0_130, %c0_131] : memref<2x1x32xf32, #tpu.memory_space<vmem>>, vector<1x1x32xf32>
    %237 = vector.shape_cast %236 : vector<1x1x32xf32> to vector<1x32xf32>
    %c1_132 = arith.constant 1 : index
    %c0_133 = arith.constant 0 : index
    %c0_134 = arith.constant 0 : index
    %238 = vector.load %arg12[%c1_132, %c0_133, %c0_134] : memref<2x1x32xf32, #tpu.memory_space<vmem>>, vector<1x1x32xf32>
    %239 = vector.shape_cast %238 : vector<1x1x32xf32> to vector<1x32xf32>
    %cst_135 = arith.constant dense<0.000000e+00> : vector<16xf32>
    %240 = vector.multi_reduction <add>, %235, %cst_135 [1] : vector<16x32xf32> to vector<16xf32>
    %241 = vector.shape_cast %240 : vector<16xf32> to vector<16x1xf32>
    %cst_136 = arith.constant 3.200000e+01 : f32
    %242 = vector.broadcast %cst_136 : f32 to vector<16x1xf32>
    %243 = arith.divf %241, %242 : vector<16x1xf32>
    %244 = vector.broadcast %243 : vector<16x1xf32> to vector<16x32xf32>
    %245 = arith.subf %235, %244 : vector<16x32xf32>
    %246 = arith.mulf %245, %245 : vector<16x32xf32>
    %cst_137 = arith.constant dense<0.000000e+00> : vector<16xf32>
    %247 = vector.multi_reduction <add>, %246, %cst_137 [1] : vector<16x32xf32> to vector<16xf32>
    %248 = vector.shape_cast %247 : vector<16xf32> to vector<16x1xf32>
    %cst_138 = arith.constant 3.200000e+01 : f32
    %249 = vector.broadcast %cst_138 : f32 to vector<16x1xf32>
    %250 = arith.divf %248, %249 : vector<16x1xf32>
    %251 = vector.broadcast %243 : vector<16x1xf32> to vector<16x32xf32>
    %252 = arith.subf %235, %251 : vector<16x32xf32>
    %cst_139 = arith.constant 9.99999974E-6 : f32
    %253 = vector.broadcast %cst_139 : f32 to vector<16x1xf32>
    %254 = arith.addf %250, %253 : vector<16x1xf32>
    %255 = math.rsqrt %254 : vector<16x1xf32>
    %256 = vector.broadcast %255 : vector<16x1xf32> to vector<16x32xf32>
    %257 = arith.mulf %252, %256 : vector<16x32xf32>
    %258 = vector.broadcast %237 : vector<1x32xf32> to vector<16x32xf32>
    %259 = arith.mulf %257, %258 : vector<16x32xf32>
    %260 = vector.broadcast %239 : vector<1x32xf32> to vector<16x32xf32>
    %261 = arith.addf %259, %260 : vector<16x32xf32>
    %cst_140 = arith.constant 0.000000e+00 : f32
    %262 = vector.broadcast %cst_140 : f32 to vector<16x32xf32>
    %c2 = arith.constant 2 : index
    %c0_141 = arith.constant 0 : index
    %c0_142 = arith.constant 0 : index
    %263 = vector.load %arg3[%c2, %c0_141, %c0_142] : memref<4x32x16xf32, #tpu.memory_space<vmem>>, vector<1x32x16xf32>
    %264 = vector.shape_cast %263 : vector<1x32x16xf32> to vector<32x16xf32>
    %cst_143 = arith.constant dense<0.000000e+00> : vector<16x16xf32>
    %265 = tpu.matmul %261, %264, %cst_143 {dimension_numbers = #tpu.dot_dimension_numbers<[1], [0], [0], [1], [0, 0, 1, 1], [], []>} : vector<16x32xf32>, vector<32x16xf32>, vector<16x16xf32> -> vector<16x16xf32>
    %c2_144 = arith.constant 2 : index
    %c0_145 = arith.constant 0 : index
    %c0_146 = arith.constant 0 : index
    %266 = vector.load %arg4[%c2_144, %c0_145, %c0_146] : memref<4x1x16xf32, #tpu.memory_space<vmem>>, vector<1x1x16xf32>
    %267 = vector.shape_cast %266 : vector<1x1x16xf32> to vector<1x16xf32>
    %268 = vector.broadcast %267 : vector<1x16xf32> to vector<16x16xf32>
    %269 = arith.addf %265, %268 : vector<16x16xf32>
    %c2_147 = arith.constant 2 : index
    %c0_148 = arith.constant 0 : index
    %c0_149 = arith.constant 0 : index
    %270 = vector.load %arg5[%c2_147, %c0_148, %c0_149] : memref<4x32x16xf32, #tpu.memory_space<vmem>>, vector<1x32x16xf32>
    %271 = vector.shape_cast %270 : vector<1x32x16xf32> to vector<32x16xf32>
    %cst_150 = arith.constant dense<0.000000e+00> : vector<16x16xf32>
    %272 = tpu.matmul %261, %271, %cst_150 {dimension_numbers = #tpu.dot_dimension_numbers<[1], [0], [0], [1], [0, 0, 1, 1], [], []>} : vector<16x32xf32>, vector<32x16xf32>, vector<16x16xf32> -> vector<16x16xf32>
    %c2_151 = arith.constant 2 : index
    %c0_152 = arith.constant 0 : index
    %c0_153 = arith.constant 0 : index
    %273 = vector.load %arg6[%c2_151, %c0_152, %c0_153] : memref<4x1x16xf32, #tpu.memory_space<vmem>>, vector<1x1x16xf32>
    %274 = vector.shape_cast %273 : vector<1x1x16xf32> to vector<1x16xf32>
    %275 = vector.broadcast %274 : vector<1x16xf32> to vector<16x16xf32>
    %276 = arith.addf %272, %275 : vector<16x16xf32>
    %c2_154 = arith.constant 2 : index
    %c0_155 = arith.constant 0 : index
    %c0_156 = arith.constant 0 : index
    %277 = vector.load %arg7[%c2_154, %c0_155, %c0_156] : memref<4x32x16xf32, #tpu.memory_space<vmem>>, vector<1x32x16xf32>
    %278 = vector.shape_cast %277 : vector<1x32x16xf32> to vector<32x16xf32>
    %cst_157 = arith.constant dense<0.000000e+00> : vector<16x16xf32>
    %279 = tpu.matmul %261, %278, %cst_157 {dimension_numbers = #tpu.dot_dimension_numbers<[1], [0], [0], [1], [0, 0, 1, 1], [], []>} : vector<16x32xf32>, vector<32x16xf32>, vector<16x16xf32> -> vector<16x16xf32>
    %c2_158 = arith.constant 2 : index
    %c0_159 = arith.constant 0 : index
    %c0_160 = arith.constant 0 : index
    %280 = vector.load %arg8[%c2_158, %c0_159, %c0_160] : memref<4x1x16xf32, #tpu.memory_space<vmem>>, vector<1x1x16xf32>
    %281 = vector.shape_cast %280 : vector<1x1x16xf32> to vector<1x16xf32>
    %282 = vector.broadcast %281 : vector<1x16xf32> to vector<16x16xf32>
    %283 = arith.addf %279, %282 : vector<16x16xf32>
    %cst_161 = arith.constant dense<0.000000e+00> : vector<16x16xf32>
    %284 = tpu.matmul %269, %276, %cst_161 {dimension_numbers = #tpu.dot_dimension_numbers<[1], [1], [0], [0], [0, 0, 1, 0], [], []>} : vector<16x16xf32>, vector<16x16xf32>, vector<16x16xf32> -> vector<16x16xf32>
    %285 = arith.addf %284, %47 : vector<16x16xf32>
    %cst_162 = arith.constant dense<0xFF800000> : vector<16xf32>
    %286 = vector.multi_reduction <maximumf>, %285, %cst_162 [1] : vector<16x16xf32> to vector<16xf32>
    %287 = vector.shape_cast %286 : vector<16xf32> to vector<16x1xf32>
    %288 = vector.broadcast %287 : vector<16x1xf32> to vector<16x16xf32>
    %289 = arith.subf %285, %288 : vector<16x16xf32>
    %290 = math.exp %289 : vector<16x16xf32>
    %cst_163 = arith.constant dense<0.000000e+00> : vector<16xf32>
    %291 = vector.multi_reduction <add>, %290, %cst_163 [1] : vector<16x16xf32> to vector<16xf32>
    %292 = vector.shape_cast %291 : vector<16xf32> to vector<16x1xf32>
    %293 = vector.broadcast %292 : vector<16x1xf32> to vector<16x16xf32>
    %294 = arith.divf %290, %293 : vector<16x16xf32>
    %cst_164 = arith.constant dense<0.000000e+00> : vector<16x16xf32>
    %295 = tpu.matmul %294, %283, %cst_164 {dimension_numbers = #tpu.dot_dimension_numbers<[1], [0], [0], [1], [0, 0, 1, 1], [], []>} : vector<16x16xf32>, vector<16x16xf32>, vector<16x16xf32> -> vector<16x16xf32>
    %c2_165 = arith.constant 2 : index
    %c0_166 = arith.constant 0 : index
    %c0_167 = arith.constant 0 : index
    %296 = vector.load %arg9[%c2_165, %c0_166, %c0_167] : memref<4x16x32xf32, #tpu.memory_space<vmem>>, vector<1x16x32xf32>
    %297 = vector.shape_cast %296 : vector<1x16x32xf32> to vector<16x32xf32>
    %cst_168 = arith.constant dense<0.000000e+00> : vector<16x32xf32>
    %298 = tpu.matmul %295, %297, %cst_168 {dimension_numbers = #tpu.dot_dimension_numbers<[1], [0], [0], [1], [0, 0, 1, 1], [], []>} : vector<16x16xf32>, vector<16x32xf32>, vector<16x32xf32> -> vector<16x32xf32>
    %299 = arith.addf %262, %298 : vector<16x32xf32>
    %c3 = arith.constant 3 : index
    %c0_169 = arith.constant 0 : index
    %c0_170 = arith.constant 0 : index
    %300 = vector.load %arg3[%c3, %c0_169, %c0_170] : memref<4x32x16xf32, #tpu.memory_space<vmem>>, vector<1x32x16xf32>
    %301 = vector.shape_cast %300 : vector<1x32x16xf32> to vector<32x16xf32>
    %cst_171 = arith.constant dense<0.000000e+00> : vector<16x16xf32>
    %302 = tpu.matmul %261, %301, %cst_171 {dimension_numbers = #tpu.dot_dimension_numbers<[1], [0], [0], [1], [0, 0, 1, 1], [], []>} : vector<16x32xf32>, vector<32x16xf32>, vector<16x16xf32> -> vector<16x16xf32>
    %c3_172 = arith.constant 3 : index
    %c0_173 = arith.constant 0 : index
    %c0_174 = arith.constant 0 : index
    %303 = vector.load %arg4[%c3_172, %c0_173, %c0_174] : memref<4x1x16xf32, #tpu.memory_space<vmem>>, vector<1x1x16xf32>
    %304 = vector.shape_cast %303 : vector<1x1x16xf32> to vector<1x16xf32>
    %305 = vector.broadcast %304 : vector<1x16xf32> to vector<16x16xf32>
    %306 = arith.addf %302, %305 : vector<16x16xf32>
    %c3_175 = arith.constant 3 : index
    %c0_176 = arith.constant 0 : index
    %c0_177 = arith.constant 0 : index
    %307 = vector.load %arg5[%c3_175, %c0_176, %c0_177] : memref<4x32x16xf32, #tpu.memory_space<vmem>>, vector<1x32x16xf32>
    %308 = vector.shape_cast %307 : vector<1x32x16xf32> to vector<32x16xf32>
    %cst_178 = arith.constant dense<0.000000e+00> : vector<16x16xf32>
    %309 = tpu.matmul %261, %308, %cst_178 {dimension_numbers = #tpu.dot_dimension_numbers<[1], [0], [0], [1], [0, 0, 1, 1], [], []>} : vector<16x32xf32>, vector<32x16xf32>, vector<16x16xf32> -> vector<16x16xf32>
    %c3_179 = arith.constant 3 : index
    %c0_180 = arith.constant 0 : index
    %c0_181 = arith.constant 0 : index
    %310 = vector.load %arg6[%c3_179, %c0_180, %c0_181] : memref<4x1x16xf32, #tpu.memory_space<vmem>>, vector<1x1x16xf32>
    %311 = vector.shape_cast %310 : vector<1x1x16xf32> to vector<1x16xf32>
    %312 = vector.broadcast %311 : vector<1x16xf32> to vector<16x16xf32>
    %313 = arith.addf %309, %312 : vector<16x16xf32>
    %c3_182 = arith.constant 3 : index
    %c0_183 = arith.constant 0 : index
    %c0_184 = arith.constant 0 : index
    %314 = vector.load %arg7[%c3_182, %c0_183, %c0_184] : memref<4x32x16xf32, #tpu.memory_space<vmem>>, vector<1x32x16xf32>
    %315 = vector.shape_cast %314 : vector<1x32x16xf32> to vector<32x16xf32>
    %cst_185 = arith.constant dense<0.000000e+00> : vector<16x16xf32>
    %316 = tpu.matmul %261, %315, %cst_185 {dimension_numbers = #tpu.dot_dimension_numbers<[1], [0], [0], [1], [0, 0, 1, 1], [], []>} : vector<16x32xf32>, vector<32x16xf32>, vector<16x16xf32> -> vector<16x16xf32>
    %c3_186 = arith.constant 3 : index
    %c0_187 = arith.constant 0 : index
    %c0_188 = arith.constant 0 : index
    %317 = vector.load %arg8[%c3_186, %c0_187, %c0_188] : memref<4x1x16xf32, #tpu.memory_space<vmem>>, vector<1x1x16xf32>
    %318 = vector.shape_cast %317 : vector<1x1x16xf32> to vector<1x16xf32>
    %319 = vector.broadcast %318 : vector<1x16xf32> to vector<16x16xf32>
    %320 = arith.addf %316, %319 : vector<16x16xf32>
    %cst_189 = arith.constant dense<0.000000e+00> : vector<16x16xf32>
    %321 = tpu.matmul %306, %313, %cst_189 {dimension_numbers = #tpu.dot_dimension_numbers<[1], [1], [0], [0], [0, 0, 1, 0], [], []>} : vector<16x16xf32>, vector<16x16xf32>, vector<16x16xf32> -> vector<16x16xf32>
    %322 = arith.addf %321, %47 : vector<16x16xf32>
    %cst_190 = arith.constant dense<0xFF800000> : vector<16xf32>
    %323 = vector.multi_reduction <maximumf>, %322, %cst_190 [1] : vector<16x16xf32> to vector<16xf32>
    %324 = vector.shape_cast %323 : vector<16xf32> to vector<16x1xf32>
    %325 = vector.broadcast %324 : vector<16x1xf32> to vector<16x16xf32>
    %326 = arith.subf %322, %325 : vector<16x16xf32>
    %327 = math.exp %326 : vector<16x16xf32>
    %cst_191 = arith.constant dense<0.000000e+00> : vector<16xf32>
    %328 = vector.multi_reduction <add>, %327, %cst_191 [1] : vector<16x16xf32> to vector<16xf32>
    %329 = vector.shape_cast %328 : vector<16xf32> to vector<16x1xf32>
    %330 = vector.broadcast %329 : vector<16x1xf32> to vector<16x16xf32>
    %331 = arith.divf %327, %330 : vector<16x16xf32>
    %cst_192 = arith.constant dense<0.000000e+00> : vector<16x16xf32>
    %332 = tpu.matmul %331, %320, %cst_192 {dimension_numbers = #tpu.dot_dimension_numbers<[1], [0], [0], [1], [0, 0, 1, 1], [], []>} : vector<16x16xf32>, vector<16x16xf32>, vector<16x16xf32> -> vector<16x16xf32>
    %c3_193 = arith.constant 3 : index
    %c0_194 = arith.constant 0 : index
    %c0_195 = arith.constant 0 : index
    %333 = vector.load %arg9[%c3_193, %c0_194, %c0_195] : memref<4x16x32xf32, #tpu.memory_space<vmem>>, vector<1x16x32xf32>
    %334 = vector.shape_cast %333 : vector<1x16x32xf32> to vector<16x32xf32>
    %cst_196 = arith.constant dense<0.000000e+00> : vector<16x32xf32>
    %335 = tpu.matmul %332, %334, %cst_196 {dimension_numbers = #tpu.dot_dimension_numbers<[1], [0], [0], [1], [0, 0, 1, 1], [], []>} : vector<16x16xf32>, vector<16x32xf32>, vector<16x32xf32> -> vector<16x32xf32>
    %336 = arith.addf %299, %335 : vector<16x32xf32>
    %337 = arith.addf %235, %336 : vector<16x32xf32>
    %c1_197 = arith.constant 1 : index
    %c0_198 = arith.constant 0 : index
    %c0_199 = arith.constant 0 : index
    %338 = vector.load %arg10[%c1_197, %c0_198, %c0_199] : memref<2x1x32xf32, #tpu.memory_space<vmem>>, vector<1x1x32xf32>
    %339 = vector.shape_cast %338 : vector<1x1x32xf32> to vector<1x32xf32>
    %340 = vector.broadcast %339 : vector<1x32xf32> to vector<16x32xf32>
    %341 = arith.addf %337, %340 : vector<16x32xf32>
    %c1_200 = arith.constant 1 : index
    %c0_201 = arith.constant 0 : index
    %c0_202 = arith.constant 0 : index
    %342 = vector.load %arg13[%c1_200, %c0_201, %c0_202] : memref<2x1x32xf32, #tpu.memory_space<vmem>>, vector<1x1x32xf32>
    %343 = vector.shape_cast %342 : vector<1x1x32xf32> to vector<1x32xf32>
    %c1_203 = arith.constant 1 : index
    %c0_204 = arith.constant 0 : index
    %c0_205 = arith.constant 0 : index
    %344 = vector.load %arg14[%c1_203, %c0_204, %c0_205] : memref<2x1x32xf32, #tpu.memory_space<vmem>>, vector<1x1x32xf32>
    %345 = vector.shape_cast %344 : vector<1x1x32xf32> to vector<1x32xf32>
    %cst_206 = arith.constant dense<0.000000e+00> : vector<16xf32>
    %346 = vector.multi_reduction <add>, %341, %cst_206 [1] : vector<16x32xf32> to vector<16xf32>
    %347 = vector.shape_cast %346 : vector<16xf32> to vector<16x1xf32>
    %cst_207 = arith.constant 3.200000e+01 : f32
    %348 = vector.broadcast %cst_207 : f32 to vector<16x1xf32>
    %349 = arith.divf %347, %348 : vector<16x1xf32>
    %350 = vector.broadcast %349 : vector<16x1xf32> to vector<16x32xf32>
    %351 = arith.subf %341, %350 : vector<16x32xf32>
    %352 = arith.mulf %351, %351 : vector<16x32xf32>
    %cst_208 = arith.constant dense<0.000000e+00> : vector<16xf32>
    %353 = vector.multi_reduction <add>, %352, %cst_208 [1] : vector<16x32xf32> to vector<16xf32>
    %354 = vector.shape_cast %353 : vector<16xf32> to vector<16x1xf32>
    %cst_209 = arith.constant 3.200000e+01 : f32
    %355 = vector.broadcast %cst_209 : f32 to vector<16x1xf32>
    %356 = arith.divf %354, %355 : vector<16x1xf32>
    %357 = vector.broadcast %349 : vector<16x1xf32> to vector<16x32xf32>
    %358 = arith.subf %341, %357 : vector<16x32xf32>
    %cst_210 = arith.constant 9.99999974E-6 : f32
    %359 = vector.broadcast %cst_210 : f32 to vector<16x1xf32>
    %360 = arith.addf %356, %359 : vector<16x1xf32>
    %361 = math.rsqrt %360 : vector<16x1xf32>
    %362 = vector.broadcast %361 : vector<16x1xf32> to vector<16x32xf32>
    %363 = arith.mulf %358, %362 : vector<16x32xf32>
    %364 = vector.broadcast %343 : vector<1x32xf32> to vector<16x32xf32>
    %365 = arith.mulf %363, %364 : vector<16x32xf32>
    %366 = vector.broadcast %345 : vector<1x32xf32> to vector<16x32xf32>
    %367 = arith.addf %365, %366 : vector<16x32xf32>
    %c1_211 = arith.constant 1 : index
    %c0_212 = arith.constant 0 : index
    %c0_213 = arith.constant 0 : index
    %368 = vector.load %arg15[%c1_211, %c0_212, %c0_213] : memref<2x32x64xf32, #tpu.memory_space<vmem>>, vector<1x32x64xf32>
    %369 = vector.shape_cast %368 : vector<1x32x64xf32> to vector<32x64xf32>
    %cst_214 = arith.constant dense<0.000000e+00> : vector<16x64xf32>
    %370 = tpu.matmul %367, %369, %cst_214 {dimension_numbers = #tpu.dot_dimension_numbers<[1], [0], [0], [1], [0, 0, 1, 1], [], []>} : vector<16x32xf32>, vector<32x64xf32>, vector<16x64xf32> -> vector<16x64xf32>
    %c1_215 = arith.constant 1 : index
    %c0_216 = arith.constant 0 : index
    %c0_217 = arith.constant 0 : index
    %371 = vector.load %arg16[%c1_215, %c0_216, %c0_217] : memref<2x1x64xf32, #tpu.memory_space<vmem>>, vector<1x1x64xf32>
    %372 = vector.shape_cast %371 : vector<1x1x64xf32> to vector<1x64xf32>
    %373 = vector.broadcast %372 : vector<1x64xf32> to vector<16x64xf32>
    %374 = arith.addf %370, %373 : vector<16x64xf32>
    %cst_218 = arith.constant 5.000000e-01 : f32
    %375 = vector.broadcast %cst_218 : f32 to vector<16x64xf32>
    %376 = arith.mulf %375, %374 : vector<16x64xf32>
    %cst_219 = arith.constant 0.707106769 : f32
    %377 = vector.broadcast %cst_219 : f32 to vector<16x64xf32>
    %378 = arith.mulf %374, %377 : vector<16x64xf32>
    %cst_220 = arith.constant 0.000000e+00 : f32
    %379 = vector.broadcast %cst_220 : f32 to vector<16x64xf32>
    %380 = arith.cmpf oge, %378, %379 : vector<16x64xf32>
    %cst_221 = arith.constant 1.000000e+00 : f32
    %cst_222 = arith.constant -1.000000e+00 : f32
    %381 = vector.broadcast %cst_221 : f32 to vector<16x64xf32>
    %382 = vector.broadcast %cst_222 : f32 to vector<16x64xf32>
    %383 = arith.select %380, %381, %382 : vector<16x64xi1>, vector<16x64xf32>
    %384 = math.absf %378 : vector<16x64xf32>
    %cst_223 = arith.constant 0.327591091 : f32
    %385 = vector.broadcast %cst_223 : f32 to vector<16x64xf32>
    %386 = arith.mulf %385, %384 : vector<16x64xf32>
    %cst_224 = arith.constant 1.000000e+00 : f32
    %387 = vector.broadcast %cst_224 : f32 to vector<16x64xf32>
    %388 = arith.addf %387, %386 : vector<16x64xf32>
    %cst_225 = arith.constant 1.000000e+00 : f32
    %389 = vector.broadcast %cst_225 : f32 to vector<16x64xf32>
    %390 = arith.divf %389, %388 : vector<16x64xf32>
    %cst_226 = arith.constant 1.06140542 : f32
    %391 = vector.broadcast %cst_226 : f32 to vector<16x64xf32>
    %392 = arith.mulf %391, %390 : vector<16x64xf32>
    %cst_227 = arith.constant -1.45315206 : f32
    %393 = vector.broadcast %cst_227 : f32 to vector<16x64xf32>
    %394 = arith.addf %392, %393 : vector<16x64xf32>
    %395 = arith.mulf %394, %390 : vector<16x64xf32>
    %cst_228 = arith.constant 1.42141378 : f32
    %396 = vector.broadcast %cst_228 : f32 to vector<16x64xf32>
    %397 = arith.addf %395, %396 : vector<16x64xf32>
    %398 = arith.mulf %397, %390 : vector<16x64xf32>
    %cst_229 = arith.constant -0.284496725 : f32
    %399 = vector.broadcast %cst_229 : f32 to vector<16x64xf32>
    %400 = arith.addf %398, %399 : vector<16x64xf32>
    %401 = arith.mulf %400, %390 : vector<16x64xf32>
    %cst_230 = arith.constant 0.254829586 : f32
    %402 = vector.broadcast %cst_230 : f32 to vector<16x64xf32>
    %403 = arith.addf %401, %402 : vector<16x64xf32>
    %404 = arith.mulf %403, %390 : vector<16x64xf32>
    %cst_231 = arith.constant 0.000000e+00 : f32
    %405 = vector.broadcast %cst_231 : f32 to vector<16x64xf32>
    %406 = arith.subf %405, %384 : vector<16x64xf32>
    %407 = arith.mulf %406, %384 : vector<16x64xf32>
    %408 = math.exp %407 : vector<16x64xf32>
    %409 = arith.mulf %404, %408 : vector<16x64xf32>
    %cst_232 = arith.constant 1.000000e+00 : f32
    %410 = vector.broadcast %cst_232 : f32 to vector<16x64xf32>
    %411 = arith.subf %410, %409 : vector<16x64xf32>
    %412 = arith.mulf %383, %411 : vector<16x64xf32>
    %cst_233 = arith.constant 1.000000e+00 : f32
    %413 = vector.broadcast %cst_233 : f32 to vector<16x64xf32>
    %414 = arith.addf %413, %412 : vector<16x64xf32>
    %415 = arith.mulf %376, %414 : vector<16x64xf32>
    %c1_234 = arith.constant 1 : index
    %c0_235 = arith.constant 0 : index
    %c0_236 = arith.constant 0 : index
    %416 = vector.load %arg17[%c1_234, %c0_235, %c0_236] : memref<2x64x32xf32, #tpu.memory_space<vmem>>, vector<1x64x32xf32>
    %417 = vector.shape_cast %416 : vector<1x64x32xf32> to vector<64x32xf32>
    %cst_237 = arith.constant dense<0.000000e+00> : vector<16x32xf32>
    %418 = tpu.matmul %415, %417, %cst_237 {dimension_numbers = #tpu.dot_dimension_numbers<[1], [0], [0], [1], [0, 0, 1, 1], [], []>} : vector<16x64xf32>, vector<64x32xf32>, vector<16x32xf32> -> vector<16x32xf32>
    %c1_238 = arith.constant 1 : index
    %c0_239 = arith.constant 0 : index
    %c0_240 = arith.constant 0 : index
    %419 = vector.load %arg18[%c1_238, %c0_239, %c0_240] : memref<2x1x32xf32, #tpu.memory_space<vmem>>, vector<1x1x32xf32>
    %420 = vector.shape_cast %419 : vector<1x1x32xf32> to vector<1x32xf32>
    %421 = vector.broadcast %420 : vector<1x32xf32> to vector<16x32xf32>
    %422 = arith.addf %418, %421 : vector<16x32xf32>
    %423 = arith.addf %341, %422 : vector<16x32xf32>
    %c0_241 = arith.constant 0 : index
    %c0_242 = arith.constant 0 : index
    %424 = vector.load %arg19[%c0_241, %c0_242] : memref<1x32xf32, #tpu.memory_space<vmem>>, vector<1x32xf32>
    %c0_243 = arith.constant 0 : index
    %c0_244 = arith.constant 0 : index
    %425 = vector.load %arg20[%c0_243, %c0_244] : memref<1x32xf32, #tpu.memory_space<vmem>>, vector<1x32xf32>
    %cst_245 = arith.constant dense<0.000000e+00> : vector<16xf32>
    %426 = vector.multi_reduction <add>, %423, %cst_245 [1] : vector<16x32xf32> to vector<16xf32>
    %427 = vector.shape_cast %426 : vector<16xf32> to vector<16x1xf32>
    %cst_246 = arith.constant 3.200000e+01 : f32
    %428 = vector.broadcast %cst_246 : f32 to vector<16x1xf32>
    %429 = arith.divf %427, %428 : vector<16x1xf32>
    %430 = vector.broadcast %429 : vector<16x1xf32> to vector<16x32xf32>
    %431 = arith.subf %423, %430 : vector<16x32xf32>
    %432 = arith.mulf %431, %431 : vector<16x32xf32>
    %cst_247 = arith.constant dense<0.000000e+00> : vector<16xf32>
    %433 = vector.multi_reduction <add>, %432, %cst_247 [1] : vector<16x32xf32> to vector<16xf32>
    %434 = vector.shape_cast %433 : vector<16xf32> to vector<16x1xf32>
    %cst_248 = arith.constant 3.200000e+01 : f32
    %435 = vector.broadcast %cst_248 : f32 to vector<16x1xf32>
    %436 = arith.divf %434, %435 : vector<16x1xf32>
    %437 = vector.broadcast %429 : vector<16x1xf32> to vector<16x32xf32>
    %438 = arith.subf %423, %437 : vector<16x32xf32>
    %cst_249 = arith.constant 9.99999974E-6 : f32
    %439 = vector.broadcast %cst_249 : f32 to vector<16x1xf32>
    %440 = arith.addf %436, %439 : vector<16x1xf32>
    %441 = math.rsqrt %440 : vector<16x1xf32>
    %442 = vector.broadcast %441 : vector<16x1xf32> to vector<16x32xf32>
    %443 = arith.mulf %438, %442 : vector<16x32xf32>
    %444 = vector.broadcast %424 : vector<1x32xf32> to vector<16x32xf32>
    %445 = arith.mulf %443, %444 : vector<16x32xf32>
    %446 = vector.broadcast %425 : vector<1x32xf32> to vector<16x32xf32>
    %447 = arith.addf %445, %446 : vector<16x32xf32>
    %c0_250 = arith.constant 0 : index
    %c0_251 = arith.constant 0 : index
    %448 = vector.load %arg21[%c0_250, %c0_251] : memref<32x128xf32, #tpu.memory_space<vmem>>, vector<32x128xf32>
    %cst_252 = arith.constant dense<0.000000e+00> : vector<16x128xf32>
    %449 = tpu.matmul %447, %448, %cst_252 {dimension_numbers = #tpu.dot_dimension_numbers<[1], [0], [0], [1], [0, 0, 1, 1], [], []>} : vector<16x32xf32>, vector<32x128xf32>, vector<16x128xf32> -> vector<16x128xf32>
    %c0_253 = arith.constant 0 : index
    %c0_254 = arith.constant 0 : index
    %450 = vector.load %arg22[%c0_253, %c0_254] : memref<1x128xf32, #tpu.memory_space<vmem>>, vector<1x128xf32>
    %451 = vector.broadcast %450 : vector<1x128xf32> to vector<16x128xf32>
    %452 = arith.addf %449, %451 : vector<16x128xf32>
    %c0_255 = arith.constant 0 : index
    %c0_256 = arith.constant 0 : index
    %453 = vector.load %arg23[%c0_255, %c0_256] : memref<16x128xf32, #tpu.memory_space<vmem>>, vector<16x128xf32>
    tpu.vector_store %arg23[%c0_255, %c0_256], %452 {strides = array<i32>} : memref<16x128xf32, #tpu.memory_space<vmem>>, vector<16x128xf32>,
    return
  }
}

</mosaic_0001>

<llo_original>
// kernel: tpu_custom_call.1
$region0: #{tpu_custom_call.1}
  #allocation0 [shape = 'u32[]', space=smem, size = 0x4, offset = 0x4, fixed_abs, tag = 'smem constant byte address 0x4 - core index']
  #allocation1 [shape = 'u32[144,128]{1,0:T(1,128)}', space=vmem, size = 0x12000, scoped, tag = 'internal scratch']
  %s0 = inlined_call_operand.vmem [shape: s32[16,1], index: 0, kind: input, shape index: {}]
  %s1 = inlined_call_operand.vmem [shape: f32[50,32], index: 1, kind: input, shape index: {}]
  %s2 = inlined_call_operand.vmem [shape: f32[16,32], index: 2, kind: input, shape index: {}]
  %s3 = inlined_call_operand.vmem [shape: f32[4,32,16], index: 3, kind: input, shape index: {}]
  %s4 = inlined_call_operand.vmem [shape: f32[4,1,16], index: 4, kind: input, shape index: {}]
  %s5 = inlined_call_operand.vmem [shape: f32[4,32,16], index: 5, kind: input, shape index: {}]
  %s6 = inlined_call_operand.vmem [shape: f32[4,1,16], index: 6, kind: input, shape index: {}]
  %s7 = inlined_call_operand.vmem [shape: f32[4,32,16], index: 7, kind: input, shape index: {}]
  %s8 = inlined_call_operand.vmem [shape: f32[4,1,16], index: 8, kind: input, shape index: {}]
  %s9 = inlined_call_operand.vmem [shape: f32[4,16,32], index: 9, kind: input, shape index: {}]
  %s10 = inlined_call_operand.vmem [shape: f32[2,1,32], index: 10, kind: input, shape index: {}]
  %s11 = inlined_call_operand.vmem [shape: f32[2,1,32], index: 11, kind: input, shape index: {}]
  %s12 = inlined_call_operand.vmem [shape: f32[2,1,32], index: 12, kind: input, shape index: {}]
  %s13 = inlined_call_operand.vmem [shape: f32[2,1,32], index: 13, kind: input, shape index: {}]
  %s14 = inlined_call_operand.vmem [shape: f32[2,1,32], index: 14, kind: input, shape index: {}]
  %s15 = inlined_call_operand.vmem [shape: f32[2,32,64], index: 15, kind: input, shape index: {}]
  %s16 = inlined_call_operand.vmem [shape: f32[2,1,64], index: 16, kind: input, shape index: {}]
  %s17 = inlined_call_operand.vmem [shape: f32[2,64,32], index: 17, kind: input, shape index: {}]
  %s18 = inlined_call_operand.vmem [shape: f32[2,1,32], index: 18, kind: input, shape index: {}]
  %s19 = inlined_call_operand.vmem [shape: f32[1,32], index: 19, kind: input, shape index: {}]
  %s20 = inlined_call_operand.vmem [shape: f32[1,32], index: 20, kind: input, shape index: {}]
  %s21 = inlined_call_operand.vmem [shape: f32[32,128], index: 21, kind: input, shape index: {}]
  %s22 = inlined_call_operand.vmem [shape: f32[1,128], index: 22, kind: input, shape index: {}]
  %s23 = inlined_call_operand.hbm [shape: f32[16,128], index: 23, kind: output, shape index: {}]
  %s24 = sld [smem:[#allocation0]]
  $region102: #{tpu_custom_call.1} parent=0
    _
  %s26 = ssub.s32 1, %s24
  %s27 = scalar_select 0, %s26, %s24
  $region1: #{tpu_custom_call.1} parent=0
    #allocation2 [shape = 'u8[8192]{0}', space=vmem, size = 0x2000, scoped, tag = 'output window, operand 0, single buffered']
    #allocation3 [shape = 's32[1]{0}', space=sflag, size = 0x4, scoped, tag = 'scoped memory for tpu_custom_call.1']
    %28 = vsyncpa [#allocation3], 0
    // Predicated region
    $region2: #{tpu_custom_call.1} parent=1 // pred_check
      _
    $region3: #{tpu_custom_call.1} parent=1 // pred_check_branch
      %30 = sbr.rel (0) target = $region5
    $region4: #{tpu_custom_call.1} parent=1 // pred_region
      _
    $region5: #{tpu_custom_call.1} parent=1 // pred_fallthru
      _
    // Predicated region
    $region6: #{tpu_custom_call.1} parent=1 // pred_check
      _
    $region7: #{tpu_custom_call.1} parent=1 // pred_check_branch
      %32 = sbr.rel (0) target = $region9
    $region8: #{tpu_custom_call.1} parent=1 // pred_region
      _
    $region9: #{tpu_custom_call.1} parent=1 // pred_fallthru
      _
    // Predicated region
    $region10: #{tpu_custom_call.1} parent=1 // pred_check
      _
    $region11: #{tpu_custom_call.1} parent=1 // pred_check_branch
      %34 = sbr.rel (0) target = $region13
    $region12: #{tpu_custom_call.1} parent=1 // pred_region
      _
    $region13: #{tpu_custom_call.1} parent=1 // pred_fallthru
      _
    // Predicated region
    $region14: #{tpu_custom_call.1} parent=1 // pred_check
      _
    $region15: #{tpu_custom_call.1} parent=1 // pred_check_branch
      %36 = sbr.rel (0) target = $region17
    $region16: #{tpu_custom_call.1} parent=1 // pred_region
      _
    $region17: #{tpu_custom_call.1} parent=1 // pred_fallthru
      _
    // Predicated region
    $region18: #{tpu_custom_call.1} parent=1 // pred_check
      _
    $region19: #{tpu_custom_call.1} parent=1 // pred_check_branch
      %38 = sbr.rel (0) target = $region21
    $region20: #{tpu_custom_call.1} parent=1 // pred_region
      _
    $region21: #{tpu_custom_call.1} parent=1 // pred_fallthru
      _
    // Predicated region
    $region22: #{tpu_custom_call.1} parent=1 // pred_check
      _
    $region23: #{tpu_custom_call.1} parent=1 // pred_check_branch
      %40 = sbr.rel (0) target = $region25
    $region24: #{tpu_custom_call.1} parent=1 // pred_region
      _
    $region25: #{tpu_custom_call.1} parent=1 // pred_fallthru
      _
    // Predicated region
    $region26: #{tpu_custom_call.1} parent=1 // pred_check
      _
    $region27: #{tpu_custom_call.1} parent=1 // pred_check_branch
      %42 = sbr.rel (0) target = $region29
    $region28: #{tpu_custom_call.1} parent=1 // pred_region
      _
    $region29: #{tpu_custom_call.1} parent=1 // pred_fallthru
      _
    // Predicated region
    $region30: #{tpu_custom_call.1} parent=1 // pred_check
      _
    $region31: #{tpu_custom_call.1} parent=1 // pred_check_branch
      %44 = sbr.rel (0) target = $region33
    $region32: #{tpu_custom_call.1} parent=1 // pred_region
      _
    $region33: #{tpu_custom_call.1} parent=1 // pred_fallthru
      _
    // Predicated region
    $region34: #{tpu_custom_call.1} parent=1 // pred_check
      _
    $region35: #{tpu_custom_call.1} parent=1 // pred_check_branch
      %46 = sbr.rel (0) target = $region37
    $region36: #{tpu_custom_call.1} parent=1 // pred_region
      _
    $region37: #{tpu_custom_call.1} parent=1 // pred_fallthru
      _
    // Predicated region
    $region38: #{tpu_custom_call.1} parent=1 // pred_check
      _
    $region39: #{tpu_custom_call.1} parent=1 // pred_check_branch
      %48 = sbr.rel (0) target = $region41
    $region40: #{tpu_custom_call.1} parent=1 // pred_region
      _
    $region41: #{tpu_custom_call.1} parent=1 // pred_fallthru
      _
    // Predicated region
    $region42: #{tpu_custom_call.1} parent=1 // pred_check
      _
    $region43: #{tpu_custom_call.1} parent=1 // pred_check_branch
      %50 = sbr.rel (0) target = $region45
    $region44: #{tpu_custom_call.1} parent=1 // pred_region
      _
    $region45: #{tpu_custom_call.1} parent=1 // pred_fallthru
      _
    // Predicated region
    $region46: #{tpu_custom_call.1} parent=1 // pred_check
      _
    $region47: #{tpu_custom_call.1} parent=1 // pred_check_branch
      %52 = sbr.rel (0) target = $region49
    $region48: #{tpu_custom_call.1} parent=1 // pred_region
      _
    $region49: #{tpu_custom_call.1} parent=1 // pred_fallthru
      _
    // Predicated region
    $region50: #{tpu_custom_call.1} parent=1 // pred_check
      _
    $region51: #{tpu_custom_call.1} parent=1 // pred_check_branch
      %54 = sbr.rel (0) target = $region53
    $region52: #{tpu_custom_call.1} parent=1 // pred_region
      _
    $region53: #{tpu_custom_call.1} parent=1 // pred_fallthru
      _
    // Predicated region
    $region54: #{tpu_custom_call.1} parent=1 // pred_check
      _
    $region55: #{tpu_custom_call.1} parent=1 // pred_check_branch
      %56 = sbr.rel (0) target = $region57
    $region56: #{tpu_custom_call.1} parent=1 // pred_region
      _
    $region57: #{tpu_custom_call.1} parent=1 // pred_fallthru
      _
    // Predicated region
    $region58: #{tpu_custom_call.1} parent=1 // pred_check
      _
    $region59: #{tpu_custom_call.1} parent=1 // pred_check_branch
      %58 = sbr.rel (0) target = $region61
    $region60: #{tpu_custom_call.1} parent=1 // pred_region
      _
    $region61: #{tpu_custom_call.1} parent=1 // pred_fallthru
      _
    // Predicated region
    $region62: #{tpu_custom_call.1} parent=1 // pred_check
      _
    $region63: #{tpu_custom_call.1} parent=1 // pred_check_branch
      %60 = sbr.rel (0) target = $region65
    $region64: #{tpu_custom_call.1} parent=1 // pred_region
      _
    $region65: #{tpu_custom_call.1} parent=1 // pred_fallthru
      _
    // Predicated region
    $region66: #{tpu_custom_call.1} parent=1 // pred_check
      _
    $region67: #{tpu_custom_call.1} parent=1 // pred_check_branch
      %62 = sbr.rel (0) target = $region69
    $region68: #{tpu_custom_call.1} parent=1 // pred_region
      _
    $region69: #{tpu_custom_call.1} parent=1 // pred_fallthru
      _
    // Predicated region
    $region70: #{tpu_custom_call.1} parent=1 // pred_check
      _
    $region71: #{tpu_custom_call.1} parent=1 // pred_check_branch
      %64 = sbr.rel (0) target = $region73
    $region72: #{tpu_custom_call.1} parent=1 // pred_region
      _
    $region73: #{tpu_custom_call.1} parent=1 // pred_fallthru
      _
    // Predicated region
    $region74: #{tpu_custom_call.1} parent=1 // pred_check
      _
    $region75: #{tpu_custom_call.1} parent=1 // pred_check_branch
      %66 = sbr.rel (0) target = $region77
    $region76: #{tpu_custom_call.1} parent=1 // pred_region
      _
    $region77: #{tpu_custom_call.1} parent=1 // pred_fallthru
      _
    // Predicated region
    $region78: #{tpu_custom_call.1} parent=1 // pred_check
      _
    $region79: #{tpu_custom_call.1} parent=1 // pred_check_branch
      %68 = sbr.rel (0) target = $region81
    $region80: #{tpu_custom_call.1} parent=1 // pred_region
      _
    $region81: #{tpu_custom_call.1} parent=1 // pred_fallthru
      _
    // Predicated region
    $region82: #{tpu_custom_call.1} parent=1 // pred_check
      _
    $region83: #{tpu_custom_call.1} parent=1 // pred_check_branch
      %70 = sbr.rel (0) target = $region85
    $region84: #{tpu_custom_call.1} parent=1 // pred_region
      _
    $region85: #{tpu_custom_call.1} parent=1 // pred_fallthru
      _
    // Predicated region
    $region86: #{tpu_custom_call.1} parent=1 // pred_check
      _
    $region87: #{tpu_custom_call.1} parent=1 // pred_check_branch
      %72 = sbr.rel (0) target = $region89
    $region88: #{tpu_custom_call.1} parent=1 // pred_region
      _
    $region89: #{tpu_custom_call.1} parent=1 // pred_fallthru
      _
    // Predicated region
    $region90: #{tpu_custom_call.1} parent=1 // pred_check
      _
    $region91: #{tpu_custom_call.1} parent=1 // pred_check_branch
      %74 = sbr.rel (0) target = $region93
    $region92: #{tpu_custom_call.1} parent=1 // pred_region
      _
    $region93: #{tpu_custom_call.1} parent=1 // pred_fallthru
      _
    %v75 = vld [vmem:[%s0] sm:$0xff]
    %v76 = vld [vmem:[%s0 + $0x8] sm:$0xff]
    %v77 = vlaneseq
    %v78 = vand.u32 %v77, 127
    %79 = vset.pattern.permute.xlu0 0
    %80 = vperm.xlu0 %79, %v75
    %v81 = vpop.permute.xlu0 %80
    %82 = vset.pattern.permute.xlu0 0
    %83 = vperm.xlu0 %82, %v76
    %v84 = vpop.permute.xlu0 %83
    %vm85 = vcmp.eq.s32.totalorder %v78, %v81
    %vm86 = vcmp.eq.s32.totalorder %v78, %v84
    %v87 = vsel %vm85, 1, 0
    %v88 = vsel %vm86, 1, 0
    %v89 = vcvt.s32.f32 %v87
    %v90 = vcvt.s32.f32 %v88
    %v91 = vld [vmem:[%s1] sm:$0xff]
    %v92 = vld [vmem:[%s1 + $0x8] sm:$0xff]
    %v93 = vld [vmem:[%s1 + $0x10] sm:$0xff]
    %v94 = vld [vmem:[%s1 + $0x18] sm:$0xff]
    %v95 = vld [vmem:[%s1 + $0x20] sm:$0xff]
    %v96 = vld [vmem:[%s1 + $0x28] sm:$0xff]
    %v97 = vld [vmem:[%s1 + $0x30] sm:$0x3]
    %v98 = vld [vmem:[%s2] sm:$0xff]
    %v99 = vld [vmem:[%s2 + $0x8] sm:$0xff]
    %vm100 = vcmask 408576
    %v102 = vsel %vm100, %v89, 0
    %v105 = vsel %vm100, %v90, 0
    %vm107 = vcmask 1041408
    %v109 = vsel %vm107, %v97, 0
    %111 = vmatprep.subr.mxu0 0.0
    %112 = vmatpush1.msra.mxu0 0.0
    %113 = vmatprep.subr.mxu0 0.0
    %114 = vmatpush1.msra.mxu0 0.0
    %115 = vmatprep.subr.mxu0 0.0
    %116 = vmatpush1.msra.mxu0 0.0
    %117 = vmatprep.subr.mxu0 0.0
    %118 = vmatpush1.msra.mxu0 0.0
    %119 = vmatprep.subr.mxu0 0.0
    %120 = vmatpush1.msra.mxu0 0.0
    %121 = vmatprep.subr.mxu0 0.0
    %122 = vmatpush1.msra.mxu0 0.0
    %123 = vmatprep.subr.mxu0 0.0
    %124 = vmatpush1.msra.mxu0 0.0
    %125 = vmatprep.subr.mxu0 0.0
    %126 = vmatpush1.msra.mxu0 0.0
    %127 = vmatprep.subr.mxu0 0.0
    %128 = vmatpush1.msra.mxu0 0.0
    %129 = vmatprep.subr.mxu0 0.0
    %130 = vmatpush1.msra.mxu0 %v109
    %131 = vmatprep.subr.mxu0 0.0
    %132 = vmatpush1.msra.mxu0 %v96
    %133 = vmatprep.subr.mxu0 0.0
    %134 = vmatpush1.msra.mxu0 %v95
    %135 = vmatprep.subr.mxu0 0.0
    %136 = vmatpush1.msra.mxu0 %v94
    %137 = vmatprep.subr.mxu0 0.0
    %138 = vmatpush1.msra.mxu0 %v93
    %139 = vmatprep.subr.mxu0 0.0
    %140 = vmatpush1.msra.mxu0 %v92
    %141 = vmatprep.subr.mxu0 0.0
    %142 = vmatpush1.msra.mxu0 %v91
    %143 = vmatprep.subr.mxu0 0.0
    %144 = vmatpush2.msra.mxu0 0.0
    %145 = vmatprep.subr.mxu0 0.0
    %146 = vmatpush2.msra.mxu0 0.0
    %147 = vmatprep.subr.mxu0 0.0
    %148 = vmatpush2.msra.mxu0 0.0
    %149 = vmatprep.subr.mxu0 0.0
    %150 = vmatpush2.msra.mxu0 0.0
    %151 = vmatprep.subr.mxu0 0.0
    %152 = vmatpush2.msra.mxu0 0.0
    %153 = vmatprep.subr.mxu0 0.0
    %154 = vmatpush2.msra.mxu0 0.0
    %155 = vmatprep.subr.mxu0 0.0
    %156 = vmatpush2.msra.mxu0 0.0
    %157 = vmatprep.subr.mxu0 0.0
    %158 = vmatpush2.msra.mxu0 0.0
    %159 = vmatprep.subr.mxu0 0.0
    %160 = vmatpush2.msra.mxu0 0.0
    %161 = vmatprep.subr.mxu0 0.0
    %162 = vmatpush2.msra.mxu0 0.0
    %163 = vmatprep.subr.mxu0 0.0
    %164 = vmatpush2.msra.mxu0 0.0
    %165 = vmatprep.subr.mxu0 0.0
    %166 = vmatpush2.msra.mxu0 0.0
    %167 = vmatprep.subr.mxu0 0.0
    %168 = vmatpush2.msra.mxu0 0.0
    %169 = vmatprep.subr.mxu0 0.0
    %170 = vmatpush2.msra.mxu0 0.0
    %171 = vmatprep.subr.mxu0 0.0
    %172 = vmatpush2.msra.mxu0 0.0
    %173 = vmatprep.subr.mxu0 0.0
    %174 = vmatpush2.msra.mxu0 0.0
    %175 = vmatprep.mubr.f32.mxu0 0.0
    %176 = vmatmul.mubr.f32.gmra.mxu0 %v102
    %v177 = vpop.f32.mrf.mxu0
    %v178 = vadd.f32 %v98, %v177
    %v179 = vpop.f32.mrf.mxu0
    %180 = vmatprep.mubr.f32.mxu0 0.0
    %181 = vmatmul.mubr.f32.gmra.mxu0 %v105
    %v182 = vpop.f32.mrf.mxu0
    %v183 = vadd.f32 %v99, %v182
    %v184 = vpop.f32.mrf.mxu0
    %185 = vdwg.mxu0
    %v186 = vlaneseq
    %v187 = vshrl.u32 %v186, 7
    %v188 = vadd.s32 %v187, 8
    %vm189 = vcmp.lt.s32.totalorder %v187, 0
    %v190 = vsub.s32 0, %v187
    %v191 = vsel %vm189, %v190, %v187
    %v192 = vshrl.u32 %v191, 1
    %v193 = vand.u32 %v191, 1
    %v194 = vsub.s32 0, %v193
    %v195 = vsel %vm189, %v194, %v193
    %vm196 = vcmp.lt.s32.totalorder %v188, 0
    %v197 = vsub.s32 0, %v188
    %v198 = vsel %vm196, %v197, %v188
    %v199 = vshrl.u32 %v198, 1
    %v200 = vand.u32 %v198, 1
    %v201 = vsub.s32 0, %v200
    %v202 = vsel %vm196, %v201, %v200
    %vm203 = vcmp.ne.s32.totalorder %v195, 0
    %vm204 = vcmp.ne.s32.totalorder %v202, 0
    %vm205 = vcmp.lt.s32.totalorder %v195, 0
    %vm206 = vcmp.lt.s32.totalorder %v202, 0
    %vm207 = vmand %vm205, %vm203
    %vm208 = vmand %vm206, %vm204
    %v209 = vadd.s32 %v195, 2
    %v210 = vadd.s32 %v202, 2
    %v211 = vsel %vm207, %v209, %v195
    %v212 = vsel %vm208, %v210, %v202
    %vm213 = vcmp.lt.s32.totalorder %v78, 0
    %v214 = vsub.s32 0, %v78
    %v215 = vsel %vm213, %v214, %v78
    %v216 = vshrl.u32 %v215, 1
    %v217 = vand.u32 %v215, 1
    %v218 = vsub.s32 0, %v217
    %v219 = vsel %vm213, %v218, %v217
    %vm220 = vcmp.ne.s32.totalorder %v219, 0
    %vm221 = vcmp.lt.s32.totalorder %v219, 0
    %vm222 = vmand %vm221, %vm220
    %v223 = vadd.s32 %v219, 2
    %v224 = vsel %vm222, %v223, %v219
    %vm225 = vcmp.eq.s32.totalorder %v211, %v224
    %vm226 = vcmp.eq.s32.totalorder %v212, %v224
    %v227 = vsel %vm225, 0.0, -1e+30
    %v228 = vsel %vm226, 0.0, -1e+30
    %v229 = vld [vmem:[%s11] sm:$0x1]
    %v230 = vld [vmem:[%s12] sm:$0x1]
    %vm231 = vcmask 261120
    %v232 = vsel %vm231, %v178, 0.0
    %233 = vadd.xlane.f32.xlu0 %v232
    %v234 = vpop.xlane.xlu0 %233
    %v235 = vsel %vm231, %v183, 0.0
    %236 = vadd.xlane.f32.xlu0 %v235
    %v237 = vpop.xlane.xlu0 %236
    %v238 = vrcp.pop 32.0
    %v239 = vmul.f32 %v234, %v238
    %v240 = vmul.f32 %v237, %v238
    %v241 = vsub.f32 %v178, %v239
    %v242 = vsub.f32 %v183, %v240
    %v243 = vmul.f32 %v241, %v241
    %v244 = vmul.f32 %v242, %v242
    %v245 = vsel %vm231, %v243, 0.0
    %246 = vadd.xlane.f32.xlu0 %v245
    %v247 = vpop.xlane.xlu0 %246
    %v248 = vsel %vm231, %v244, 0.0
    %249 = vadd.xlane.f32.xlu0 %v248
    %v250 = vpop.xlane.xlu0 %249
    %v251 = vmul.f32 %v247, %v238
    %v252 = vmul.f32 %v250, %v238
    %v253 = vadd.f32 %v251, 1e-05
    %v254 = vadd.f32 %v252, 1e-05
    %v255 = vrsqrt.pop %v253
    %v256 = vrsqrt.pop %v254
    %v257 = vmul.f32 %v241, %v255
    %v258 = vmul.f32 %v242, %v256
    %v260 = vlaneseq
    %v261 = vshrl.u32 %v260, 7
    %v262 = vsub.s32 0, %v261
    %v263 = vrot.slane %v229, %v262
    %v265 = vmul.f32 %v257, %v263
    %v266 = vmul.f32 %v258, %v263
    %v268 = vlaneseq
    %v269 = vshrl.u32 %v268, 7
    %v270 = vsub.s32 0, %v269
    %v271 = vrot.slane %v230, %v270
    %v273 = vadd.f32 %v265, %v271
    %v274 = vadd.f32 %v266, %v271
    %v275 = vld [vmem:[%s3] sm:$0xff]
    %v276 = vld [vmem:[%s3 + $0x8] sm:$0xff]
    %v277 = vld [vmem:[%s3 + $0x10] sm:$0xff]
    %v278 = vld [vmem:[%s3 + $0x18] sm:$0xff]
    %v279 = vld [vmem:[%s4] sm:$0x1]
    %v281 = vlaneseq
    %v282 = vshrl.u32 %v281, 7
    %v283 = vsub.s32 0, %v282
    %v284 = vrot.slane %v279, %v283
    %v287 = vsel %vm231, %v273, 0
    %v290 = vsel %vm231, %v274, 0
    %292 = vmatprep.subr.mxu0 0.0
    %293 = vmatpush1.msra.mxu0 0.0
    %294 = vmatprep.subr.mxu0 0.0
    %295 = vmatpush1.msra.mxu0 0.0
    %296 = vmatprep.subr.mxu0 0.0
    %297 = vmatpush1.msra.mxu0 0.0
    %298 = vmatprep.subr.mxu0 0.0
    %299 = vmatpush1.msra.mxu0 0.0
    %300 = vmatprep.subr.mxu0 0.0
    %301 = vmatpush1.msra.mxu0 0.0
    %302 = vmatprep.subr.mxu0 0.0
    %303 = vmatpush1.msra.mxu0 0.0
    %304 = vmatprep.subr.mxu0 0.0
    %305 = vmatpush1.msra.mxu0 0.0
    %306 = vmatprep.subr.mxu0 0.0
    %307 = vmatpush1.msra.mxu0 0.0
    %308 = vmatprep.subr.mxu0 0.0
    %309 = vmatpush1.msra.mxu0 0.0
    %310 = vmatprep.subr.mxu0 0.0
    %311 = vmatpush1.msra.mxu0 0.0
    %312 = vmatprep.subr.mxu0 0.0
    %313 = vmatpush1.msra.mxu0 0.0
    %314 = vmatprep.subr.mxu0 0.0
    %315 = vmatpush1.msra.mxu0 0.0
    %316 = vmatprep.subr.mxu0 0.0
    %317 = vmatpush1.msra.mxu0 %v278
    %318 = vmatprep.subr.mxu0 0.0
    %319 = vmatpush1.msra.mxu0 %v277
    %320 = vmatprep.subr.mxu0 0.0
    %321 = vmatpush1.msra.mxu0 %v276
    %322 = vmatprep.subr.mxu0 0.0
    %323 = vmatpush1.msra.mxu0 %v275
    %324 = vmatprep.subr.mxu0 0.0
    %325 = vmatpush2.msra.mxu0 0.0
    %326 = vmatprep.subr.mxu0 0.0
    %327 = vmatpush2.msra.mxu0 0.0
    %328 = vmatprep.subr.mxu0 0.0
    %329 = vmatpush2.msra.mxu0 0.0
    %330 = vmatprep.subr.mxu0 0.0
    %331 = vmatpush2.msra.mxu0 0.0
    %332 = vmatprep.subr.mxu0 0.0
    %333 = vmatpush2.msra.mxu0 0.0
    %334 = vmatprep.subr.mxu0 0.0
    %335 = vmatpush2.msra.mxu0 0.0
    %336 = vmatprep.subr.mxu0 0.0
    %337 = vmatpush2.msra.mxu0 0.0
    %338 = vmatprep.subr.mxu0 0.0
    %339 = vmatpush2.msra.mxu0 0.0
    %340 = vmatprep.subr.mxu0 0.0
    %341 = vmatpush2.msra.mxu0 0.0
    %342 = vmatprep.subr.mxu0 0.0
    %343 = vmatpush2.msra.mxu0 0.0
    %344 = vmatprep.subr.mxu0 0.0
    %345 = vmatpush2.msra.mxu0 0.0
    %346 = vmatprep.subr.mxu0 0.0
    %347 = vmatpush2.msra.mxu0 0.0
    %348 = vmatprep.subr.mxu0 0.0
    %349 = vmatpush2.msra.mxu0 0.0
    %350 = vmatprep.subr.mxu0 0.0
    %351 = vmatpush2.msra.mxu0 0.0
    %352 = vmatprep.subr.mxu0 0.0
    %353 = vmatpush2.msra.mxu0 0.0
    %354 = vmatprep.subr.mxu0 0.0
    %355 = vmatpush2.msra.mxu0 0.0
    %356 = vmatprep.mubr.f32.mxu0 0.0
    %357 = vmatmul.mubr.f32.gmra.mxu0 %v287
    %v358 = vpop.f32.mrf.mxu0
    %v359 = vadd.f32 %v284, %v358
    %v360 = vpop.f32.mrf.mxu0
    %361 = vmatprep.mubr.f32.mxu0 0.0
    %362 = vmatmul.mubr.f32.gmra.mxu0 %v290
    %v363 = vpop.f32.mrf.mxu0
    %v364 = vadd.f32 %v284, %v363
    %v365 = vpop.f32.mrf.mxu0
    %366 = vdwg.mxu0
    %v367 = vld [vmem:[%s5] sm:$0xff]
    %v368 = vld [vmem:[%s5 + $0x8] sm:$0xff]
    %v369 = vld [vmem:[%s5 + $0x10] sm:$0xff]
    %v370 = vld [vmem:[%s5 + $0x18] sm:$0xff]
    %v371 = vld [vmem:[%s6] sm:$0x1]
    %v373 = vlaneseq
    %v374 = vshrl.u32 %v373, 7
    %v375 = vsub.s32 0, %v374
    %v376 = vrot.slane %v371, %v375
    %378 = vmatprep.subr.mxu0 0.0
    %379 = vmatpush1.msra.mxu0 0.0
    %380 = vmatprep.subr.mxu0 0.0
    %381 = vmatpush1.msra.mxu0 0.0
    %382 = vmatprep.subr.mxu0 0.0
    %383 = vmatpush1.msra.mxu0 0.0
    %384 = vmatprep.subr.mxu0 0.0
    %385 = vmatpush1.msra.mxu0 0.0
    %386 = vmatprep.subr.mxu0 0.0
    %387 = vmatpush1.msra.mxu0 0.0
    %388 = vmatprep.subr.mxu0 0.0
    %389 = vmatpush1.msra.mxu0 0.0
    %390 = vmatprep.subr.mxu0 0.0
    %391 = vmatpush1.msra.mxu0 0.0
    %392 = vmatprep.subr.mxu0 0.0
    %393 = vmatpush1.msra.mxu0 0.0
    %394 = vmatprep.subr.mxu0 0.0
    %395 = vmatpush1.msra.mxu0 0.0
    %396 = vmatprep.subr.mxu0 0.0
    %397 = vmatpush1.msra.mxu0 0.0
    %398 = vmatprep.subr.mxu0 0.0
    %399 = vmatpush1.msra.mxu0 0.0
    %400 = vmatprep.subr.mxu0 0.0
    %401 = vmatpush1.msra.mxu0 0.0
    %402 = vmatprep.subr.mxu0 0.0
    %403 = vmatpush1.msra.mxu0 %v370
    %404 = vmatprep.subr.mxu0 0.0
    %405 = vmatpush1.msra.mxu0 %v369
    %406 = vmatprep.subr.mxu0 0.0
    %407 = vmatpush1.msra.mxu0 %v368
    %408 = vmatprep.subr.mxu0 0.0
    %409 = vmatpush1.msra.mxu0 %v367
    %410 = vmatprep.subr.mxu0 0.0
    %411 = vmatpush2.msra.mxu0 0.0
    %412 = vmatprep.subr.mxu0 0.0
    %413 = vmatpush2.msra.mxu0 0.0
    %414 = vmatprep.subr.mxu0 0.0
    %415 = vmatpush2.msra.mxu0 0.0
    %416 = vmatprep.subr.mxu0 0.0
    %417 = vmatpush2.msra.mxu0 0.0
    %418 = vmatprep.subr.mxu0 0.0
    %419 = vmatpush2.msra.mxu0 0.0
    %420 = vmatprep.subr.mxu0 0.0
    %421 = vmatpush2.msra.mxu0 0.0
    %422 = vmatprep.subr.mxu0 0.0
    %423 = vmatpush2.msra.mxu0 0.0
    %424 = vmatprep.subr.mxu0 0.0
    %425 = vmatpush2.msra.mxu0 0.0
    %426 = vmatprep.subr.mxu0 0.0
    %427 = vmatpush2.msra.mxu0 0.0
    %428 = vmatprep.subr.mxu0 0.0
    %429 = vmatpush2.msra.mxu0 0.0
    %430 = vmatprep.subr.mxu0 0.0
    %431 = vmatpush2.msra.mxu0 0.0
    %432 = vmatprep.subr.mxu0 0.0
    %433 = vmatpush2.msra.mxu0 0.0
    %434 = vmatprep.subr.mxu0 0.0
    %435 = vmatpush2.msra.mxu0 0.0
    %436 = vmatprep.subr.mxu0 0.0
    %437 = vmatpush2.msra.mxu0 0.0
    %438 = vmatprep.subr.mxu0 0.0
    %439 = vmatpush2.msra.mxu0 0.0
    %440 = vmatprep.subr.mxu0 0.0
    %441 = vmatpush2.msra.mxu0 0.0
    %442 = vmatprep.mubr.f32.mxu0 0.0
    %443 = vmatmul.mubr.f32.gmra.mxu0 %v287
    %v444 = vpop.f32.mrf.mxu0
    %v445 = vadd.f32 %v376, %v444
    %v446 = vpop.f32.mrf.mxu0
    %447 = vmatprep.mubr.f32.mxu0 0.0
    %448 = vmatmul.mubr.f32.gmra.mxu0 %v290
    %v449 = vpop.f32.mrf.mxu0
    %v450 = vadd.f32 %v376, %v449
    %v451 = vpop.f32.mrf.mxu0
    %452 = vdwg.mxu0
    %v453 = vld [vmem:[%s7] sm:$0xff]
    %v454 = vld [vmem:[%s7 + $0x8] sm:$0xff]
    %v455 = vld [vmem:[%s7 + $0x10] sm:$0xff]
    %v456 = vld [vmem:[%s7 + $0x18] sm:$0xff]
    %v457 = vld [vmem:[%s8] sm:$0x1]
    %v459 = vlaneseq
    %v460 = vshrl.u32 %v459, 7
    %v461 = vsub.s32 0, %v460
    %v462 = vrot.slane %v457, %v461
    %464 = vmatprep.subr.mxu0 0.0
    %465 = vmatpush1.msra.mxu0 0.0
    %466 = vmatprep.subr.mxu0 0.0
    %467 = vmatpush1.msra.mxu0 0.0
    %468 = vmatprep.subr.mxu0 0.0
    %469 = vmatpush1.msra.mxu0 0.0
    %470 = vmatprep.subr.mxu0 0.0
    %471 = vmatpush1.msra.mxu0 0.0
    %472 = vmatprep.subr.mxu0 0.0
    %473 = vmatpush1.msra.mxu0 0.0
    %474 = vmatprep.subr.mxu0 0.0
    %475 = vmatpush1.msra.mxu0 0.0
    %476 = vmatprep.subr.mxu0 0.0
    %477 = vmatpush1.msra.mxu0 0.0
    %478 = vmatprep.subr.mxu0 0.0
    %479 = vmatpush1.msra.mxu0 0.0
    %480 = vmatprep.subr.mxu0 0.0
    %481 = vmatpush1.msra.mxu0 0.0
    %482 = vmatprep.subr.mxu0 0.0
    %483 = vmatpush1.msra.mxu0 0.0
    %484 = vmatprep.subr.mxu0 0.0
    %485 = vmatpush1.msra.mxu0 0.0
    %486 = vmatprep.subr.mxu0 0.0
    %487 = vmatpush1.msra.mxu0 0.0
    %488 = vmatprep.subr.mxu0 0.0
    %489 = vmatpush1.msra.mxu0 %v456
    %490 = vmatprep.subr.mxu0 0.0
    %491 = vmatpush1.msra.mxu0 %v455
    %492 = vmatprep.subr.mxu0 0.0
    %493 = vmatpush1.msra.mxu0 %v454
    %494 = vmatprep.subr.mxu0 0.0
    %495 = vmatpush1.msra.mxu0 %v453
    %496 = vmatprep.subr.mxu0 0.0
    %497 = vmatpush2.msra.mxu0 0.0
    %498 = vmatprep.subr.mxu0 0.0
    %499 = vmatpush2.msra.mxu0 0.0
    %500 = vmatprep.subr.mxu0 0.0
    %501 = vmatpush2.msra.mxu0 0.0
    %502 = vmatprep.subr.mxu0 0.0
    %503 = vmatpush2.msra.mxu0 0.0
    %504 = vmatprep.subr.mxu0 0.0
    %505 = vmatpush2.msra.mxu0 0.0
    %506 = vmatprep.subr.mxu0 0.0
    %507 = vmatpush2.msra.mxu0 0.0
    %508 = vmatprep.subr.mxu0 0.0
    %509 = vmatpush2.msra.mxu0 0.0
    %510 = vmatprep.subr.mxu0 0.0
    %511 = vmatpush2.msra.mxu0 0.0
    %512 = vmatprep.subr.mxu0 0.0
    %513 = vmatpush2.msra.mxu0 0.0
    %514 = vmatprep.subr.mxu0 0.0
    %515 = vmatpush2.msra.mxu0 0.0
    %516 = vmatprep.subr.mxu0 0.0
    %517 = vmatpush2.msra.mxu0 0.0
    %518 = vmatprep.subr.mxu0 0.0
    %519 = vmatpush2.msra.mxu0 0.0
    %520 = vmatprep.subr.mxu0 0.0
    %521 = vmatpush2.msra.mxu0 0.0
    %522 = vmatprep.subr.mxu0 0.0
    %523 = vmatpush2.msra.mxu0 0.0
    %524 = vmatprep.subr.mxu0 0.0
    %525 = vmatpush2.msra.mxu0 0.0
    %526 = vmatprep.subr.mxu0 0.0
    %527 = vmatpush2.msra.mxu0 0.0
    %528 = vmatprep.mubr.f32.mxu0 0.0
    %529 = vmatmul.mubr.f32.gmra.mxu0 %v287
    %v530 = vpop.f32.mrf.mxu0
    %v531 = vadd.f32 %v462, %v530
    %v532 = vpop.f32.mrf.mxu0
    %533 = vmatprep.mubr.f32.mxu0 0.0
    %534 = vmatmul.mubr.f32.gmra.mxu0 %v290
    %v535 = vpop.f32.mrf.mxu0
    %v536 = vadd.f32 %v462, %v535
    %v537 = vpop.f32.mrf.mxu0
    %538 = vdwg.mxu0
    %vm539 = vcmask 130048
    %v541 = vsel %vm539, %v359, 0
    %v544 = vsel %vm539, %v364, 0
    %v547 = vsel %vm539, %v445, 0
    %v550 = vsel %vm539, %v450, 0
    %552 = vmatprep.subr.mxu0 0.0
    %553 = vmatpush1.xpose.msra.mxu0 0.0
    %554 = vmatprep.subr.mxu0 0.0
    %555 = vmatpush1.xpose.msra.mxu0 0.0
    %556 = vmatprep.subr.mxu0 0.0
    %557 = vmatpush1.xpose.msra.mxu0 0.0
    %558 = vmatprep.subr.mxu0 0.0
    %559 = vmatpush1.xpose.msra.mxu0 0.0
    %560 = vmatprep.subr.mxu0 0.0
    %561 = vmatpush1.xpose.msra.mxu0 0.0
    %562 = vmatprep.subr.mxu0 0.0
    %563 = vmatpush1.xpose.msra.mxu0 0.0
    %564 = vmatprep.subr.mxu0 0.0
    %565 = vmatpush1.xpose.msra.mxu0 0.0
    %566 = vmatprep.subr.mxu0 0.0
    %567 = vmatpush1.xpose.msra.mxu0 0.0
    %568 = vmatprep.subr.mxu0 0.0
    %569 = vmatpush1.xpose.msra.mxu0 0.0
    %570 = vmatprep.subr.mxu0 0.0
    %571 = vmatpush1.xpose.msra.mxu0 0.0
    %572 = vmatprep.subr.mxu0 0.0
    %573 = vmatpush1.xpose.msra.mxu0 0.0
    %574 = vmatprep.subr.mxu0 0.0
    %575 = vmatpush1.xpose.msra.mxu0 0.0
    %576 = vmatprep.subr.mxu0 0.0
    %577 = vmatpush1.xpose.msra.mxu0 0.0
    %578 = vmatprep.subr.mxu0 0.0
    %579 = vmatpush1.xpose.msra.mxu0 0.0
    %580 = vmatprep.subr.mxu0 0.0
    %581 = vmatpush1.xpose.msra.mxu0 %v550
    %582 = vmatprep.subr.mxu0 0.0
    %583 = vmatpush1.xpose.msra.mxu0 %v547
    %584 = vmatprep.subr.mxu0 0.0
    %585 = vmatpush2.xpose.msra.mxu0 0.0
    %586 = vmatprep.subr.mxu0 0.0
    %587 = vmatpush2.xpose.msra.mxu0 0.0
    %588 = vmatprep.subr.mxu0 0.0
    %589 = vmatpush2.xpose.msra.mxu0 0.0
    %590 = vmatprep.subr.mxu0 0.0
    %591 = vmatpush2.xpose.msra.mxu0 0.0
    %592 = vmatprep.subr.mxu0 0.0
    %593 = vmatpush2.xpose.msra.mxu0 0.0
    %594 = vmatprep.subr.mxu0 0.0
    %595 = vmatpush2.xpose.msra.mxu0 0.0
    %596 = vmatprep.subr.mxu0 0.0
    %597 = vmatpush2.xpose.msra.mxu0 0.0
    %598 = vmatprep.subr.mxu0 0.0
    %599 = vmatpush2.xpose.msra.mxu0 0.0
    %600 = vmatprep.subr.mxu0 0.0
    %601 = vmatpush2.xpose.msra.mxu0 0.0
    %602 = vmatprep.subr.mxu0 0.0
    %603 = vmatpush2.xpose.msra.mxu0 0.0
    %604 = vmatprep.subr.mxu0 0.0
    %605 = vmatpush2.xpose.msra.mxu0 0.0
    %606 = vmatprep.subr.mxu0 0.0
    %607 = vmatpush2.xpose.msra.mxu0 0.0
    %608 = vmatprep.subr.mxu0 0.0
    %609 = vmatpush2.xpose.msra.mxu0 0.0
    %610 = vmatprep.subr.mxu0 0.0
    %611 = vmatpush2.xpose.msra.mxu0 0.0
    %612 = vmatprep.subr.mxu0 0.0
    %613 = vmatpush2.xpose.msra.mxu0 0.0
    %614 = vmatprep.subr.mxu0 0.0
    %615 = vmatpush2.xpose.msra.mxu0 0.0
    %616 = vmatprep.mubr.f32.mxu0 0.0
    %617 = vmatmul.mubr.f32.gmra.mxu0 %v541
    %v618 = vpop.f32.mrf.mxu0
    %v619 = vadd.f32 %v227, %v618
    %v620 = vpop.f32.mrf.mxu0
    %621 = vmatprep.mubr.f32.mxu0 0.0
    %622 = vmatmul.mubr.f32.gmra.mxu0 %v544
    %v623 = vpop.f32.mrf.mxu0
    %v624 = vadd.f32 %v228, %v623
    %v625 = vpop.f32.mrf.mxu0
    %626 = vdwg.mxu0
    %v627 = vsel %vm539, %v619, -inf
    %628 = vmax.xlane.f32.xlu0 %v627
    %v629 = vpop.xlane.xlu0 %628
    %v630 = vsel %vm539, %v624, -inf
    %631 = vmax.xlane.f32.xlu0 %v630
    %v632 = vpop.xlane.xlu0 %631
    %v633 = vsub.f32 %v619, %v629
    %v634 = vsub.f32 %v624, %v632
    %v635 = vmul.f32 %v633, 1.442695
    %v636 = vpow.pop %v635
    %v637 = vmul.f32 %v634, 1.442695
    %v638 = vpow.pop %v637
    %v639 = vsel %vm539, %v636, 0.0
    %640 = vadd.xlane.f32.xlu0 %v639
    %v641 = vpop.xlane.xlu0 %640
    %v642 = vsel %vm539, %v638, 0.0
    %643 = vadd.xlane.f32.xlu0 %v642
    %v644 = vpop.xlane.xlu0 %643
    %v645 = vrcp.pop %v641
    %v646 = vmul.f32 %v636, %v645
    %v647 = vrcp.pop %v644
    %v648 = vmul.f32 %v638, %v647
    %v650 = vsel %vm539, %v646, 0
    %v653 = vsel %vm539, %v648, 0
    %655 = vmatprep.subr.mxu0 0.0
    %656 = vmatpush1.msra.mxu0 0.0
    %657 = vmatprep.subr.mxu0 0.0
    %658 = vmatpush1.msra.mxu0 0.0
    %659 = vmatprep.subr.mxu0 0.0
    %660 = vmatpush1.msra.mxu0 0.0
    %661 = vmatprep.subr.mxu0 0.0
    %662 = vmatpush1.msra.mxu0 0.0
    %663 = vmatprep.subr.mxu0 0.0
    %664 = vmatpush1.msra.mxu0 0.0
    %665 = vmatprep.subr.mxu0 0.0
    %666 = vmatpush1.msra.mxu0 0.0
    %667 = vmatprep.subr.mxu0 0.0
    %668 = vmatpush1.msra.mxu0 0.0
    %669 = vmatprep.subr.mxu0 0.0
    %670 = vmatpush1.msra.mxu0 0.0
    %671 = vmatprep.subr.mxu0 0.0
    %672 = vmatpush1.msra.mxu0 0.0
    %673 = vmatprep.subr.mxu0 0.0
    %674 = vmatpush1.msra.mxu0 0.0
    %675 = vmatprep.subr.mxu0 0.0
    %676 = vmatpush1.msra.mxu0 0.0
    %677 = vmatprep.subr.mxu0 0.0
    %678 = vmatpush1.msra.mxu0 0.0
    %679 = vmatprep.subr.mxu0 0.0
    %680 = vmatpush1.msra.mxu0 0.0
    %681 = vmatprep.subr.mxu0 0.0
    %682 = vmatpush1.msra.mxu0 0.0
    %683 = vmatprep.subr.mxu0 0.0
    %684 = vmatpush1.msra.mxu0 %v536
    %685 = vmatprep.subr.mxu0 0.0
    %686 = vmatpush1.msra.mxu0 %v531
    %687 = vmatprep.subr.mxu0 0.0
    %688 = vmatpush2.msra.mxu0 0.0
    %689 = vmatprep.subr.mxu0 0.0
    %690 = vmatpush2.msra.mxu0 0.0
    %691 = vmatprep.subr.mxu0 0.0
    %692 = vmatpush2.msra.mxu0 0.0
    %693 = vmatprep.subr.mxu0 0.0
    %694 = vmatpush2.msra.mxu0 0.0
    %695 = vmatprep.subr.mxu0 0.0
    %696 = vmatpush2.msra.mxu0 0.0
    %697 = vmatprep.subr.mxu0 0.0
    %698 = vmatpush2.msra.mxu0 0.0
    %699 = vmatprep.subr.mxu0 0.0
    %700 = vmatpush2.msra.mxu0 0.0
    %701 = vmatprep.subr.mxu0 0.0
    %702 = vmatpush2.msra.mxu0 0.0
    %703 = vmatprep.subr.mxu0 0.0
    %704 = vmatpush2.msra.mxu0 0.0
    %705 = vmatprep.subr.mxu0 0.0
    %706 = vmatpush2.msra.mxu0 0.0
    %707 = vmatprep.subr.mxu0 0.0
    %708 = vmatpush2.msra.mxu0 0.0
    %709 = vmatprep.subr.mxu0 0.0
    %710 = vmatpush2.msra.mxu0 0.0
    %711 = vmatprep.subr.mxu0 0.0
    %712 = vmatpush2.msra.mxu0 0.0
    %713 = vmatprep.subr.mxu0 0.0
    %714 = vmatpush2.msra.mxu0 0.0
    %715 = vmatprep.subr.mxu0 0.0
    %716 = vmatpush2.msra.mxu0 0.0
    %717 = vmatprep.subr.mxu0 0.0
    %718 = vmatpush2.msra.mxu0 0.0
    %719 = vmatprep.mubr.f32.mxu0 0.0
    %720 = vmatmul.mubr.f32.gmra.mxu0 %v650
    %v721 = vpop.f32.mrf.mxu0
    %v722 = vadd.f32 0.0, %v721
    %v723 = vpop.f32.mrf.mxu0
    %724 = vmatprep.mubr.f32.mxu0 0.0
    %725 = vmatmul.mubr.f32.gmra.mxu0 %v653
    %v726 = vpop.f32.mrf.mxu0
    %v727 = vadd.f32 0.0, %v726
    %v728 = vpop.f32.mrf.mxu0
    %729 = vdwg.mxu0
    %v730 = vld [vmem:[%s9] sm:$0xff]
    %v731 = vld [vmem:[%s9 + $0x8] sm:$0xff]
    %s732 = scalar_lea.vmem %s3, 32
    %v733 = vld [vmem:[%s732] sm:$0xff]
    %v734 = vld [vmem:[%s732 + $0x8] sm:$0xff]
    %v735 = vld [vmem:[%s732 + $0x10] sm:$0xff]
    %v736 = vld [vmem:[%s732 + $0x18] sm:$0xff]
    %s737 = scalar_lea.vmem %s4, 1
    %v738 = vld [vmem:[%s737] sm:$0x1]
    %v740 = vlaneseq
    %v741 = vshrl.u32 %v740, 7
    %v742 = vsub.s32 0, %v741
    %v743 = vrot.slane %v738, %v742
    %745 = vmatprep.subr.mxu0 0.0
    %746 = vmatpush1.msra.mxu0 0.0
    %747 = vmatprep.subr.mxu0 0.0
    %748 = vmatpush1.msra.mxu0 0.0
    %749 = vmatprep.subr.mxu0 0.0
    %750 = vmatpush1.msra.mxu0 0.0
    %751 = vmatprep.subr.mxu0 0.0
    %752 = vmatpush1.msra.mxu0 0.0
    %753 = vmatprep.subr.mxu0 0.0
    %754 = vmatpush1.msra.mxu0 0.0
    %755 = vmatprep.subr.mxu0 0.0
    %756 = vmatpush1.msra.mxu0 0.0
    %757 = vmatprep.subr.mxu0 0.0
    %758 = vmatpush1.msra.mxu0 0.0
    %759 = vmatprep.subr.mxu0 0.0
    %760 = vmatpush1.msra.mxu0 0.0
    %761 = vmatprep.subr.mxu0 0.0
    %762 = vmatpush1.msra.mxu0 0.0
    %763 = vmatprep.subr.mxu0 0.0
    %764 = vmatpush1.msra.mxu0 0.0
    %765 = vmatprep.subr.mxu0 0.0
    %766 = vmatpush1.msra.mxu0 0.0
    %767 = vmatprep.subr.mxu0 0.0
    %768 = vmatpush1.msra.mxu0 0.0
    %769 = vmatprep.subr.mxu0 0.0
    %770 = vmatpush1.msra.mxu0 %v736
    %771 = vmatprep.subr.mxu0 0.0
    %772 = vmatpush1.msra.mxu0 %v735
    %773 = vmatprep.subr.mxu0 0.0
    %774 = vmatpush1.msra.mxu0 %v734
    %775 = vmatprep.subr.mxu0 0.0
    %776 = vmatpush1.msra.mxu0 %v733
    %777 = vmatprep.subr.mxu0 0.0
    %778 = vmatpush2.msra.mxu0 0.0
    %779 = vmatprep.subr.mxu0 0.0
    %780 = vmatpush2.msra.mxu0 0.0
    %781 = vmatprep.subr.mxu0 0.0
    %782 = vmatpush2.msra.mxu0 0.0
    %783 = vmatprep.subr.mxu0 0.0
    %784 = vmatpush2.msra.mxu0 0.0
    %785 = vmatprep.subr.mxu0 0.0
    %786 = vmatpush2.msra.mxu0 0.0
    %787 = vmatprep.subr.mxu0 0.0
    %788 = vmatpush2.msra.mxu0 0.0
    %789 = vmatprep.subr.mxu0 0.0
    %790 = vmatpush2.msra.mxu0 0.0
    %791 = vmatprep.subr.mxu0 0.0
    %792 = vmatpush2.msra.mxu0 0.0
    %793 = vmatprep.subr.mxu0 0.0
    %794 = vmatpush2.msra.mxu0 0.0
    %795 = vmatprep.subr.mxu0 0.0
    %796 = vmatpush2.msra.mxu0 0.0
    %797 = vmatprep.subr.mxu0 0.0
    %798 = vmatpush2.msra.mxu0 0.0
    %799 = vmatprep.subr.mxu0 0.0
    %800 = vmatpush2.msra.mxu0 0.0
    %801 = vmatprep.subr.mxu0 0.0
    %802 = vmatpush2.msra.mxu0 0.0
    %803 = vmatprep.subr.mxu0 0.0
    %804 = vmatpush2.msra.mxu0 0.0
    %805 = vmatprep.subr.mxu0 0.0
    %806 = vmatpush2.msra.mxu0 0.0
    %807 = vmatprep.subr.mxu0 0.0
    %808 = vmatpush2.msra.mxu0 0.0
    %809 = vmatprep.mubr.f32.mxu0 0.0
    %810 = vmatmul.mubr.f32.gmra.mxu0 %v287
    %v811 = vpop.f32.mrf.mxu0
    %v812 = vadd.f32 %v743, %v811
    %v813 = vpop.f32.mrf.mxu0
    %814 = vmatprep.mubr.f32.mxu0 0.0
    %815 = vmatmul.mubr.f32.gmra.mxu0 %v290
    %v816 = vpop.f32.mrf.mxu0
    %v817 = vadd.f32 %v743, %v816
    %v818 = vpop.f32.mrf.mxu0
    %819 = vdwg.mxu0
    %s820 = scalar_lea.vmem %s5, 32
    %v821 = vld [vmem:[%s820] sm:$0xff]
    %v822 = vld [vmem:[%s820 + $0x8] sm:$0xff]
    %v823 = vld [vmem:[%s820 + $0x10] sm:$0xff]
    %v824 = vld [vmem:[%s820 + $0x18] sm:$0xff]
    %s825 = scalar_lea.vmem %s6, 1
    %v826 = vld [vmem:[%s825] sm:$0x1]
    %v828 = vlaneseq
    %v829 = vshrl.u32 %v828, 7
    %v830 = vsub.s32 0, %v829
    %v831 = vrot.slane %v826, %v830
    %833 = vmatprep.subr.mxu0 0.0
    %834 = vmatpush1.msra.mxu0 0.0
    %835 = vmatprep.subr.mxu0 0.0
    %836 = vmatpush1.msra.mxu0 0.0
    %837 = vmatprep.subr.mxu0 0.0
    %838 = vmatpush1.msra.mxu0 0.0
    %839 = vmatprep.subr.mxu0 0.0
    %840 = vmatpush1.msra.mxu0 0.0
    %841 = vmatprep.subr.mxu0 0.0
    %842 = vmatpush1.msra.mxu0 0.0
    %843 = vmatprep.subr.mxu0 0.0
    %844 = vmatpush1.msra.mxu0 0.0
    %845 = vmatprep.subr.mxu0 0.0
    %846 = vmatpush1.msra.mxu0 0.0
    %847 = vmatprep.subr.mxu0 0.0
    %848 = vmatpush1.msra.mxu0 0.0
    %849 = vmatprep.subr.mxu0 0.0
    %850 = vmatpush1.msra.mxu0 0.0
    %851 = vmatprep.subr.mxu0 0.0
    %852 = vmatpush1.msra.mxu0 0.0
    %853 = vmatprep.subr.mxu0 0.0
    %854 = vmatpush1.msra.mxu0 0.0
    %855 = vmatprep.subr.mxu0 0.0
    %856 = vmatpush1.msra.mxu0 0.0
    %857 = vmatprep.subr.mxu0 0.0
    %858 = vmatpush1.msra.mxu0 %v824
    %859 = vmatprep.subr.mxu0 0.0
    %860 = vmatpush1.msra.mxu0 %v823
    %861 = vmatprep.subr.mxu0 0.0
    %862 = vmatpush1.msra.mxu0 %v822
    %863 = vmatprep.subr.mxu0 0.0
    %864 = vmatpush1.msra.mxu0 %v821
    %865 = vmatprep.subr.mxu0 0.0
    %866 = vmatpush2.msra.mxu0 0.0
    %867 = vmatprep.subr.mxu0 0.0
    %868 = vmatpush2.msra.mxu0 0.0
    %869 = vmatprep.subr.mxu0 0.0
    %870 = vmatpush2.msra.mxu0 0.0
    %871 = vmatprep.subr.mxu0 0.0
    %872 = vmatpush2.msra.mxu0 0.0
    %873 = vmatprep.subr.mxu0 0.0
    %874 = vmatpush2.msra.mxu0 0.0
    %875 = vmatprep.subr.mxu0 0.0
    %876 = vmatpush2.msra.mxu0 0.0
    %877 = vmatprep.subr.mxu0 0.0
    %878 = vmatpush2.msra.mxu0 0.0
    %879 = vmatprep.subr.mxu0 0.0
    %880 = vmatpush2.msra.mxu0 0.0
    %881 = vmatprep.subr.mxu0 0.0
    %882 = vmatpush2.msra.mxu0 0.0
    %883 = vmatprep.subr.mxu0 0.0
    %884 = vmatpush2.msra.mxu0 0.0
    %885 = vmatprep.subr.mxu0 0.0
    %886 = vmatpush2.msra.mxu0 0.0
    %887 = vmatprep.subr.mxu0 0.0
    %888 = vmatpush2.msra.mxu0 0.0
    %889 = vmatprep.subr.mxu0 0.0
    %890 = vmatpush2.msra.mxu0 0.0
    %891 = vmatprep.subr.mxu0 0.0
    %892 = vmatpush2.msra.mxu0 0.0
    %893 = vmatprep.subr.mxu0 0.0
    %894 = vmatpush2.msra.mxu0 0.0
    %895 = vmatprep.subr.mxu0 0.0
    %896 = vmatpush2.msra.mxu0 0.0
    %897 = vmatprep.mubr.f32.mxu0 0.0
    %898 = vmatmul.mubr.f32.gmra.mxu0 %v287
    %v899 = vpop.f32.mrf.mxu0
    %v900 = vadd.f32 %v831, %v899
    %v901 = vpop.f32.mrf.mxu0
    %902 = vmatprep.mubr.f32.mxu0 0.0
    %903 = vmatmul.mubr.f32.gmra.mxu0 %v290
    %v904 = vpop.f32.mrf.mxu0
    %v905 = vadd.f32 %v831, %v904
    %v906 = vpop.f32.mrf.mxu0
    %907 = vdwg.mxu0
    %s908 = scalar_lea.vmem %s7, 32
    %v909 = vld [vmem:[%s908] sm:$0xff]
    %v910 = vld [vmem:[%s908 + $0x8] sm:$0xff]
    %v911 = vld [vmem:[%s908 + $0x10] sm:$0xff]
    %v912 = vld [vmem:[%s908 + $0x18] sm:$0xff]
    %s913 = scalar_lea.vmem %s8, 1
    %v914 = vld [vmem:[%s913] sm:$0x1]
    %v916 = vlaneseq
    %v917 = vshrl.u32 %v916, 7
    %v918 = vsub.s32 0, %v917
    %v919 = vrot.slane %v914, %v918
    %921 = vmatprep.subr.mxu0 0.0
    %922 = vmatpush1.msra.mxu0 0.0
    %923 = vmatprep.subr.mxu0 0.0
    %924 = vmatpush1.msra.mxu0 0.0
    %925 = vmatprep.subr.mxu0 0.0
    %926 = vmatpush1.msra.mxu0 0.0
    %927 = vmatprep.subr.mxu0 0.0
    %928 = vmatpush1.msra.mxu0 0.0
    %929 = vmatprep.subr.mxu0 0.0
    %930 = vmatpush1.msra.mxu0 0.0
    %931 = vmatprep.subr.mxu0 0.0
    %932 = vmatpush1.msra.mxu0 0.0
    %933 = vmatprep.subr.mxu0 0.0
    %934 = vmatpush1.msra.mxu0 0.0
    %935 = vmatprep.subr.mxu0 0.0
    %936 = vmatpush1.msra.mxu0 0.0
    %937 = vmatprep.subr.mxu0 0.0
    %938 = vmatpush1.msra.mxu0 0.0
    %939 = vmatprep.subr.mxu0 0.0
    %940 = vmatpush1.msra.mxu0 0.0
    %941 = vmatprep.subr.mxu0 0.0
    %942 = vmatpush1.msra.mxu0 0.0
    %943 = vmatprep.subr.mxu0 0.0
    %944 = vmatpush1.msra.mxu0 0.0
    %945 = vmatprep.subr.mxu0 0.0
    %946 = vmatpush1.msra.mxu0 %v912
    %947 = vmatprep.subr.mxu0 0.0
    %948 = vmatpush1.msra.mxu0 %v911
    %949 = vmatprep.subr.mxu0 0.0
    %950 = vmatpush1.msra.mxu0 %v910
    %951 = vmatprep.subr.mxu0 0.0
    %952 = vmatpush1.msra.mxu0 %v909
    %953 = vmatprep.subr.mxu0 0.0
    %954 = vmatpush2.msra.mxu0 0.0
    %955 = vmatprep.subr.mxu0 0.0
    %956 = vmatpush2.msra.mxu0 0.0
    %957 = vmatprep.subr.mxu0 0.0
    %958 = vmatpush2.msra.mxu0 0.0
    %959 = vmatprep.subr.mxu0 0.0
    %960 = vmatpush2.msra.mxu0 0.0
    %961 = vmatprep.subr.mxu0 0.0
    %962 = vmatpush2.msra.mxu0 0.0
    %963 = vmatprep.subr.mxu0 0.0
    %964 = vmatpush2.msra.mxu0 0.0
    %965 = vmatprep.subr.mxu0 0.0
    %966 = vmatpush2.msra.mxu0 0.0
    %967 = vmatprep.subr.mxu0 0.0
    %968 = vmatpush2.msra.mxu0 0.0
    %969 = vmatprep.subr.mxu0 0.0
    %970 = vmatpush2.msra.mxu0 0.0
    %971 = vmatprep.subr.mxu0 0.0
    %972 = vmatpush2.msra.mxu0 0.0
    %973 = vmatprep.subr.mxu0 0.0
    %974 = vmatpush2.msra.mxu0 0.0
    %975 = vmatprep.subr.mxu0 0.0
    %976 = vmatpush2.msra.mxu0 0.0
    %977 = vmatprep.subr.mxu0 0.0
    %978 = vmatpush2.msra.mxu0 0.0
    %979 = vmatprep.subr.mxu0 0.0
    %980 = vmatpush2.msra.mxu0 0.0
    %981 = vmatprep.subr.mxu0 0.0
    %982 = vmatpush2.msra.mxu0 0.0
    %983 = vmatprep.subr.mxu0 0.0
    %984 = vmatpush2.msra.mxu0 0.0
    %985 = vmatprep.mubr.f32.mxu0 0.0
    %986 = vmatmul.mubr.f32.gmra.mxu0 %v287
    %v987 = vpop.f32.mrf.mxu0
    %v988 = vadd.f32 %v919, %v987
    %v989 = vpop.f32.mrf.mxu0
    %990 = vmatprep.mubr.f32.mxu0 0.0
    %991 = vmatmul.mubr.f32.gmra.mxu0 %v290
    %v992 = vpop.f32.mrf.mxu0
    %v993 = vadd.f32 %v919, %v992
    %v994 = vpop.f32.mrf.mxu0
    %995 = vdwg.mxu0
    %v997 = vsel %vm539, %v812, 0
    %v1000 = vsel %vm539, %v817, 0
    %v1003 = vsel %vm539, %v900, 0
    %v1006 = vsel %vm539, %v905, 0
    %1008 = vmatprep.subr.mxu0 0.0
    %1009 = vmatpush1.xpose.msra.mxu0 0.0
    %1010 = vmatprep.subr.mxu0 0.0
    %1011 = vmatpush1.xpose.msra.mxu0 0.0
    %1012 = vmatprep.subr.mxu0 0.0
    %1013 = vmatpush1.xpose.msra.mxu0 0.0
    %1014 = vmatprep.subr.mxu0 0.0
    %1015 = vmatpush1.xpose.msra.mxu0 0.0
    %1016 = vmatprep.subr.mxu0 0.0
    %1017 = vmatpush1.xpose.msra.mxu0 0.0
    %1018 = vmatprep.subr.mxu0 0.0
    %1019 = vmatpush1.xpose.msra.mxu0 0.0
    %1020 = vmatprep.subr.mxu0 0.0
    %1021 = vmatpush1.xpose.msra.mxu0 0.0
    %1022 = vmatprep.subr.mxu0 0.0
    %1023 = vmatpush1.xpose.msra.mxu0 0.0
    %1024 = vmatprep.subr.mxu0 0.0
    %1025 = vmatpush1.xpose.msra.mxu0 0.0
    %1026 = vmatprep.subr.mxu0 0.0
    %1027 = vmatpush1.xpose.msra.mxu0 0.0
    %1028 = vmatprep.subr.mxu0 0.0
    %1029 = vmatpush1.xpose.msra.mxu0 0.0
    %1030 = vmatprep.subr.mxu0 0.0
    %1031 = vmatpush1.xpose.msra.mxu0 0.0
    %1032 = vmatprep.subr.mxu0 0.0
    %1033 = vmatpush1.xpose.msra.mxu0 0.0
    %1034 = vmatprep.subr.mxu0 0.0
    %1035 = vmatpush1.xpose.msra.mxu0 0.0
    %1036 = vmatprep.subr.mxu0 0.0
    %1037 = vmatpush1.xpose.msra.mxu0 %v1006
    %1038 = vmatprep.subr.mxu0 0.0
    %1039 = vmatpush1.xpose.msra.mxu0 %v1003
    %1040 = vmatprep.subr.mxu0 0.0
    %1041 = vmatpush2.xpose.msra.mxu0 0.0
    %1042 = vmatprep.subr.mxu0 0.0
    %1043 = vmatpush2.xpose.msra.mxu0 0.0
    %1044 = vmatprep.subr.mxu0 0.0
    %1045 = vmatpush2.xpose.msra.mxu0 0.0
    %1046 = vmatprep.subr.mxu0 0.0
    %1047 = vmatpush2.xpose.msra.mxu0 0.0
    %1048 = vmatprep.subr.mxu0 0.0
    %1049 = vmatpush2.xpose.msra.mxu0 0.0
    %1050 = vmatprep.subr.mxu0 0.0
    %1051 = vmatpush2.xpose.msra.mxu0 0.0
    %1052 = vmatprep.subr.mxu0 0.0
    %1053 = vmatpush2.xpose.msra.mxu0 0.0
    %1054 = vmatprep.subr.mxu0 0.0
    %1055 = vmatpush2.xpose.msra.mxu0 0.0
    %1056 = vmatprep.subr.mxu0 0.0
    %1057 = vmatpush2.xpose.msra.mxu0 0.0
    %1058 = vmatprep.subr.mxu0 0.0
    %1059 = vmatpush2.xpose.msra.mxu0 0.0
    %1060 = vmatprep.subr.mxu0 0.0
    %1061 = vmatpush2.xpose.msra.mxu0 0.0
    %1062 = vmatprep.subr.mxu0 0.0
    %1063 = vmatpush2.xpose.msra.mxu0 0.0
    %1064 = vmatprep.subr.mxu0 0.0
    %1065 = vmatpush2.xpose.msra.mxu0 0.0
    %1066 = vmatprep.subr.mxu0 0.0
    %1067 = vmatpush2.xpose.msra.mxu0 0.0
    %1068 = vmatprep.subr.mxu0 0.0
    %1069 = vmatpush2.xpose.msra.mxu0 0.0
    %1070 = vmatprep.subr.mxu0 0.0
    %1071 = vmatpush2.xpose.msra.mxu0 0.0
    %1072 = vmatprep.mubr.f32.mxu0 0.0
    %1073 = vmatmul.mubr.f32.gmra.mxu0 %v997
    %v1074 = vpop.f32.mrf.mxu0
    %v1075 = vadd.f32 %v227, %v1074
    %v1076 = vpop.f32.mrf.mxu0
    %1077 = vmatprep.mubr.f32.mxu0 0.0
    %1078 = vmatmul.mubr.f32.gmra.mxu0 %v1000
    %v1079 = vpop.f32.mrf.mxu0
    %v1080 = vadd.f32 %v228, %v1079
    %v1081 = vpop.f32.mrf.mxu0
    %1082 = vdwg.mxu0
    %v1083 = vsel %vm539, %v1075, -inf
    %1084 = vmax.xlane.f32.xlu0 %v1083
    %v1085 = vpop.xlane.xlu0 %1084
    %v1086 = vsel %vm539, %v1080, -inf
    %1087 = vmax.xlane.f32.xlu0 %v1086
    %v1088 = vpop.xlane.xlu0 %1087
    %v1089 = vsub.f32 %v1075, %v1085
    %v1090 = vsub.f32 %v1080, %v1088
    %v1091 = vmul.f32 %v1089, 1.442695
    %v1092 = vpow.pop %v1091
    %v1093 = vmul.f32 %v1090, 1.442695
    %v1094 = vpow.pop %v1093
    %v1095 = vsel %vm539, %v1092, 0.0
    %1096 = vadd.xlane.f32.xlu0 %v1095
    %v1097 = vpop.xlane.xlu0 %1096
    %v1098 = vsel %vm539, %v1094, 0.0
    %1099 = vadd.xlane.f32.xlu0 %v1098
    %v1100 = vpop.xlane.xlu0 %1099
    %v1101 = vrcp.pop %v1097
    %v1102 = vmul.f32 %v1092, %v1101
    %v1103 = vrcp.pop %v1100
    %v1104 = vmul.f32 %v1094, %v1103
    %v1106 = vsel %vm539, %v1102, 0
    %v1109 = vsel %vm539, %v1104, 0
    %1111 = vmatprep.subr.mxu0 0.0
    %1112 = vmatpush1.msra.mxu0 0.0
    %1113 = vmatprep.subr.mxu0 0.0
    %1114 = vmatpush1.msra.mxu0 0.0
    %1115 = vmatprep.subr.mxu0 0.0
    %1116 = vmatpush1.msra.mxu0 0.0
    %1117 = vmatprep.subr.mxu0 0.0
    %1118 = vmatpush1.msra.mxu0 0.0
    %1119 = vmatprep.subr.mxu0 0.0
    %1120 = vmatpush1.msra.mxu0 0.0
    %1121 = vmatprep.subr.mxu0 0.0
    %1122 = vmatpush1.msra.mxu0 0.0
    %1123 = vmatprep.subr.mxu0 0.0
    %1124 = vmatpush1.msra.mxu0 0.0
    %1125 = vmatprep.subr.mxu0 0.0
    %1126 = vmatpush1.msra.mxu0 0.0
    %1127 = vmatprep.subr.mxu0 0.0
    %1128 = vmatpush1.msra.mxu0 0.0
    %1129 = vmatprep.subr.mxu0 0.0
    %1130 = vmatpush1.msra.mxu0 0.0
    %1131 = vmatprep.subr.mxu0 0.0
    %1132 = vmatpush1.msra.mxu0 0.0
    %1133 = vmatprep.subr.mxu0 0.0
    %1134 = vmatpush1.msra.mxu0 0.0
    %1135 = vmatprep.subr.mxu0 0.0
    %1136 = vmatpush1.msra.mxu0 0.0
    %1137 = vmatprep.subr.mxu0 0.0
    %1138 = vmatpush1.msra.mxu0 0.0
    %1139 = vmatprep.subr.mxu0 0.0
    %1140 = vmatpush1.msra.mxu0 %v993
    %1141 = vmatprep.subr.mxu0 0.0
    %1142 = vmatpush1.msra.mxu0 %v988
    %1143 = vmatprep.subr.mxu0 0.0
    %1144 = vmatpush2.msra.mxu0 0.0
    %1145 = vmatprep.subr.mxu0 0.0
    %1146 = vmatpush2.msra.mxu0 0.0
    %1147 = vmatprep.subr.mxu0 0.0
    %1148 = vmatpush2.msra.mxu0 0.0
    %1149 = vmatprep.subr.mxu0 0.0
    %1150 = vmatpush2.msra.mxu0 0.0
    %1151 = vmatprep.subr.mxu0 0.0
    %1152 = vmatpush2.msra.mxu0 0.0
    %1153 = vmatprep.subr.mxu0 0.0
    %1154 = vmatpush2.msra.mxu0 0.0
    %1155 = vmatprep.subr.mxu0 0.0
    %1156 = vmatpush2.msra.mxu0 0.0
    %1157 = vmatprep.subr.mxu0 0.0
    %1158 = vmatpush2.msra.mxu0 0.0
    %1159 = vmatprep.subr.mxu0 0.0
    %1160 = vmatpush2.msra.mxu0 0.0
    %1161 = vmatprep.subr.mxu0 0.0
    %1162 = vmatpush2.msra.mxu0 0.0
    %1163 = vmatprep.subr.mxu0 0.0
    %1164 = vmatpush2.msra.mxu0 0.0
    %1165 = vmatprep.subr.mxu0 0.0
    %1166 = vmatpush2.msra.mxu0 0.0
    %1167 = vmatprep.subr.mxu0 0.0
    %1168 = vmatpush2.msra.mxu0 0.0
    %1169 = vmatprep.subr.mxu0 0.0
    %1170 = vmatpush2.msra.mxu0 0.0
    %1171 = vmatprep.subr.mxu0 0.0
    %1172 = vmatpush2.msra.mxu0 0.0
    %1173 = vmatprep.subr.mxu0 0.0
    %1174 = vmatpush2.msra.mxu0 0.0
    %1175 = vmatprep.mubr.f32.mxu0 0.0
    %1176 = vmatmul.mubr.f32.gmra.mxu0 %v1106
    %v1177 = vpop.f32.mrf.mxu0
    %v1178 = vadd.f32 0.0, %v1177
    %v1179 = vpop.f32.mrf.mxu0
    %1180 = vmatprep.mubr.f32.mxu0 0.0
    %1181 = vmatmul.mubr.f32.gmra.mxu0 %v1109
    %v1182 = vpop.f32.mrf.mxu0
    %v1183 = vadd.f32 0.0, %v1182
    %v1184 = vpop.f32.mrf.mxu0
    %1185 = vdwg.mxu0
    %s1186 = scalar_lea.vmem %s9, 16
    %v1187 = vld [vmem:[%s1186] sm:$0xff]
    %v1188 = vld [vmem:[%s1186 + $0x8] sm:$0xff]
    %v1190 = vsel %vm539, %v1178, 0
    %v1193 = vsel %vm539, %v1183, 0
    %1195 = vmatprep.subr.mxu0 0.0
    %1196 = vmatpush1.msra.mxu0 0.0
    %1197 = vmatprep.subr.mxu0 0.0
    %1198 = vmatpush1.msra.mxu0 0.0
    %1199 = vmatprep.subr.mxu0 0.0
    %1200 = vmatpush1.msra.mxu0 0.0
    %1201 = vmatprep.subr.mxu0 0.0
    %1202 = vmatpush1.msra.mxu0 0.0
    %1203 = vmatprep.subr.mxu0 0.0
    %1204 = vmatpush1.msra.mxu0 0.0
    %1205 = vmatprep.subr.mxu0 0.0
    %1206 = vmatpush1.msra.mxu0 0.0
    %1207 = vmatprep.subr.mxu0 0.0
    %1208 = vmatpush1.msra.mxu0 0.0
    %1209 = vmatprep.subr.mxu0 0.0
    %1210 = vmatpush1.msra.mxu0 0.0
    %1211 = vmatprep.subr.mxu0 0.0
    %1212 = vmatpush1.msra.mxu0 0.0
    %1213 = vmatprep.subr.mxu0 0.0
    %1214 = vmatpush1.msra.mxu0 0.0
    %1215 = vmatprep.subr.mxu0 0.0
    %1216 = vmatpush1.msra.mxu0 0.0
    %1217 = vmatprep.subr.mxu0 0.0
    %1218 = vmatpush1.msra.mxu0 0.0
    %1219 = vmatprep.subr.mxu0 0.0
    %1220 = vmatpush1.msra.mxu0 0.0
    %1221 = vmatprep.subr.mxu0 0.0
    %1222 = vmatpush1.msra.mxu0 0.0
    %1223 = vmatprep.subr.mxu0 0.0
    %1224 = vmatpush1.msra.mxu0 %v1188
    %1225 = vmatprep.subr.mxu0 0.0
    %1226 = vmatpush1.msra.mxu0 %v1187
    %1227 = vmatprep.subr.mxu0 0.0
    %1228 = vmatpush2.msra.mxu0 0.0
    %1229 = vmatprep.subr.mxu0 0.0
    %1230 = vmatpush2.msra.mxu0 0.0
    %1231 = vmatprep.subr.mxu0 0.0
    %1232 = vmatpush2.msra.mxu0 0.0
    %1233 = vmatprep.subr.mxu0 0.0
    %1234 = vmatpush2.msra.mxu0 0.0
    %1235 = vmatprep.subr.mxu0 0.0
    %1236 = vmatpush2.msra.mxu0 0.0
    %1237 = vmatprep.subr.mxu0 0.0
    %1238 = vmatpush2.msra.mxu0 0.0
    %1239 = vmatprep.subr.mxu0 0.0
    %1240 = vmatpush2.msra.mxu0 0.0
    %1241 = vmatprep.subr.mxu0 0.0
    %1242 = vmatpush2.msra.mxu0 0.0
    %1243 = vmatprep.subr.mxu0 0.0
    %1244 = vmatpush2.msra.mxu0 0.0
    %1245 = vmatprep.subr.mxu0 0.0
    %1246 = vmatpush2.msra.mxu0 0.0
    %1247 = vmatprep.subr.mxu0 0.0
    %1248 = vmatpush2.msra.mxu0 0.0
    %1249 = vmatprep.subr.mxu0 0.0
    %1250 = vmatpush2.msra.mxu0 0.0
    %1251 = vmatprep.subr.mxu0 0.0
    %1252 = vmatpush2.msra.mxu0 0.0
    %1253 = vmatprep.subr.mxu0 0.0
    %1254 = vmatpush2.msra.mxu0 0.0
    %1255 = vmatprep.subr.mxu0 0.0
    %1256 = vmatpush2.msra.mxu0 0.0
    %1257 = vmatprep.subr.mxu0 0.0
    %1258 = vmatpush2.msra.mxu0 0.0
    %1259 = vmatprep.mubr.f32.mxu0 0.0
    %1260 = vmatmul.mubr.f32.gmra.mxu0 %v1190
    %v1261 = vpop.f32.mrf.mxu0
    %v1262 = vadd.f32 0.0, %v1261
    %v1263 = vpop.f32.mrf.mxu0
    %1264 = vmatprep.mubr.f32.mxu0 0.0
    %1265 = vmatmul.mubr.f32.gmra.mxu0 %v1193
    %v1266 = vpop.f32.mrf.mxu0
    %v1267 = vadd.f32 0.0, %v1266
    %v1268 = vpop.f32.mrf.mxu0
    %1269 = vdwg.mxu0
    %v1271 = vsel %vm539, %v722, 0
    %v1274 = vsel %vm539, %v727, 0
    %1276 = vmatprep.subr.mxu0 0.0
    %1277 = vmatpush1.msra.mxu0 0.0
    %1278 = vmatprep.subr.mxu0 0.0
    %1279 = vmatpush1.msra.mxu0 0.0
    %1280 = vmatprep.subr.mxu0 0.0
    %1281 = vmatpush1.msra.mxu0 0.0
    %1282 = vmatprep.subr.mxu0 0.0
    %1283 = vmatpush1.msra.mxu0 0.0
    %1284 = vmatprep.subr.mxu0 0.0
    %1285 = vmatpush1.msra.mxu0 0.0
    %1286 = vmatprep.subr.mxu0 0.0
    %1287 = vmatpush1.msra.mxu0 0.0
    %1288 = vmatprep.subr.mxu0 0.0
    %1289 = vmatpush1.msra.mxu0 0.0
    %1290 = vmatprep.subr.mxu0 0.0
    %1291 = vmatpush1.msra.mxu0 0.0
    %1292 = vmatprep.subr.mxu0 0.0
    %1293 = vmatpush1.msra.mxu0 0.0
    %1294 = vmatprep.subr.mxu0 0.0
    %1295 = vmatpush1.msra.mxu0 0.0
    %1296 = vmatprep.subr.mxu0 0.0
    %1297 = vmatpush1.msra.mxu0 0.0
    %1298 = vmatprep.subr.mxu0 0.0
    %1299 = vmatpush1.msra.mxu0 0.0
    %1300 = vmatprep.subr.mxu0 0.0
    %1301 = vmatpush1.msra.mxu0 0.0
    %1302 = vmatprep.subr.mxu0 0.0
    %1303 = vmatpush1.msra.mxu0 0.0
    %1304 = vmatprep.subr.mxu0 0.0
    %1305 = vmatpush1.msra.mxu0 %v731
    %1306 = vmatprep.subr.mxu0 0.0
    %1307 = vmatpush1.msra.mxu0 %v730
    %1308 = vmatprep.subr.mxu0 0.0
    %1309 = vmatpush2.msra.mxu0 0.0
    %1310 = vmatprep.subr.mxu0 0.0
    %1311 = vmatpush2.msra.mxu0 0.0
    %1312 = vmatprep.subr.mxu0 0.0
    %1313 = vmatpush2.msra.mxu0 0.0
    %1314 = vmatprep.subr.mxu0 0.0
    %1315 = vmatpush2.msra.mxu0 0.0
    %1316 = vmatprep.subr.mxu0 0.0
    %1317 = vmatpush2.msra.mxu0 0.0
    %1318 = vmatprep.subr.mxu0 0.0
    %1319 = vmatpush2.msra.mxu0 0.0
    %1320 = vmatprep.subr.mxu0 0.0
    %1321 = vmatpush2.msra.mxu0 0.0
    %1322 = vmatprep.subr.mxu0 0.0
    %1323 = vmatpush2.msra.mxu0 0.0
    %1324 = vmatprep.subr.mxu0 0.0
    %1325 = vmatpush2.msra.mxu0 0.0
    %1326 = vmatprep.subr.mxu0 0.0
    %1327 = vmatpush2.msra.mxu0 0.0
    %1328 = vmatprep.subr.mxu0 0.0
    %1329 = vmatpush2.msra.mxu0 0.0
    %1330 = vmatprep.subr.mxu0 0.0
    %1331 = vmatpush2.msra.mxu0 0.0
    %1332 = vmatprep.subr.mxu0 0.0
    %1333 = vmatpush2.msra.mxu0 0.0
    %1334 = vmatprep.subr.mxu0 0.0
    %1335 = vmatpush2.msra.mxu0 0.0
    %1336 = vmatprep.subr.mxu0 0.0
    %1337 = vmatpush2.msra.mxu0 0.0
    %1338 = vmatprep.subr.mxu0 0.0
    %1339 = vmatpush2.msra.mxu0 0.0
    %1340 = vmatprep.mubr.f32.mxu0 0.0
    %1341 = vmatmul.mubr.f32.gmra.mxu0 %v1271
    %v1342 = vpop.f32.mrf.mxu0
    %v1343 = vadd.f32 %v1262, %v1342
    %v1344 = vpop.f32.mrf.mxu0
    %1345 = vmatprep.mubr.f32.mxu0 0.0
    %1346 = vmatmul.mubr.f32.gmra.mxu0 %v1274
    %v1347 = vpop.f32.mrf.mxu0
    %v1348 = vadd.f32 %v1267, %v1347
    %v1349 = vpop.f32.mrf.mxu0
    %1350 = vdwg.mxu0
    %v1351 = vadd.f32 %v178, %v1343
    %v1352 = vadd.f32 %v183, %v1348
    %v1353 = vld [vmem:[%s10] sm:$0x1]
    %v1355 = vlaneseq
    %v1356 = vshrl.u32 %v1355, 7
    %v1357 = vsub.s32 0, %v1356
    %v1358 = vrot.slane %v1353, %v1357
    %v1360 = vadd.f32 %v1351, %v1358
    %v1361 = vadd.f32 %v1352, %v1358
    %v1362 = vld [vmem:[%s13] sm:$0x1]
    %v1363 = vld [vmem:[%s14] sm:$0x1]
    %v1364 = vsel %vm231, %v1360, 0.0
    %1365 = vadd.xlane.f32.xlu0 %v1364
    %v1366 = vpop.xlane.xlu0 %1365
    %v1367 = vsel %vm231, %v1361, 0.0
    %1368 = vadd.xlane.f32.xlu0 %v1367
    %v1369 = vpop.xlane.xlu0 %1368
    %v1370 = vmul.f32 %v1366, %v238
    %v1371 = vmul.f32 %v1369, %v238
    %v1372 = vsub.f32 %v1360, %v1370
    %v1373 = vsub.f32 %v1361, %v1371
    %v1374 = vmul.f32 %v1372, %v1372
    %v1375 = vmul.f32 %v1373, %v1373
    %v1376 = vsel %vm231, %v1374, 0.0
    %1377 = vadd.xlane.f32.xlu0 %v1376
    %v1378 = vpop.xlane.xlu0 %1377
    %v1379 = vsel %vm231, %v1375, 0.0
    %1380 = vadd.xlane.f32.xlu0 %v1379
    %v1381 = vpop.xlane.xlu0 %1380
    %v1382 = vmul.f32 %v1378, %v238
    %v1383 = vmul.f32 %v1381, %v238
    %v1384 = vadd.f32 %v1382, 1e-05
    %v1385 = vadd.f32 %v1383, 1e-05
    %v1386 = vrsqrt.pop %v1384
    %v1387 = vrsqrt.pop %v1385
    %v1388 = vmul.f32 %v1372, %v1386
    %v1389 = vmul.f32 %v1373, %v1387
    %v1391 = vlaneseq
    %v1392 = vshrl.u32 %v1391, 7
    %v1393 = vsub.s32 0, %v1392
    %v1394 = vrot.slane %v1362, %v1393
    %v1396 = vmul.f32 %v1388, %v1394
    %v1397 = vmul.f32 %v1389, %v1394
    %v1399 = vlaneseq
    %v1400 = vshrl.u32 %v1399, 7
    %v1401 = vsub.s32 0, %v1400
    %v1402 = vrot.slane %v1363, %v1401
    %v1404 = vadd.f32 %v1396, %v1402
    %v1405 = vadd.f32 %v1397, %v1402
    %v1406 = vld [vmem:[%s15] sm:$0xff]
    %v1407 = vld [vmem:[%s15 + $0x8] sm:$0xff]
    %v1408 = vld [vmem:[%s15 + $0x10] sm:$0xff]
    %v1409 = vld [vmem:[%s15 + $0x18] sm:$0xff]
    %v1410 = vld [vmem:[%s16] sm:$0x1]
    %v1412 = vlaneseq
    %v1413 = vshrl.u32 %v1412, 7
    %v1414 = vsub.s32 0, %v1413
    %v1415 = vrot.slane %v1410, %v1414
    %v1418 = vsel %vm231, %v1404, 0
    %v1421 = vsel %vm231, %v1405, 0
    %1423 = vmatprep.subr.mxu0 0.0
    %1424 = vmatpush1.msra.mxu0 0.0
    %1425 = vmatprep.subr.mxu0 0.0
    %1426 = vmatpush1.msra.mxu0 0.0
    %1427 = vmatprep.subr.mxu0 0.0
    %1428 = vmatpush1.msra.mxu0 0.0
    %1429 = vmatprep.subr.mxu0 0.0
    %1430 = vmatpush1.msra.mxu0 0.0
    %1431 = vmatprep.subr.mxu0 0.0
    %1432 = vmatpush1.msra.mxu0 0.0
    %1433 = vmatprep.subr.mxu0 0.0
    %1434 = vmatpush1.msra.mxu0 0.0
    %1435 = vmatprep.subr.mxu0 0.0
    %1436 = vmatpush1.msra.mxu0 0.0
    %1437 = vmatprep.subr.mxu0 0.0
    %1438 = vmatpush1.msra.mxu0 0.0
    %1439 = vmatprep.subr.mxu0 0.0
    %1440 = vmatpush1.msra.mxu0 0.0
    %1441 = vmatprep.subr.mxu0 0.0
    %1442 = vmatpush1.msra.mxu0 0.0
    %1443 = vmatprep.subr.mxu0 0.0
    %1444 = vmatpush1.msra.mxu0 0.0
    %1445 = vmatprep.subr.mxu0 0.0
    %1446 = vmatpush1.msra.mxu0 0.0
    %1447 = vmatprep.subr.mxu0 0.0
    %1448 = vmatpush1.msra.mxu0 %v1409
    %1449 = vmatprep.subr.mxu0 0.0
    %1450 = vmatpush1.msra.mxu0 %v1408
    %1451 = vmatprep.subr.mxu0 0.0
    %1452 = vmatpush1.msra.mxu0 %v1407
    %1453 = vmatprep.subr.mxu0 0.0
    %1454 = vmatpush1.msra.mxu0 %v1406
    %1455 = vmatprep.subr.mxu0 0.0
    %1456 = vmatpush2.msra.mxu0 0.0
    %1457 = vmatprep.subr.mxu0 0.0
    %1458 = vmatpush2.msra.mxu0 0.0
    %1459 = vmatprep.subr.mxu0 0.0
    %1460 = vmatpush2.msra.mxu0 0.0
    %1461 = vmatprep.subr.mxu0 0.0
    %1462 = vmatpush2.msra.mxu0 0.0
    %1463 = vmatprep.subr.mxu0 0.0
    %1464 = vmatpush2.msra.mxu0 0.0
    %1465 = vmatprep.subr.mxu0 0.0
    %1466 = vmatpush2.msra.mxu0 0.0
    %1467 = vmatprep.subr.mxu0 0.0
    %1468 = vmatpush2.msra.mxu0 0.0
    %1469 = vmatprep.subr.mxu0 0.0
    %1470 = vmatpush2.msra.mxu0 0.0
    %1471 = vmatprep.subr.mxu0 0.0
    %1472 = vmatpush2.msra.mxu0 0.0
    %1473 = vmatprep.subr.mxu0 0.0
    %1474 = vmatpush2.msra.mxu0 0.0
    %1475 = vmatprep.subr.mxu0 0.0
    %1476 = vmatpush2.msra.mxu0 0.0
    %1477 = vmatprep.subr.mxu0 0.0
    %1478 = vmatpush2.msra.mxu0 0.0
    %1479 = vmatprep.subr.mxu0 0.0
    %1480 = vmatpush2.msra.mxu0 0.0
    %1481 = vmatprep.subr.mxu0 0.0
    %1482 = vmatpush2.msra.mxu0 0.0
    %1483 = vmatprep.subr.mxu0 0.0
    %1484 = vmatpush2.msra.mxu0 0.0
    %1485 = vmatprep.subr.mxu0 0.0
    %1486 = vmatpush2.msra.mxu0 0.0
    %1487 = vmatprep.mubr.f32.mxu0 0.0
    %1488 = vmatmul.mubr.f32.gmra.mxu0 %v1418
    %v1489 = vpop.f32.mrf.mxu0
    %v1490 = vadd.f32 %v1415, %v1489
    %v1491 = vpop.f32.mrf.mxu0
    %1492 = vmatprep.mubr.f32.mxu0 0.0
    %1493 = vmatmul.mubr.f32.gmra.mxu0 %v1421
    %v1494 = vpop.f32.mrf.mxu0
    %v1495 = vadd.f32 %v1415, %v1494
    %v1496 = vpop.f32.mrf.mxu0
    %1497 = vdwg.mxu0
    %v1498 = vmul.f32 %v1490, 0.5
    %v1499 = vmul.f32 %v1495, 0.5
    %v1500 = vmul.f32 %v1490, 0.70710677
    %v1501 = vmul.f32 %v1495, 0.70710677
    %vm1502 = vcmp.ge.f32.partialorder %v1500, 0.0
    %vm1503 = vcmp.ge.f32.partialorder %v1501, 0.0
    %v1504 = vsel %vm1502, 1.0, -1.0
    %v1505 = vsel %vm1503, 1.0, -1.0
    %v1506 = vand.u32 2147483647, %v1500
    %v1507 = vand.u32 2147483647, %v1501
    %v1508 = vmul.f32 %v1506, 0.3275911
    %v1509 = vmul.f32 %v1507, 0.3275911
    %v1510 = vadd.f32 %v1508, 1.0
    %v1511 = vadd.f32 %v1509, 1.0
    %v1512 = vrcp.pop %v1510
    %v1513 = vmul.f32 1.0, %v1512
    %v1514 = vrcp.pop %v1511
    %v1515 = vmul.f32 1.0, %v1514
    %v1516 = vmul.f32 %v1513, 1.0614054
    %v1517 = vmul.f32 %v1515, 1.0614054
    %v1518 = vadd.f32 %v1516, -1.4531521
    %v1519 = vadd.f32 %v1517, -1.4531521
    %v1520 = vmul.f32 %v1518, %v1513
    %v1521 = vmul.f32 %v1519, %v1515
    %v1522 = vadd.f32 %v1520, 1.4214138
    %v1523 = vadd.f32 %v1521, 1.4214138
    %v1524 = vmul.f32 %v1522, %v1513
    %v1525 = vmul.f32 %v1523, %v1515
    %v1526 = vadd.f32 %v1524, -0.28449672
    %v1527 = vadd.f32 %v1525, -0.28449672
    %v1528 = vmul.f32 %v1526, %v1513
    %v1529 = vmul.f32 %v1527, %v1515
    %v1530 = vadd.f32 %v1528, 0.2548296
    %v1531 = vadd.f32 %v1529, 0.2548296
    %v1532 = vmul.f32 %v1530, %v1513
    %v1533 = vmul.f32 %v1531, %v1515
    %v1534 = vsub.f32 0.0, %v1506
    %v1535 = vsub.f32 0.0, %v1507
    %v1536 = vmul.f32 %v1534, %v1506
    %v1537 = vmul.f32 %v1535, %v1507
    %v1538 = vmul.f32 %v1536, 1.442695
    %v1539 = vpow.pop %v1538
    %v1540 = vmul.f32 %v1537, 1.442695
    %v1541 = vpow.pop %v1540
    %v1542 = vmul.f32 %v1532, %v1539
    %v1543 = vmul.f32 %v1533, %v1541
    %v1544 = vsub.f32 1.0, %v1542
    %v1545 = vsub.f32 1.0, %v1543
    %v1546 = vmul.f32 %v1504, %v1544
    %v1547 = vmul.f32 %v1505, %v1545
    %v1548 = vadd.f32 %v1546, 1.0
    %v1549 = vadd.f32 %v1547, 1.0
    %v1550 = vmul.f32 %v1498, %v1548
    %v1551 = vmul.f32 %v1499, %v1549
    %v1552 = vld [vmem:[%s17] sm:$0xff]
    %v1553 = vld [vmem:[%s17 + $0x8] sm:$0xff]
    %v1554 = vld [vmem:[%s17 + $0x10] sm:$0xff]
    %v1555 = vld [vmem:[%s17 + $0x18] sm:$0xff]
    %v1556 = vld [vmem:[%s17 + $0x20] sm:$0xff]
    %v1557 = vld [vmem:[%s17 + $0x28] sm:$0xff]
    %v1558 = vld [vmem:[%s17 + $0x30] sm:$0xff]
    %v1559 = vld [vmem:[%s17 + $0x38] sm:$0xff]
    %v1560 = vld [vmem:[%s18] sm:$0x1]
    %v1562 = vlaneseq
    %v1563 = vshrl.u32 %v1562, 7
    %v1564 = vsub.s32 0, %v1563
    %v1565 = vrot.slane %v1560, %v1564
    %vm1567 = vcmask 523264
    %v1569 = vsel %vm1567, %v1550, 0
    %v1572 = vsel %vm1567, %v1551, 0
    %1574 = vmatprep.subr.mxu0 0.0
    %1575 = vmatpush1.msra.mxu0 0.0
    %1576 = vmatprep.subr.mxu0 0.0
    %1577 = vmatpush1.msra.mxu0 0.0
    %1578 = vmatprep.subr.mxu0 0.0
    %1579 = vmatpush1.msra.mxu0 0.0
    %1580 = vmatprep.subr.mxu0 0.0
    %1581 = vmatpush1.msra.mxu0 0.0
    %1582 = vmatprep.subr.mxu0 0.0
    %1583 = vmatpush1.msra.mxu0 0.0
    %1584 = vmatprep.subr.mxu0 0.0
    %1585 = vmatpush1.msra.mxu0 0.0
    %1586 = vmatprep.subr.mxu0 0.0
    %1587 = vmatpush1.msra.mxu0 0.0
    %1588 = vmatprep.subr.mxu0 0.0
    %1589 = vmatpush1.msra.mxu0 0.0
    %1590 = vmatprep.subr.mxu0 0.0
    %1591 = vmatpush1.msra.mxu0 %v1559
    %1592 = vmatprep.subr.mxu0 0.0
    %1593 = vmatpush1.msra.mxu0 %v1558
    %1594 = vmatprep.subr.mxu0 0.0
    %1595 = vmatpush1.msra.mxu0 %v1557
    %1596 = vmatprep.subr.mxu0 0.0
    %1597 = vmatpush1.msra.mxu0 %v1556
    %1598 = vmatprep.subr.mxu0 0.0
    %1599 = vmatpush1.msra.mxu0 %v1555
    %1600 = vmatprep.subr.mxu0 0.0
    %1601 = vmatpush1.msra.mxu0 %v1554
    %1602 = vmatprep.subr.mxu0 0.0
    %1603 = vmatpush1.msra.mxu0 %v1553
    %1604 = vmatprep.subr.mxu0 0.0
    %1605 = vmatpush1.msra.mxu0 %v1552
    %1606 = vmatprep.subr.mxu0 0.0
    %1607 = vmatpush2.msra.mxu0 0.0
    %1608 = vmatprep.subr.mxu0 0.0
    %1609 = vmatpush2.msra.mxu0 0.0
    %1610 = vmatprep.subr.mxu0 0.0
    %1611 = vmatpush2.msra.mxu0 0.0
    %1612 = vmatprep.subr.mxu0 0.0
    %1613 = vmatpush2.msra.mxu0 0.0
    %1614 = vmatprep.subr.mxu0 0.0
    %1615 = vmatpush2.msra.mxu0 0.0
    %1616 = vmatprep.subr.mxu0 0.0
    %1617 = vmatpush2.msra.mxu0 0.0
    %1618 = vmatprep.subr.mxu0 0.0
    %1619 = vmatpush2.msra.mxu0 0.0
    %1620 = vmatprep.subr.mxu0 0.0
    %1621 = vmatpush2.msra.mxu0 0.0
    %1622 = vmatprep.subr.mxu0 0.0
    %1623 = vmatpush2.msra.mxu0 0.0
    %1624 = vmatprep.subr.mxu0 0.0
    %1625 = vmatpush2.msra.mxu0 0.0
    %1626 = vmatprep.subr.mxu0 0.0
    %1627 = vmatpush2.msra.mxu0 0.0
    %1628 = vmatprep.subr.mxu0 0.0
    %1629 = vmatpush2.msra.mxu0 0.0
    %1630 = vmatprep.subr.mxu0 0.0
    %1631 = vmatpush2.msra.mxu0 0.0
    %1632 = vmatprep.subr.mxu0 0.0
    %1633 = vmatpush2.msra.mxu0 0.0
    %1634 = vmatprep.subr.mxu0 0.0
    %1635 = vmatpush2.msra.mxu0 0.0
    %1636 = vmatprep.subr.mxu0 0.0
    %1637 = vmatpush2.msra.mxu0 0.0
    %1638 = vmatprep.mubr.f32.mxu0 0.0
    %1639 = vmatmul.mubr.f32.gmra.mxu0 %v1569
    %v1640 = vpop.f32.mrf.mxu0
    %v1641 = vadd.f32 %v1565, %v1640
    %v1642 = vpop.f32.mrf.mxu0
    %1643 = vmatprep.mubr.f32.mxu0 0.0
    %1644 = vmatmul.mubr.f32.gmra.mxu0 %v1572
    %v1645 = vpop.f32.mrf.mxu0
    %v1646 = vadd.f32 %v1565, %v1645
    %v1647 = vpop.f32.mrf.mxu0
    %1648 = vdwg.mxu0
    %v1649 = vadd.f32 %v1360, %v1641
    %v1650 = vadd.f32 %v1361, %v1646
    %s1651 = scalar_lea.vmem %s11, 1
    %v1652 = vld [vmem:[%s1651] sm:$0x1]
    %s1653 = scalar_lea.vmem %s12, 1
    %v1654 = vld [vmem:[%s1653] sm:$0x1]
    %v1655 = vsel %vm231, %v1649, 0.0
    %1656 = vadd.xlane.f32.xlu0 %v1655
    %v1657 = vpop.xlane.xlu0 %1656
    %v1658 = vsel %vm231, %v1650, 0.0
    %1659 = vadd.xlane.f32.xlu0 %v1658
    %v1660 = vpop.xlane.xlu0 %1659
    %v1661 = vmul.f32 %v1657, %v238
    %v1662 = vmul.f32 %v1660, %v238
    %v1663 = vsub.f32 %v1649, %v1661
    %v1664 = vsub.f32 %v1650, %v1662
    %v1665 = vmul.f32 %v1663, %v1663
    %v1666 = vmul.f32 %v1664, %v1664
    %v1667 = vsel %vm231, %v1665, 0.0
    %1668 = vadd.xlane.f32.xlu0 %v1667
    %v1669 = vpop.xlane.xlu0 %1668
    %v1670 = vsel %vm231, %v1666, 0.0
    %1671 = vadd.xlane.f32.xlu0 %v1670
    %v1672 = vpop.xlane.xlu0 %1671
    %v1673 = vmul.f32 %v1669, %v238
    %v1674 = vmul.f32 %v1672, %v238
    %v1675 = vadd.f32 %v1673, 1e-05
    %v1676 = vadd.f32 %v1674, 1e-05
    %v1677 = vrsqrt.pop %v1675
    %v1678 = vrsqrt.pop %v1676
    %v1679 = vmul.f32 %v1663, %v1677
    %v1680 = vmul.f32 %v1664, %v1678
    %v1682 = vlaneseq
    %v1683 = vshrl.u32 %v1682, 7
    %v1684 = vsub.s32 0, %v1683
    %v1685 = vrot.slane %v1652, %v1684
    %v1687 = vmul.f32 %v1679, %v1685
    %v1688 = vmul.f32 %v1680, %v1685
    %v1690 = vlaneseq
    %v1691 = vshrl.u32 %v1690, 7
    %v1692 = vsub.s32 0, %v1691
    %v1693 = vrot.slane %v1654, %v1692
    %v1695 = vadd.f32 %v1687, %v1693
    %v1696 = vadd.f32 %v1688, %v1693
    %s1697 = scalar_lea.vmem %s3, 64
    %v1698 = vld [vmem:[%s1697] sm:$0xff]
    %v1699 = vld [vmem:[%s1697 + $0x8] sm:$0xff]
    %v1700 = vld [vmem:[%s1697 + $0x10] sm:$0xff]
    %v1701 = vld [vmem:[%s1697 + $0x18] sm:$0xff]
    %s1702 = scalar_lea.vmem %s4, 2
    %v1703 = vld [vmem:[%s1702] sm:$0x1]
    %v1705 = vlaneseq
    %v1706 = vshrl.u32 %v1705, 7
    %v1707 = vsub.s32 0, %v1706
    %v1708 = vrot.slane %v1703, %v1707
    %v1711 = vsel %vm231, %v1695, 0
    %v1714 = vsel %vm231, %v1696, 0
    %1716 = vmatprep.subr.mxu0 0.0
    %1717 = vmatpush1.msra.mxu0 0.0
    %1718 = vmatprep.subr.mxu0 0.0
    %1719 = vmatpush1.msra.mxu0 0.0
    %1720 = vmatprep.subr.mxu0 0.0
    %1721 = vmatpush1.msra.mxu0 0.0
    %1722 = vmatprep.subr.mxu0 0.0
    %1723 = vmatpush1.msra.mxu0 0.0
    %1724 = vmatprep.subr.mxu0 0.0
    %1725 = vmatpush1.msra.mxu0 0.0
    %1726 = vmatprep.subr.mxu0 0.0
    %1727 = vmatpush1.msra.mxu0 0.0
    %1728 = vmatprep.subr.mxu0 0.0
    %1729 = vmatpush1.msra.mxu0 0.0
    %1730 = vmatprep.subr.mxu0 0.0
    %1731 = vmatpush1.msra.mxu0 0.0
    %1732 = vmatprep.subr.mxu0 0.0
    %1733 = vmatpush1.msra.mxu0 0.0
    %1734 = vmatprep.subr.mxu0 0.0
    %1735 = vmatpush1.msra.mxu0 0.0
    %1736 = vmatprep.subr.mxu0 0.0
    %1737 = vmatpush1.msra.mxu0 0.0
    %1738 = vmatprep.subr.mxu0 0.0
    %1739 = vmatpush1.msra.mxu0 0.0
    %1740 = vmatprep.subr.mxu0 0.0
    %1741 = vmatpush1.msra.mxu0 %v1701
    %1742 = vmatprep.subr.mxu0 0.0
    %1743 = vmatpush1.msra.mxu0 %v1700
    %1744 = vmatprep.subr.mxu0 0.0
    %1745 = vmatpush1.msra.mxu0 %v1699
    %1746 = vmatprep.subr.mxu0 0.0
    %1747 = vmatpush1.msra.mxu0 %v1698
    %1748 = vmatprep.subr.mxu0 0.0
    %1749 = vmatpush2.msra.mxu0 0.0
    %1750 = vmatprep.subr.mxu0 0.0
    %1751 = vmatpush2.msra.mxu0 0.0
    %1752 = vmatprep.subr.mxu0 0.0
    %1753 = vmatpush2.msra.mxu0 0.0
    %1754 = vmatprep.subr.mxu0 0.0
    %1755 = vmatpush2.msra.mxu0 0.0
    %1756 = vmatprep.subr.mxu0 0.0
    %1757 = vmatpush2.msra.mxu0 0.0
    %1758 = vmatprep.subr.mxu0 0.0
    %1759 = vmatpush2.msra.mxu0 0.0
    %1760 = vmatprep.subr.mxu0 0.0
    %1761 = vmatpush2.msra.mxu0 0.0
    %1762 = vmatprep.subr.mxu0 0.0
    %1763 = vmatpush2.msra.mxu0 0.0
    %1764 = vmatprep.subr.mxu0 0.0
    %1765 = vmatpush2.msra.mxu0 0.0
    %1766 = vmatprep.subr.mxu0 0.0
    %1767 = vmatpush2.msra.mxu0 0.0
    %1768 = vmatprep.subr.mxu0 0.0
    %1769 = vmatpush2.msra.mxu0 0.0
    %1770 = vmatprep.subr.mxu0 0.0
    %1771 = vmatpush2.msra.mxu0 0.0
    %1772 = vmatprep.subr.mxu0 0.0
    %1773 = vmatpush2.msra.mxu0 0.0
    %1774 = vmatprep.subr.mxu0 0.0
    %1775 = vmatpush2.msra.mxu0 0.0
    %1776 = vmatprep.subr.mxu0 0.0
    %1777 = vmatpush2.msra.mxu0 0.0
    %1778 = vmatprep.subr.mxu0 0.0
    %1779 = vmatpush2.msra.mxu0 0.0
    %1780 = vmatprep.mubr.f32.mxu0 0.0
    %1781 = vmatmul.mubr.f32.gmra.mxu0 %v1711
    %v1782 = vpop.f32.mrf.mxu0
    %v1783 = vadd.f32 %v1708, %v1782
    %v1784 = vpop.f32.mrf.mxu0
    %1785 = vmatprep.mubr.f32.mxu0 0.0
    %1786 = vmatmul.mubr.f32.gmra.mxu0 %v1714
    %v1787 = vpop.f32.mrf.mxu0
    %v1788 = vadd.f32 %v1708, %v1787
    %v1789 = vpop.f32.mrf.mxu0
    %1790 = vdwg.mxu0
    %s1791 = scalar_lea.vmem %s5, 64
    %v1792 = vld [vmem:[%s1791] sm:$0xff]
    %v1793 = vld [vmem:[%s1791 + $0x8] sm:$0xff]
    %v1794 = vld [vmem:[%s1791 + $0x10] sm:$0xff]
    %v1795 = vld [vmem:[%s1791 + $0x18] sm:$0xff]
    %s1796 = scalar_lea.vmem %s6, 2
    %v1797 = vld [vmem:[%s1796] sm:$0x1]
    %v1799 = vlaneseq
    %v1800 = vshrl.u32 %v1799, 7
    %v1801 = vsub.s32 0, %v1800
    %v1802 = vrot.slane %v1797, %v1801
    %1804 = vmatprep.subr.mxu0 0.0
    %1805 = vmatpush1.msra.mxu0 0.0
    %1806 = vmatprep.subr.mxu0 0.0
    %1807 = vmatpush1.msra.mxu0 0.0
    %1808 = vmatprep.subr.mxu0 0.0
    %1809 = vmatpush1.msra.mxu0 0.0
    %1810 = vmatprep.subr.mxu0 0.0
    %1811 = vmatpush1.msra.mxu0 0.0
    %1812 = vmatprep.subr.mxu0 0.0
    %1813 = vmatpush1.msra.mxu0 0.0
    %1814 = vmatprep.subr.mxu0 0.0
    %1815 = vmatpush1.msra.mxu0 0.0
    %1816 = vmatprep.subr.mxu0 0.0
    %1817 = vmatpush1.msra.mxu0 0.0
    %1818 = vmatprep.subr.mxu0 0.0
    %1819 = vmatpush1.msra.mxu0 0.0
    %1820 = vmatprep.subr.mxu0 0.0
    %1821 = vmatpush1.msra.mxu0 0.0
    %1822 = vmatprep.subr.mxu0 0.0
    %1823 = vmatpush1.msra.mxu0 0.0
    %1824 = vmatprep.subr.mxu0 0.0
    %1825 = vmatpush1.msra.mxu0 0.0
    %1826 = vmatprep.subr.mxu0 0.0
    %1827 = vmatpush1.msra.mxu0 0.0
    %1828 = vmatprep.subr.mxu0 0.0
    %1829 = vmatpush1.msra.mxu0 %v1795
    %1830 = vmatprep.subr.mxu0 0.0
    %1831 = vmatpush1.msra.mxu0 %v1794
    %1832 = vmatprep.subr.mxu0 0.0
    %1833 = vmatpush1.msra.mxu0 %v1793
    %1834 = vmatprep.subr.mxu0 0.0
    %1835 = vmatpush1.msra.mxu0 %v1792
    %1836 = vmatprep.subr.mxu0 0.0
    %1837 = vmatpush2.msra.mxu0 0.0
    %1838 = vmatprep.subr.mxu0 0.0
    %1839 = vmatpush2.msra.mxu0 0.0
    %1840 = vmatprep.subr.mxu0 0.0
    %1841 = vmatpush2.msra.mxu0 0.0
    %1842 = vmatprep.subr.mxu0 0.0
    %1843 = vmatpush2.msra.mxu0 0.0
    %1844 = vmatprep.subr.mxu0 0.0
    %1845 = vmatpush2.msra.mxu0 0.0
    %1846 = vmatprep.subr.mxu0 0.0
    %1847 = vmatpush2.msra.mxu0 0.0
    %1848 = vmatprep.subr.mxu0 0.0
    %1849 = vmatpush2.msra.mxu0 0.0
    %1850 = vmatprep.subr.mxu0 0.0
    %1851 = vmatpush2.msra.mxu0 0.0
    %1852 = vmatprep.subr.mxu0 0.0
    %1853 = vmatpush2.msra.mxu0 0.0
    %1854 = vmatprep.subr.mxu0 0.0
    %1855 = vmatpush2.msra.mxu0 0.0
    %1856 = vmatprep.subr.mxu0 0.0
    %1857 = vmatpush2.msra.mxu0 0.0
    %1858 = vmatprep.subr.mxu0 0.0
    %1859 = vmatpush2.msra.mxu0 0.0
    %1860 = vmatprep.subr.mxu0 0.0
    %1861 = vmatpush2.msra.mxu0 0.0
    %1862 = vmatprep.subr.mxu0 0.0
    %1863 = vmatpush2.msra.mxu0 0.0
    %1864 = vmatprep.subr.mxu0 0.0
    %1865 = vmatpush2.msra.mxu0 0.0
    %1866 = vmatprep.subr.mxu0 0.0
    %1867 = vmatpush2.msra.mxu0 0.0
    %1868 = vmatprep.mubr.f32.mxu0 0.0
    %1869 = vmatmul.mubr.f32.gmra.mxu0 %v1711
    %v1870 = vpop.f32.mrf.mxu0
    %v1871 = vadd.f32 %v1802, %v1870
    %v1872 = vpop.f32.mrf.mxu0
    %1873 = vmatprep.mubr.f32.mxu0 0.0
    %1874 = vmatmul.mubr.f32.gmra.mxu0 %v1714
    %v1875 = vpop.f32.mrf.mxu0
    %v1876 = vadd.f32 %v1802, %v1875
    %v1877 = vpop.f32.mrf.mxu0
    %1878 = vdwg.mxu0
    %s1879 = scalar_lea.vmem %s7, 64
    %v1880 = vld [vmem:[%s1879] sm:$0xff]
    %v1881 = vld [vmem:[%s1879 + $0x8] sm:$0xff]
    %v1882 = vld [vmem:[%s1879 + $0x10] sm:$0xff]
    %v1883 = vld [vmem:[%s1879 + $0x18] sm:$0xff]
    %s1884 = scalar_lea.vmem %s8, 2
    %v1885 = vld [vmem:[%s1884] sm:$0x1]
    %v1887 = vlaneseq
    %v1888 = vshrl.u32 %v1887, 7
    %v1889 = vsub.s32 0, %v1888
    %v1890 = vrot.slane %v1885, %v1889
    %1892 = vmatprep.subr.mxu0 0.0
    %1893 = vmatpush1.msra.mxu0 0.0
    %1894 = vmatprep.subr.mxu0 0.0
    %1895 = vmatpush1.msra.mxu0 0.0
    %1896 = vmatprep.subr.mxu0 0.0
    %1897 = vmatpush1.msra.mxu0 0.0
    %1898 = vmatprep.subr.mxu0 0.0
    %1899 = vmatpush1.msra.mxu0 0.0
    %1900 = vmatprep.subr.mxu0 0.0
    %1901 = vmatpush1.msra.mxu0 0.0
    %1902 = vmatprep.subr.mxu0 0.0
    %1903 = vmatpush1.msra.mxu0 0.0
    %1904 = vmatprep.subr.mxu0 0.0
    %1905 = vmatpush1.msra.mxu0 0.0
    %1906 = vmatprep.subr.mxu0 0.0
    %1907 = vmatpush1.msra.mxu0 0.0
    %1908 = vmatprep.subr.mxu0 0.0
    %1909 = vmatpush1.msra.mxu0 0.0
    %1910 = vmatprep.subr.mxu0 0.0
    %1911 = vmatpush1.msra.mxu0 0.0
    %1912 = vmatprep.subr.mxu0 0.0
    %1913 = vmatpush1.msra.mxu0 0.0
    %1914 = vmatprep.subr.mxu0 0.0
    %1915 = vmatpush1.msra.mxu0 0.0
    %1916 = vmatprep.subr.mxu0 0.0
    %1917 = vmatpush1.msra.mxu0 %v1883
    %1918 = vmatprep.subr.mxu0 0.0
    %1919 = vmatpush1.msra.mxu0 %v1882
    %1920 = vmatprep.subr.mxu0 0.0
    %1921 = vmatpush1.msra.mxu0 %v1881
    %1922 = vmatprep.subr.mxu0 0.0
    %1923 = vmatpush1.msra.mxu0 %v1880
    %1924 = vmatprep.subr.mxu0 0.0
    %1925 = vmatpush2.msra.mxu0 0.0
    %1926 = vmatprep.subr.mxu0 0.0
    %1927 = vmatpush2.msra.mxu0 0.0
    %1928 = vmatprep.subr.mxu0 0.0
    %1929 = vmatpush2.msra.mxu0 0.0
    %1930 = vmatprep.subr.mxu0 0.0
    %1931 = vmatpush2.msra.mxu0 0.0
    %1932 = vmatprep.subr.mxu0 0.0
    %1933 = vmatpush2.msra.mxu0 0.0
    %1934 = vmatprep.subr.mxu0 0.0
    %1935 = vmatpush2.msra.mxu0 0.0
    %1936 = vmatprep.subr.mxu0 0.0
    %1937 = vmatpush2.msra.mxu0 0.0
    %1938 = vmatprep.subr.mxu0 0.0
    %1939 = vmatpush2.msra.mxu0 0.0
    %1940 = vmatprep.subr.mxu0 0.0
    %1941 = vmatpush2.msra.mxu0 0.0
    %1942 = vmatprep.subr.mxu0 0.0
    %1943 = vmatpush2.msra.mxu0 0.0
    %1944 = vmatprep.subr.mxu0 0.0
    %1945 = vmatpush2.msra.mxu0 0.0
    %1946 = vmatprep.subr.mxu0 0.0
    %1947 = vmatpush2.msra.mxu0 0.0
    %1948 = vmatprep.subr.mxu0 0.0
    %1949 = vmatpush2.msra.mxu0 0.0
    %1950 = vmatprep.subr.mxu0 0.0
    %1951 = vmatpush2.msra.mxu0 0.0
    %1952 = vmatprep.subr.mxu0 0.0
    %1953 = vmatpush2.msra.mxu0 0.0
    %1954 = vmatprep.subr.mxu0 0.0
    %1955 = vmatpush2.msra.mxu0 0.0
    %1956 = vmatprep.mubr.f32.mxu0 0.0
    %1957 = vmatmul.mubr.f32.gmra.mxu0 %v1711
    %v1958 = vpop.f32.mrf.mxu0
    %v1959 = vadd.f32 %v1890, %v1958
    %v1960 = vpop.f32.mrf.mxu0
    %1961 = vmatprep.mubr.f32.mxu0 0.0
    %1962 = vmatmul.mubr.f32.gmra.mxu0 %v1714
    %v1963 = vpop.f32.mrf.mxu0
    %v1964 = vadd.f32 %v1890, %v1963
    %v1965 = vpop.f32.mrf.mxu0
    %1966 = vdwg.mxu0
    %v1968 = vsel %vm539, %v1783, 0
    %v1971 = vsel %vm539, %v1788, 0
    %v1974 = vsel %vm539, %v1871, 0
    %v1977 = vsel %vm539, %v1876, 0
    %1979 = vmatprep.subr.mxu0 0.0
    %1980 = vmatpush1.xpose.msra.mxu0 0.0
    %1981 = vmatprep.subr.mxu0 0.0
    %1982 = vmatpush1.xpose.msra.mxu0 0.0
    %1983 = vmatprep.subr.mxu0 0.0
    %1984 = vmatpush1.xpose.msra.mxu0 0.0
    %1985 = vmatprep.subr.mxu0 0.0
    %1986 = vmatpush1.xpose.msra.mxu0 0.0
    %1987 = vmatprep.subr.mxu0 0.0
    %1988 = vmatpush1.xpose.msra.mxu0 0.0
    %1989 = vmatprep.subr.mxu0 0.0
    %1990 = vmatpush1.xpose.msra.mxu0 0.0
    %1991 = vmatprep.subr.mxu0 0.0
    %1992 = vmatpush1.xpose.msra.mxu0 0.0
    %1993 = vmatprep.subr.mxu0 0.0
    %1994 = vmatpush1.xpose.msra.mxu0 0.0
    %1995 = vmatprep.subr.mxu0 0.0
    %1996 = vmatpush1.xpose.msra.mxu0 0.0
    %1997 = vmatprep.subr.mxu0 0.0
    %1998 = vmatpush1.xpose.msra.mxu0 0.0
    %1999 = vmatprep.subr.mxu0 0.0
    %2000 = vmatpush1.xpose.msra.mxu0 0.0
    %2001 = vmatprep.subr.mxu0 0.0
    %2002 = vmatpush1.xpose.msra.mxu0 0.0
    %2003 = vmatprep.subr.mxu0 0.0
    %2004 = vmatpush1.xpose.msra.mxu0 0.0
    %2005 = vmatprep.subr.mxu0 0.0
    %2006 = vmatpush1.xpose.msra.mxu0 0.0
    %2007 = vmatprep.subr.mxu0 0.0
    %2008 = vmatpush1.xpose.msra.mxu0 %v1977
    %2009 = vmatprep.subr.mxu0 0.0
    %2010 = vmatpush1.xpose.msra.mxu0 %v1974
    %2011 = vmatprep.subr.mxu0 0.0
    %2012 = vmatpush2.xpose.msra.mxu0 0.0
    %2013 = vmatprep.subr.mxu0 0.0
    %2014 = vmatpush2.xpose.msra.mxu0 0.0
    %2015 = vmatprep.subr.mxu0 0.0
    %2016 = vmatpush2.xpose.msra.mxu0 0.0
    %2017 = vmatprep.subr.mxu0 0.0
    %2018 = vmatpush2.xpose.msra.mxu0 0.0
    %2019 = vmatprep.subr.mxu0 0.0
    %2020 = vmatpush2.xpose.msra.mxu0 0.0
    %2021 = vmatprep.subr.mxu0 0.0
    %2022 = vmatpush2.xpose.msra.mxu0 0.0
    %2023 = vmatprep.subr.mxu0 0.0
    %2024 = vmatpush2.xpose.msra.mxu0 0.0
    %2025 = vmatprep.subr.mxu0 0.0
    %2026 = vmatpush2.xpose.msra.mxu0 0.0
    %2027 = vmatprep.subr.mxu0 0.0
    %2028 = vmatpush2.xpose.msra.mxu0 0.0
    %2029 = vmatprep.subr.mxu0 0.0
    %2030 = vmatpush2.xpose.msra.mxu0 0.0
    %2031 = vmatprep.subr.mxu0 0.0
    %2032 = vmatpush2.xpose.msra.mxu0 0.0
    %2033 = vmatprep.subr.mxu0 0.0
    %2034 = vmatpush2.xpose.msra.mxu0 0.0
    %2035 = vmatprep.subr.mxu0 0.0
    %2036 = vmatpush2.xpose.msra.mxu0 0.0
    %2037 = vmatprep.subr.mxu0 0.0
    %2038 = vmatpush2.xpose.msra.mxu0 0.0
    %2039 = vmatprep.subr.mxu0 0.0
    %2040 = vmatpush2.xpose.msra.mxu0 0.0
    %2041 = vmatprep.subr.mxu0 0.0
    %2042 = vmatpush2.xpose.msra.mxu0 0.0
    %2043 = vmatprep.mubr.f32.mxu0 0.0
    %2044 = vmatmul.mubr.f32.gmra.mxu0 %v1968
    %v2045 = vpop.f32.mrf.mxu0
    %v2046 = vadd.f32 %v227, %v2045
    %v2047 = vpop.f32.mrf.mxu0
    %2048 = vmatprep.mubr.f32.mxu0 0.0
    %2049 = vmatmul.mubr.f32.gmra.mxu0 %v1971
    %v2050 = vpop.f32.mrf.mxu0
    %v2051 = vadd.f32 %v228, %v2050
    %v2052 = vpop.f32.mrf.mxu0
    %2053 = vdwg.mxu0
    %v2054 = vsel %vm539, %v2046, -inf
    %2055 = vmax.xlane.f32.xlu0 %v2054
    %v2056 = vpop.xlane.xlu0 %2055
    %v2057 = vsel %vm539, %v2051, -inf
    %2058 = vmax.xlane.f32.xlu0 %v2057
    %v2059 = vpop.xlane.xlu0 %2058
    %v2060 = vsub.f32 %v2046, %v2056
    %v2061 = vsub.f32 %v2051, %v2059
    %v2062 = vmul.f32 %v2060, 1.442695
    %v2063 = vpow.pop %v2062
    %v2064 = vmul.f32 %v2061, 1.442695
    %v2065 = vpow.pop %v2064
    %v2066 = vsel %vm539, %v2063, 0.0
    %2067 = vadd.xlane.f32.xlu0 %v2066
    %v2068 = vpop.xlane.xlu0 %2067
    %v2069 = vsel %vm539, %v2065, 0.0
    %2070 = vadd.xlane.f32.xlu0 %v2069
    %v2071 = vpop.xlane.xlu0 %2070
    %v2072 = vrcp.pop %v2068
    %v2073 = vmul.f32 %v2063, %v2072
    %v2074 = vrcp.pop %v2071
    %v2075 = vmul.f32 %v2065, %v2074
    %v2077 = vsel %vm539, %v2073, 0
    %v2080 = vsel %vm539, %v2075, 0
    %2082 = vmatprep.subr.mxu0 0.0
    %2083 = vmatpush1.msra.mxu0 0.0
    %2084 = vmatprep.subr.mxu0 0.0
    %2085 = vmatpush1.msra.mxu0 0.0
    %2086 = vmatprep.subr.mxu0 0.0
    %2087 = vmatpush1.msra.mxu0 0.0
    %2088 = vmatprep.subr.mxu0 0.0
    %2089 = vmatpush1.msra.mxu0 0.0
    %2090 = vmatprep.subr.mxu0 0.0
    %2091 = vmatpush1.msra.mxu0 0.0
    %2092 = vmatprep.subr.mxu0 0.0
    %2093 = vmatpush1.msra.mxu0 0.0
    %2094 = vmatprep.subr.mxu0 0.0
    %2095 = vmatpush1.msra.mxu0 0.0
    %2096 = vmatprep.subr.mxu0 0.0
    %2097 = vmatpush1.msra.mxu0 0.0
    %2098 = vmatprep.subr.mxu0 0.0
    %2099 = vmatpush1.msra.mxu0 0.0
    %2100 = vmatprep.subr.mxu0 0.0
    %2101 = vmatpush1.msra.mxu0 0.0
    %2102 = vmatprep.subr.mxu0 0.0
    %2103 = vmatpush1.msra.mxu0 0.0
    %2104 = vmatprep.subr.mxu0 0.0
    %2105 = vmatpush1.msra.mxu0 0.0
    %2106 = vmatprep.subr.mxu0 0.0
    %2107 = vmatpush1.msra.mxu0 0.0
    %2108 = vmatprep.subr.mxu0 0.0
    %2109 = vmatpush1.msra.mxu0 0.0
    %2110 = vmatprep.subr.mxu0 0.0
    %2111 = vmatpush1.msra.mxu0 %v1964
    %2112 = vmatprep.subr.mxu0 0.0
    %2113 = vmatpush1.msra.mxu0 %v1959
    %2114 = vmatprep.subr.mxu0 0.0
    %2115 = vmatpush2.msra.mxu0 0.0
    %2116 = vmatprep.subr.mxu0 0.0
    %2117 = vmatpush2.msra.mxu0 0.0
    %2118 = vmatprep.subr.mxu0 0.0
    %2119 = vmatpush2.msra.mxu0 0.0
    %2120 = vmatprep.subr.mxu0 0.0
    %2121 = vmatpush2.msra.mxu0 0.0
    %2122 = vmatprep.subr.mxu0 0.0
    %2123 = vmatpush2.msra.mxu0 0.0
    %2124 = vmatprep.subr.mxu0 0.0
    %2125 = vmatpush2.msra.mxu0 0.0
    %2126 = vmatprep.subr.mxu0 0.0
    %2127 = vmatpush2.msra.mxu0 0.0
    %2128 = vmatprep.subr.mxu0 0.0
    %2129 = vmatpush2.msra.mxu0 0.0
    %2130 = vmatprep.subr.mxu0 0.0
    %2131 = vmatpush2.msra.mxu0 0.0
    %2132 = vmatprep.subr.mxu0 0.0
    %2133 = vmatpush2.msra.mxu0 0.0
    %2134 = vmatprep.subr.mxu0 0.0
    %2135 = vmatpush2.msra.mxu0 0.0
    %2136 = vmatprep.subr.mxu0 0.0
    %2137 = vmatpush2.msra.mxu0 0.0
    %2138 = vmatprep.subr.mxu0 0.0
    %2139 = vmatpush2.msra.mxu0 0.0
    %2140 = vmatprep.subr.mxu0 0.0
    %2141 = vmatpush2.msra.mxu0 0.0
    %2142 = vmatprep.subr.mxu0 0.0
    %2143 = vmatpush2.msra.mxu0 0.0
    %2144 = vmatprep.subr.mxu0 0.0
    %2145 = vmatpush2.msra.mxu0 0.0
    %2146 = vmatprep.mubr.f32.mxu0 0.0
    %2147 = vmatmul.mubr.f32.gmra.mxu0 %v2077
    %v2148 = vpop.f32.mrf.mxu0
    %v2149 = vadd.f32 0.0, %v2148
    %v2150 = vpop.f32.mrf.mxu0
    %2151 = vmatprep.mubr.f32.mxu0 0.0
    %2152 = vmatmul.mubr.f32.gmra.mxu0 %v2080
    %v2153 = vpop.f32.mrf.mxu0
    %v2154 = vadd.f32 0.0, %v2153
    %v2155 = vpop.f32.mrf.mxu0
    %2156 = vdwg.mxu0
    %s2157 = scalar_lea.vmem %s9, 32
    %v2158 = vld [vmem:[%s2157] sm:$0xff]
    %v2159 = vld [vmem:[%s2157 + $0x8] sm:$0xff]
    %s2160 = scalar_lea.vmem %s3, 96
    %v2161 = vld [vmem:[%s2160] sm:$0xff]
    %v2162 = vld [vmem:[%s2160 + $0x8] sm:$0xff]
    %v2163 = vld [vmem:[%s2160 + $0x10] sm:$0xff]
    %v2164 = vld [vmem:[%s2160 + $0x18] sm:$0xff]
    %s2165 = scalar_lea.vmem %s4, 3
    %v2166 = vld [vmem:[%s2165] sm:$0x1]
    %v2168 = vlaneseq
    %v2169 = vshrl.u32 %v2168, 7
    %v2170 = vsub.s32 0, %v2169
    %v2171 = vrot.slane %v2166, %v2170
    %2173 = vmatprep.subr.mxu0 0.0
    %2174 = vmatpush1.msra.mxu0 0.0
    %2175 = vmatprep.subr.mxu0 0.0
    %2176 = vmatpush1.msra.mxu0 0.0
    %2177 = vmatprep.subr.mxu0 0.0
    %2178 = vmatpush1.msra.mxu0 0.0
    %2179 = vmatprep.subr.mxu0 0.0
    %2180 = vmatpush1.msra.mxu0 0.0
    %2181 = vmatprep.subr.mxu0 0.0
    %2182 = vmatpush1.msra.mxu0 0.0
    %2183 = vmatprep.subr.mxu0 0.0
    %2184 = vmatpush1.msra.mxu0 0.0
    %2185 = vmatprep.subr.mxu0 0.0
    %2186 = vmatpush1.msra.mxu0 0.0
    %2187 = vmatprep.subr.mxu0 0.0
    %2188 = vmatpush1.msra.mxu0 0.0
    %2189 = vmatprep.subr.mxu0 0.0
    %2190 = vmatpush1.msra.mxu0 0.0
    %2191 = vmatprep.subr.mxu0 0.0
    %2192 = vmatpush1.msra.mxu0 0.0
    %2193 = vmatprep.subr.mxu0 0.0
    %2194 = vmatpush1.msra.mxu0 0.0
    %2195 = vmatprep.subr.mxu0 0.0
    %2196 = vmatpush1.msra.mxu0 0.0
    %2197 = vmatprep.subr.mxu0 0.0
    %2198 = vmatpush1.msra.mxu0 %v2164
    %2199 = vmatprep.subr.mxu0 0.0
    %2200 = vmatpush1.msra.mxu0 %v2163
    %2201 = vmatprep.subr.mxu0 0.0
    %2202 = vmatpush1.msra.mxu0 %v2162
    %2203 = vmatprep.subr.mxu0 0.0
    %2204 = vmatpush1.msra.mxu0 %v2161
    %2205 = vmatprep.subr.mxu0 0.0
    %2206 = vmatpush2.msra.mxu0 0.0
    %2207 = vmatprep.subr.mxu0 0.0
    %2208 = vmatpush2.msra.mxu0 0.0
    %2209 = vmatprep.subr.mxu0 0.0
    %2210 = vmatpush2.msra.mxu0 0.0
    %2211 = vmatprep.subr.mxu0 0.0
    %2212 = vmatpush2.msra.mxu0 0.0
    %2213 = vmatprep.subr.mxu0 0.0
    %2214 = vmatpush2.msra.mxu0 0.0
    %2215 = vmatprep.subr.mxu0 0.0
    %2216 = vmatpush2.msra.mxu0 0.0
    %2217 = vmatprep.subr.mxu0 0.0
    %2218 = vmatpush2.msra.mxu0 0.0
    %2219 = vmatprep.subr.mxu0 0.0
    %2220 = vmatpush2.msra.mxu0 0.0
    %2221 = vmatprep.subr.mxu0 0.0
    %2222 = vmatpush2.msra.mxu0 0.0
    %2223 = vmatprep.subr.mxu0 0.0
    %2224 = vmatpush2.msra.mxu0 0.0
    %2225 = vmatprep.subr.mxu0 0.0
    %2226 = vmatpush2.msra.mxu0 0.0
    %2227 = vmatprep.subr.mxu0 0.0
    %2228 = vmatpush2.msra.mxu0 0.0
    %2229 = vmatprep.subr.mxu0 0.0
    %2230 = vmatpush2.msra.mxu0 0.0
    %2231 = vmatprep.subr.mxu0 0.0
    %2232 = vmatpush2.msra.mxu0 0.0
    %2233 = vmatprep.subr.mxu0 0.0
    %2234 = vmatpush2.msra.mxu0 0.0
    %2235 = vmatprep.subr.mxu0 0.0
    %2236 = vmatpush2.msra.mxu0 0.0
    %2237 = vmatprep.mubr.f32.mxu0 0.0
    %2238 = vmatmul.mubr.f32.gmra.mxu0 %v1711
    %v2239 = vpop.f32.mrf.mxu0
    %v2240 = vadd.f32 %v2171, %v2239
    %v2241 = vpop.f32.mrf.mxu0
    %2242 = vmatprep.mubr.f32.mxu0 0.0
    %2243 = vmatmul.mubr.f32.gmra.mxu0 %v1714
    %v2244 = vpop.f32.mrf.mxu0
    %v2245 = vadd.f32 %v2171, %v2244
    %v2246 = vpop.f32.mrf.mxu0
    %2247 = vdwg.mxu0
    %s2248 = scalar_lea.vmem %s5, 96
    %v2249 = vld [vmem:[%s2248] sm:$0xff]
    %v2250 = vld [vmem:[%s2248 + $0x8] sm:$0xff]
    %v2251 = vld [vmem:[%s2248 + $0x10] sm:$0xff]
    %v2252 = vld [vmem:[%s2248 + $0x18] sm:$0xff]
    %s2253 = scalar_lea.vmem %s6, 3
    %v2254 = vld [vmem:[%s2253] sm:$0x1]
    %v2256 = vlaneseq
    %v2257 = vshrl.u32 %v2256, 7
    %v2258 = vsub.s32 0, %v2257
    %v2259 = vrot.slane %v2254, %v2258
    %2261 = vmatprep.subr.mxu0 0.0
    %2262 = vmatpush1.msra.mxu0 0.0
    %2263 = vmatprep.subr.mxu0 0.0
    %2264 = vmatpush1.msra.mxu0 0.0
    %2265 = vmatprep.subr.mxu0 0.0
    %2266 = vmatpush1.msra.mxu0 0.0
    %2267 = vmatprep.subr.mxu0 0.0
    %2268 = vmatpush1.msra.mxu0 0.0
    %2269 = vmatprep.subr.mxu0 0.0
    %2270 = vmatpush1.msra.mxu0 0.0
    %2271 = vmatprep.subr.mxu0 0.0
    %2272 = vmatpush1.msra.mxu0 0.0
    %2273 = vmatprep.subr.mxu0 0.0
    %2274 = vmatpush1.msra.mxu0 0.0
    %2275 = vmatprep.subr.mxu0 0.0
    %2276 = vmatpush1.msra.mxu0 0.0
    %2277 = vmatprep.subr.mxu0 0.0
    %2278 = vmatpush1.msra.mxu0 0.0
    %2279 = vmatprep.subr.mxu0 0.0
    %2280 = vmatpush1.msra.mxu0 0.0
    %2281 = vmatprep.subr.mxu0 0.0
    %2282 = vmatpush1.msra.mxu0 0.0
    %2283 = vmatprep.subr.mxu0 0.0
    %2284 = vmatpush1.msra.mxu0 0.0
    %2285 = vmatprep.subr.mxu0 0.0
    %2286 = vmatpush1.msra.mxu0 %v2252
    %2287 = vmatprep.subr.mxu0 0.0
    %2288 = vmatpush1.msra.mxu0 %v2251
    %2289 = vmatprep.subr.mxu0 0.0
    %2290 = vmatpush1.msra.mxu0 %v2250
    %2291 = vmatprep.subr.mxu0 0.0
    %2292 = vmatpush1.msra.mxu0 %v2249
    %2293 = vmatprep.subr.mxu0 0.0
    %2294 = vmatpush2.msra.mxu0 0.0
    %2295 = vmatprep.subr.mxu0 0.0
    %2296 = vmatpush2.msra.mxu0 0.0
    %2297 = vmatprep.subr.mxu0 0.0
    %2298 = vmatpush2.msra.mxu0 0.0
    %2299 = vmatprep.subr.mxu0 0.0
    %2300 = vmatpush2.msra.mxu0 0.0
    %2301 = vmatprep.subr.mxu0 0.0
    %2302 = vmatpush2.msra.mxu0 0.0
    %2303 = vmatprep.subr.mxu0 0.0
    %2304 = vmatpush2.msra.mxu0 0.0
    %2305 = vmatprep.subr.mxu0 0.0
    %2306 = vmatpush2.msra.mxu0 0.0
    %2307 = vmatprep.subr.mxu0 0.0
    %2308 = vmatpush2.msra.mxu0 0.0
    %2309 = vmatprep.subr.mxu0 0.0
    %2310 = vmatpush2.msra.mxu0 0.0
    %2311 = vmatprep.subr.mxu0 0.0
    %2312 = vmatpush2.msra.mxu0 0.0
    %2313 = vmatprep.subr.mxu0 0.0
    %2314 = vmatpush2.msra.mxu0 0.0
    %2315 = vmatprep.subr.mxu0 0.0
    %2316 = vmatpush2.msra.mxu0 0.0
    %2317 = vmatprep.subr.mxu0 0.0
    %2318 = vmatpush2.msra.mxu0 0.0
    %2319 = vmatprep.subr.mxu0 0.0
    %2320 = vmatpush2.msra.mxu0 0.0
    %2321 = vmatprep.subr.mxu0 0.0
    %2322 = vmatpush2.msra.mxu0 0.0
    %2323 = vmatprep.subr.mxu0 0.0
    %2324 = vmatpush2.msra.mxu0 0.0
    %2325 = vmatprep.mubr.f32.mxu0 0.0
    %2326 = vmatmul.mubr.f32.gmra.mxu0 %v1711
    %v2327 = vpop.f32.mrf.mxu0
    %v2328 = vadd.f32 %v2259, %v2327
    %v2329 = vpop.f32.mrf.mxu0
    %2330 = vmatprep.mubr.f32.mxu0 0.0
    %2331 = vmatmul.mubr.f32.gmra.mxu0 %v1714
    %v2332 = vpop.f32.mrf.mxu0
    %v2333 = vadd.f32 %v2259, %v2332
    %v2334 = vpop.f32.mrf.mxu0
    %2335 = vdwg.mxu0
    %s2336 = scalar_lea.vmem %s7, 96
    %v2337 = vld [vmem:[%s2336] sm:$0xff]
    %v2338 = vld [vmem:[%s2336 + $0x8] sm:$0xff]
    %v2339 = vld [vmem:[%s2336 + $0x10] sm:$0xff]
    %v2340 = vld [vmem:[%s2336 + $0x18] sm:$0xff]
    %s2341 = scalar_lea.vmem %s8, 3
    %v2342 = vld [vmem:[%s2341] sm:$0x1]
    %v2344 = vlaneseq
    %v2345 = vshrl.u32 %v2344, 7
    %v2346 = vsub.s32 0, %v2345
    %v2347 = vrot.slane %v2342, %v2346
    %2349 = vmatprep.subr.mxu0 0.0
    %2350 = vmatpush1.msra.mxu0 0.0
    %2351 = vmatprep.subr.mxu0 0.0
    %2352 = vmatpush1.msra.mxu0 0.0
    %2353 = vmatprep.subr.mxu0 0.0
    %2354 = vmatpush1.msra.mxu0 0.0
    %2355 = vmatprep.subr.mxu0 0.0
    %2356 = vmatpush1.msra.mxu0 0.0
    %2357 = vmatprep.subr.mxu0 0.0
    %2358 = vmatpush1.msra.mxu0 0.0
    %2359 = vmatprep.subr.mxu0 0.0
    %2360 = vmatpush1.msra.mxu0 0.0
    %2361 = vmatprep.subr.mxu0 0.0
    %2362 = vmatpush1.msra.mxu0 0.0
    %2363 = vmatprep.subr.mxu0 0.0
    %2364 = vmatpush1.msra.mxu0 0.0
    %2365 = vmatprep.subr.mxu0 0.0
    %2366 = vmatpush1.msra.mxu0 0.0
    %2367 = vmatprep.subr.mxu0 0.0
    %2368 = vmatpush1.msra.mxu0 0.0
    %2369 = vmatprep.subr.mxu0 0.0
    %2370 = vmatpush1.msra.mxu0 0.0
    %2371 = vmatprep.subr.mxu0 0.0
    %2372 = vmatpush1.msra.mxu0 0.0
    %2373 = vmatprep.subr.mxu0 0.0
    %2374 = vmatpush1.msra.mxu0 %v2340
    %2375 = vmatprep.subr.mxu0 0.0
    %2376 = vmatpush1.msra.mxu0 %v2339
    %2377 = vmatprep.subr.mxu0 0.0
    %2378 = vmatpush1.msra.mxu0 %v2338
    %2379 = vmatprep.subr.mxu0 0.0
    %2380 = vmatpush1.msra.mxu0 %v2337
    %2381 = vmatprep.subr.mxu0 0.0
    %2382 = vmatpush2.msra.mxu0 0.0
    %2383 = vmatprep.subr.mxu0 0.0
    %2384 = vmatpush2.msra.mxu0 0.0
    %2385 = vmatprep.subr.mxu0 0.0
    %2386 = vmatpush2.msra.mxu0 0.0
    %2387 = vmatprep.subr.mxu0 0.0
    %2388 = vmatpush2.msra.mxu0 0.0
    %2389 = vmatprep.subr.mxu0 0.0
    %2390 = vmatpush2.msra.mxu0 0.0
    %2391 = vmatprep.subr.mxu0 0.0
    %2392 = vmatpush2.msra.mxu0 0.0
    %2393 = vmatprep.subr.mxu0 0.0
    %2394 = vmatpush2.msra.mxu0 0.0
    %2395 = vmatprep.subr.mxu0 0.0
    %2396 = vmatpush2.msra.mxu0 0.0
    %2397 = vmatprep.subr.mxu0 0.0
    %2398 = vmatpush2.msra.mxu0 0.0
    %2399 = vmatprep.subr.mxu0 0.0
    %2400 = vmatpush2.msra.mxu0 0.0
    %2401 = vmatprep.subr.mxu0 0.0
    %2402 = vmatpush2.msra.mxu0 0.0
    %2403 = vmatprep.subr.mxu0 0.0
    %2404 = vmatpush2.msra.mxu0 0.0
    %2405 = vmatprep.subr.mxu0 0.0
    %2406 = vmatpush2.msra.mxu0 0.0
    %2407 = vmatprep.subr.mxu0 0.0
    %2408 = vmatpush2.msra.mxu0 0.0
    %2409 = vmatprep.subr.mxu0 0.0
    %2410 = vmatpush2.msra.mxu0 0.0
    %2411 = vmatprep.subr.mxu0 0.0
    %2412 = vmatpush2.msra.mxu0 0.0
    %2413 = vmatprep.mubr.f32.mxu0 0.0
    %2414 = vmatmul.mubr.f32.gmra.mxu0 %v1711
    %v2415 = vpop.f32.mrf.mxu0
    %v2416 = vadd.f32 %v2347, %v2415
    %v2417 = vpop.f32.mrf.mxu0
    %2418 = vmatprep.mubr.f32.mxu0 0.0
    %2419 = vmatmul.mubr.f32.gmra.mxu0 %v1714
    %v2420 = vpop.f32.mrf.mxu0
    %v2421 = vadd.f32 %v2347, %v2420
    %v2422 = vpop.f32.mrf.mxu0
    %2423 = vdwg.mxu0
    %v2425 = vsel %vm539, %v2240, 0
    %v2428 = vsel %vm539, %v2245, 0
    %v2431 = vsel %vm539, %v2328, 0
    %v2434 = vsel %vm539, %v2333, 0
    %2436 = vmatprep.subr.mxu0 0.0
    %2437 = vmatpush1.xpose.msra.mxu0 0.0
    %2438 = vmatprep.subr.mxu0 0.0
    %2439 = vmatpush1.xpose.msra.mxu0 0.0
    %2440 = vmatprep.subr.mxu0 0.0
    %2441 = vmatpush1.xpose.msra.mxu0 0.0
    %2442 = vmatprep.subr.mxu0 0.0
    %2443 = vmatpush1.xpose.msra.mxu0 0.0
    %2444 = vmatprep.subr.mxu0 0.0
    %2445 = vmatpush1.xpose.msra.mxu0 0.0
    %2446 = vmatprep.subr.mxu0 0.0
    %2447 = vmatpush1.xpose.msra.mxu0 0.0
    %2448 = vmatprep.subr.mxu0 0.0
    %2449 = vmatpush1.xpose.msra.mxu0 0.0
    %2450 = vmatprep.subr.mxu0 0.0
    %2451 = vmatpush1.xpose.msra.mxu0 0.0
    %2452 = vmatprep.subr.mxu0 0.0
    %2453 = vmatpush1.xpose.msra.mxu0 0.0
    %2454 = vmatprep.subr.mxu0 0.0
    %2455 = vmatpush1.xpose.msra.mxu0 0.0
    %2456 = vmatprep.subr.mxu0 0.0
    %2457 = vmatpush1.xpose.msra.mxu0 0.0
    %2458 = vmatprep.subr.mxu0 0.0
    %2459 = vmatpush1.xpose.msra.mxu0 0.0
    %2460 = vmatprep.subr.mxu0 0.0
    %2461 = vmatpush1.xpose.msra.mxu0 0.0
    %2462 = vmatprep.subr.mxu0 0.0
    %2463 = vmatpush1.xpose.msra.mxu0 0.0
    %2464 = vmatprep.subr.mxu0 0.0
    %2465 = vmatpush1.xpose.msra.mxu0 %v2434
    %2466 = vmatprep.subr.mxu0 0.0
    %2467 = vmatpush1.xpose.msra.mxu0 %v2431
    %2468 = vmatprep.subr.mxu0 0.0
    %2469 = vmatpush2.xpose.msra.mxu0 0.0
    %2470 = vmatprep.subr.mxu0 0.0
    %2471 = vmatpush2.xpose.msra.mxu0 0.0
    %2472 = vmatprep.subr.mxu0 0.0
    %2473 = vmatpush2.xpose.msra.mxu0 0.0
    %2474 = vmatprep.subr.mxu0 0.0
    %2475 = vmatpush2.xpose.msra.mxu0 0.0
    %2476 = vmatprep.subr.mxu0 0.0
    %2477 = vmatpush2.xpose.msra.mxu0 0.0
    %2478 = vmatprep.subr.mxu0 0.0
    %2479 = vmatpush2.xpose.msra.mxu0 0.0
    %2480 = vmatprep.subr.mxu0 0.0
    %2481 = vmatpush2.xpose.msra.mxu0 0.0
    %2482 = vmatprep.subr.mxu0 0.0
    %2483 = vmatpush2.xpose.msra.mxu0 0.0
    %2484 = vmatprep.subr.mxu0 0.0
    %2485 = vmatpush2.xpose.msra.mxu0 0.0
    %2486 = vmatprep.subr.mxu0 0.0
    %2487 = vmatpush2.xpose.msra.mxu0 0.0
    %2488 = vmatprep.subr.mxu0 0.0
    %2489 = vmatpush2.xpose.msra.mxu0 0.0
    %2490 = vmatprep.subr.mxu0 0.0
    %2491 = vmatpush2.xpose.msra.mxu0 0.0
    %2492 = vmatprep.subr.mxu0 0.0
    %2493 = vmatpush2.xpose.msra.mxu0 0.0
    %2494 = vmatprep.subr.mxu0 0.0
    %2495 = vmatpush2.xpose.msra.mxu0 0.0
    %2496 = vmatprep.subr.mxu0 0.0
    %2497 = vmatpush2.xpose.msra.mxu0 0.0
    %2498 = vmatprep.subr.mxu0 0.0
    %2499 = vmatpush2.xpose.msra.mxu0 0.0
    %2500 = vmatprep.mubr.f32.mxu0 0.0
    %2501 = vmatmul.mubr.f32.gmra.mxu0 %v2425
    %v2502 = vpop.f32.mrf.mxu0
    %v2503 = vadd.f32 %v227, %v2502
    %v2504 = vpop.f32.mrf.mxu0
    %2505 = vmatprep.mubr.f32.mxu0 0.0
    %2506 = vmatmul.mubr.f32.gmra.mxu0 %v2428
    %v2507 = vpop.f32.mrf.mxu0
    %v2508 = vadd.f32 %v228, %v2507
    %v2509 = vpop.f32.mrf.mxu0
    %2510 = vdwg.mxu0
    %v2511 = vsel %vm539, %v2503, -inf
    %2512 = vmax.xlane.f32.xlu0 %v2511
    %v2513 = vpop.xlane.xlu0 %2512
    %v2514 = vsel %vm539, %v2508, -inf
    %2515 = vmax.xlane.f32.xlu0 %v2514
    %v2516 = vpop.xlane.xlu0 %2515
    %v2517 = vsub.f32 %v2503, %v2513
    %v2518 = vsub.f32 %v2508, %v2516
    %v2519 = vmul.f32 %v2517, 1.442695
    %v2520 = vpow.pop %v2519
    %v2521 = vmul.f32 %v2518, 1.442695
    %v2522 = vpow.pop %v2521
    %v2523 = vsel %vm539, %v2520, 0.0
    %2524 = vadd.xlane.f32.xlu0 %v2523
    %v2525 = vpop.xlane.xlu0 %2524
    %v2526 = vsel %vm539, %v2522, 0.0
    %2527 = vadd.xlane.f32.xlu0 %v2526
    %v2528 = vpop.xlane.xlu0 %2527
    %v2529 = vrcp.pop %v2525
    %v2530 = vmul.f32 %v2520, %v2529
    %v2531 = vrcp.pop %v2528
    %v2532 = vmul.f32 %v2522, %v2531
    %v2534 = vsel %vm539, %v2530, 0
    %v2537 = vsel %vm539, %v2532, 0
    %2539 = vmatprep.subr.mxu0 0.0
    %2540 = vmatpush1.msra.mxu0 0.0
    %2541 = vmatprep.subr.mxu0 0.0
    %2542 = vmatpush1.msra.mxu0 0.0
    %2543 = vmatprep.subr.mxu0 0.0
    %2544 = vmatpush1.msra.mxu0 0.0
    %2545 = vmatprep.subr.mxu0 0.0
    %2546 = vmatpush1.msra.mxu0 0.0
    %2547 = vmatprep.subr.mxu0 0.0
    %2548 = vmatpush1.msra.mxu0 0.0
    %2549 = vmatprep.subr.mxu0 0.0
    %2550 = vmatpush1.msra.mxu0 0.0
    %2551 = vmatprep.subr.mxu0 0.0
    %2552 = vmatpush1.msra.mxu0 0.0
    %2553 = vmatprep.subr.mxu0 0.0
    %2554 = vmatpush1.msra.mxu0 0.0
    %2555 = vmatprep.subr.mxu0 0.0
    %2556 = vmatpush1.msra.mxu0 0.0
    %2557 = vmatprep.subr.mxu0 0.0
    %2558 = vmatpush1.msra.mxu0 0.0
    %2559 = vmatprep.subr.mxu0 0.0
    %2560 = vmatpush1.msra.mxu0 0.0
    %2561 = vmatprep.subr.mxu0 0.0
    %2562 = vmatpush1.msra.mxu0 0.0
    %2563 = vmatprep.subr.mxu0 0.0
    %2564 = vmatpush1.msra.mxu0 0.0
    %2565 = vmatprep.subr.mxu0 0.0
    %2566 = vmatpush1.msra.mxu0 0.0
    %2567 = vmatprep.subr.mxu0 0.0
    %2568 = vmatpush1.msra.mxu0 %v2421
    %2569 = vmatprep.subr.mxu0 0.0
    %2570 = vmatpush1.msra.mxu0 %v2416
    %2571 = vmatprep.subr.mxu0 0.0
    %2572 = vmatpush2.msra.mxu0 0.0
    %2573 = vmatprep.subr.mxu0 0.0
    %2574 = vmatpush2.msra.mxu0 0.0
    %2575 = vmatprep.subr.mxu0 0.0
    %2576 = vmatpush2.msra.mxu0 0.0
    %2577 = vmatprep.subr.mxu0 0.0
    %2578 = vmatpush2.msra.mxu0 0.0
    %2579 = vmatprep.subr.mxu0 0.0
    %2580 = vmatpush2.msra.mxu0 0.0
    %2581 = vmatprep.subr.mxu0 0.0
    %2582 = vmatpush2.msra.mxu0 0.0
    %2583 = vmatprep.subr.mxu0 0.0
    %2584 = vmatpush2.msra.mxu0 0.0
    %2585 = vmatprep.subr.mxu0 0.0
    %2586 = vmatpush2.msra.mxu0 0.0
    %2587 = vmatprep.subr.mxu0 0.0
    %2588 = vmatpush2.msra.mxu0 0.0
    %2589 = vmatprep.subr.mxu0 0.0
    %2590 = vmatpush2.msra.mxu0 0.0
    %2591 = vmatprep.subr.mxu0 0.0
    %2592 = vmatpush2.msra.mxu0 0.0
    %2593 = vmatprep.subr.mxu0 0.0
    %2594 = vmatpush2.msra.mxu0 0.0
    %2595 = vmatprep.subr.mxu0 0.0
    %2596 = vmatpush2.msra.mxu0 0.0
    %2597 = vmatprep.subr.mxu0 0.0
    %2598 = vmatpush2.msra.mxu0 0.0
    %2599 = vmatprep.subr.mxu0 0.0
    %2600 = vmatpush2.msra.mxu0 0.0
    %2601 = vmatprep.subr.mxu0 0.0
    %2602 = vmatpush2.msra.mxu0 0.0
    %2603 = vmatprep.mubr.f32.mxu0 0.0
    %2604 = vmatmul.mubr.f32.gmra.mxu0 %v2534
    %v2605 = vpop.f32.mrf.mxu0
    %v2606 = vadd.f32 0.0, %v2605
    %v2607 = vpop.f32.mrf.mxu0
    %2608 = vmatprep.mubr.f32.mxu0 0.0
    %2609 = vmatmul.mubr.f32.gmra.mxu0 %v2537
    %v2610 = vpop.f32.mrf.mxu0
    %v2611 = vadd.f32 0.0, %v2610
    %v2612 = vpop.f32.mrf.mxu0
    %2613 = vdwg.mxu0
    %s2614 = scalar_lea.vmem %s9, 48
    %v2615 = vld [vmem:[%s2614] sm:$0xff]
    %v2616 = vld [vmem:[%s2614 + $0x8] sm:$0xff]
    %v2618 = vsel %vm539, %v2606, 0
    %v2621 = vsel %vm539, %v2611, 0
    %2623 = vmatprep.subr.mxu0 0.0
    %2624 = vmatpush1.msra.mxu0 0.0
    %2625 = vmatprep.subr.mxu0 0.0
    %2626 = vmatpush1.msra.mxu0 0.0
    %2627 = vmatprep.subr.mxu0 0.0
    %2628 = vmatpush1.msra.mxu0 0.0
    %2629 = vmatprep.subr.mxu0 0.0
    %2630 = vmatpush1.msra.mxu0 0.0
    %2631 = vmatprep.subr.mxu0 0.0
    %2632 = vmatpush1.msra.mxu0 0.0
    %2633 = vmatprep.subr.mxu0 0.0
    %2634 = vmatpush1.msra.mxu0 0.0
    %2635 = vmatprep.subr.mxu0 0.0
    %2636 = vmatpush1.msra.mxu0 0.0
    %2637 = vmatprep.subr.mxu0 0.0
    %2638 = vmatpush1.msra.mxu0 0.0
    %2639 = vmatprep.subr.mxu0 0.0
    %2640 = vmatpush1.msra.mxu0 0.0
    %2641 = vmatprep.subr.mxu0 0.0
    %2642 = vmatpush1.msra.mxu0 0.0
    %2643 = vmatprep.subr.mxu0 0.0
    %2644 = vmatpush1.msra.mxu0 0.0
    %2645 = vmatprep.subr.mxu0 0.0
    %2646 = vmatpush1.msra.mxu0 0.0
    %2647 = vmatprep.subr.mxu0 0.0
    %2648 = vmatpush1.msra.mxu0 0.0
    %2649 = vmatprep.subr.mxu0 0.0
    %2650 = vmatpush1.msra.mxu0 0.0
    %2651 = vmatprep.subr.mxu0 0.0
    %2652 = vmatpush1.msra.mxu0 %v2616
    %2653 = vmatprep.subr.mxu0 0.0
    %2654 = vmatpush1.msra.mxu0 %v2615
    %2655 = vmatprep.subr.mxu0 0.0
    %2656 = vmatpush2.msra.mxu0 0.0
    %2657 = vmatprep.subr.mxu0 0.0
    %2658 = vmatpush2.msra.mxu0 0.0
    %2659 = vmatprep.subr.mxu0 0.0
    %2660 = vmatpush2.msra.mxu0 0.0
    %2661 = vmatprep.subr.mxu0 0.0
    %2662 = vmatpush2.msra.mxu0 0.0
    %2663 = vmatprep.subr.mxu0 0.0
    %2664 = vmatpush2.msra.mxu0 0.0
    %2665 = vmatprep.subr.mxu0 0.0
    %2666 = vmatpush2.msra.mxu0 0.0
    %2667 = vmatprep.subr.mxu0 0.0
    %2668 = vmatpush2.msra.mxu0 0.0
    %2669 = vmatprep.subr.mxu0 0.0
    %2670 = vmatpush2.msra.mxu0 0.0
    %2671 = vmatprep.subr.mxu0 0.0
    %2672 = vmatpush2.msra.mxu0 0.0
    %2673 = vmatprep.subr.mxu0 0.0
    %2674 = vmatpush2.msra.mxu0 0.0
    %2675 = vmatprep.subr.mxu0 0.0
    %2676 = vmatpush2.msra.mxu0 0.0
    %2677 = vmatprep.subr.mxu0 0.0
    %2678 = vmatpush2.msra.mxu0 0.0
    %2679 = vmatprep.subr.mxu0 0.0
    %2680 = vmatpush2.msra.mxu0 0.0
    %2681 = vmatprep.subr.mxu0 0.0
    %2682 = vmatpush2.msra.mxu0 0.0
    %2683 = vmatprep.subr.mxu0 0.0
    %2684 = vmatpush2.msra.mxu0 0.0
    %2685 = vmatprep.subr.mxu0 0.0
    %2686 = vmatpush2.msra.mxu0 0.0
    %2687 = vmatprep.mubr.f32.mxu0 0.0
    %2688 = vmatmul.mubr.f32.gmra.mxu0 %v2618
    %v2689 = vpop.f32.mrf.mxu0
    %v2690 = vadd.f32 0.0, %v2689
    %v2691 = vpop.f32.mrf.mxu0
    %2692 = vmatprep.mubr.f32.mxu0 0.0
    %2693 = vmatmul.mubr.f32.gmra.mxu0 %v2621
    %v2694 = vpop.f32.mrf.mxu0
    %v2695 = vadd.f32 0.0, %v2694
    %v2696 = vpop.f32.mrf.mxu0
    %2697 = vdwg.mxu0
    %v2699 = vsel %vm539, %v2149, 0
    %v2702 = vsel %vm539, %v2154, 0
    %2704 = vmatprep.subr.mxu0 0.0
    %2705 = vmatpush1.msra.mxu0 0.0
    %2706 = vmatprep.subr.mxu0 0.0
    %2707 = vmatpush1.msra.mxu0 0.0
    %2708 = vmatprep.subr.mxu0 0.0
    %2709 = vmatpush1.msra.mxu0 0.0
    %2710 = vmatprep.subr.mxu0 0.0
    %2711 = vmatpush1.msra.mxu0 0.0
    %2712 = vmatprep.subr.mxu0 0.0
    %2713 = vmatpush1.msra.mxu0 0.0
    %2714 = vmatprep.subr.mxu0 0.0
    %2715 = vmatpush1.msra.mxu0 0.0
    %2716 = vmatprep.subr.mxu0 0.0
    %2717 = vmatpush1.msra.mxu0 0.0
    %2718 = vmatprep.subr.mxu0 0.0
    %2719 = vmatpush1.msra.mxu0 0.0
    %2720 = vmatprep.subr.mxu0 0.0
    %2721 = vmatpush1.msra.mxu0 0.0
    %2722 = vmatprep.subr.mxu0 0.0
    %2723 = vmatpush1.msra.mxu0 0.0
    %2724 = vmatprep.subr.mxu0 0.0
    %2725 = vmatpush1.msra.mxu0 0.0
    %2726 = vmatprep.subr.mxu0 0.0
    %2727 = vmatpush1.msra.mxu0 0.0
    %2728 = vmatprep.subr.mxu0 0.0
    %2729 = vmatpush1.msra.mxu0 0.0
    %2730 = vmatprep.subr.mxu0 0.0
    %2731 = vmatpush1.msra.mxu0 0.0
    %2732 = vmatprep.subr.mxu0 0.0
    %2733 = vmatpush1.msra.mxu0 %v2159
    %2734 = vmatprep.subr.mxu0 0.0
    %2735 = vmatpush1.msra.mxu0 %v2158
    %2736 = vmatprep.subr.mxu0 0.0
    %2737 = vmatpush2.msra.mxu0 0.0
    %2738 = vmatprep.subr.mxu0 0.0
    %2739 = vmatpush2.msra.mxu0 0.0
    %2740 = vmatprep.subr.mxu0 0.0
    %2741 = vmatpush2.msra.mxu0 0.0
    %2742 = vmatprep.subr.mxu0 0.0
    %2743 = vmatpush2.msra.mxu0 0.0
    %2744 = vmatprep.subr.mxu0 0.0
    %2745 = vmatpush2.msra.mxu0 0.0
    %2746 = vmatprep.subr.mxu0 0.0
    %2747 = vmatpush2.msra.mxu0 0.0
    %2748 = vmatprep.subr.mxu0 0.0
    %2749 = vmatpush2.msra.mxu0 0.0
    %2750 = vmatprep.subr.mxu0 0.0
    %2751 = vmatpush2.msra.mxu0 0.0
    %2752 = vmatprep.subr.mxu0 0.0
    %2753 = vmatpush2.msra.mxu0 0.0
    %2754 = vmatprep.subr.mxu0 0.0
    %2755 = vmatpush2.msra.mxu0 0.0
    %2756 = vmatprep.subr.mxu0 0.0
    %2757 = vmatpush2.msra.mxu0 0.0
    %2758 = vmatprep.subr.mxu0 0.0
    %2759 = vmatpush2.msra.mxu0 0.0
    %2760 = vmatprep.subr.mxu0 0.0
    %2761 = vmatpush2.msra.mxu0 0.0
    %2762 = vmatprep.subr.mxu0 0.0
    %2763 = vmatpush2.msra.mxu0 0.0
    %2764 = vmatprep.subr.mxu0 0.0
    %2765 = vmatpush2.msra.mxu0 0.0
    %2766 = vmatprep.subr.mxu0 0.0
    %2767 = vmatpush2.msra.mxu0 0.0
    %2768 = vmatprep.mubr.f32.mxu0 0.0
    %2769 = vmatmul.mubr.f32.gmra.mxu0 %v2699
    %v2770 = vpop.f32.mrf.mxu0
    %v2771 = vadd.f32 %v2690, %v2770
    %v2772 = vpop.f32.mrf.mxu0
    %2773 = vmatprep.mubr.f32.mxu0 0.0
    %2774 = vmatmul.mubr.f32.gmra.mxu0 %v2702
    %v2775 = vpop.f32.mrf.mxu0
    %v2776 = vadd.f32 %v2695, %v2775
    %v2777 = vpop.f32.mrf.mxu0
    %2778 = vdwg.mxu0
    %v2779 = vadd.f32 %v1649, %v2771
    %v2780 = vadd.f32 %v1650, %v2776
    %s2781 = scalar_lea.vmem %s10, 1
    %v2782 = vld [vmem:[%s2781] sm:$0x1]
    %v2784 = vlaneseq
    %v2785 = vshrl.u32 %v2784, 7
    %v2786 = vsub.s32 0, %v2785
    %v2787 = vrot.slane %v2782, %v2786
    %v2789 = vadd.f32 %v2779, %v2787
    %v2790 = vadd.f32 %v2780, %v2787
    %s2791 = scalar_lea.vmem %s13, 1
    %v2792 = vld [vmem:[%s2791] sm:$0x1]
    %s2793 = scalar_lea.vmem %s14, 1
    %v2794 = vld [vmem:[%s2793] sm:$0x1]
    %v2795 = vsel %vm231, %v2789, 0.0
    %2796 = vadd.xlane.f32.xlu0 %v2795
    %v2797 = vpop.xlane.xlu0 %2796
    %v2798 = vsel %vm231, %v2790, 0.0
    %2799 = vadd.xlane.f32.xlu0 %v2798
    %v2800 = vpop.xlane.xlu0 %2799
    %v2801 = vmul.f32 %v2797, %v238
    %v2802 = vmul.f32 %v2800, %v238
    %v2803 = vsub.f32 %v2789, %v2801
    %v2804 = vsub.f32 %v2790, %v2802
    %v2805 = vmul.f32 %v2803, %v2803
    %v2806 = vmul.f32 %v2804, %v2804
    %v2807 = vsel %vm231, %v2805, 0.0
    %2808 = vadd.xlane.f32.xlu0 %v2807
    %v2809 = vpop.xlane.xlu0 %2808
    %v2810 = vsel %vm231, %v2806, 0.0
    %2811 = vadd.xlane.f32.xlu0 %v2810
    %v2812 = vpop.xlane.xlu0 %2811
    %v2813 = vmul.f32 %v2809, %v238
    %v2814 = vmul.f32 %v2812, %v238
    %v2815 = vadd.f32 %v2813, 1e-05
    %v2816 = vadd.f32 %v2814, 1e-05
    %v2817 = vrsqrt.pop %v2815
    %v2818 = vrsqrt.pop %v2816
    %v2819 = vmul.f32 %v2803, %v2817
    %v2820 = vmul.f32 %v2804, %v2818
    %v2822 = vlaneseq
    %v2823 = vshrl.u32 %v2822, 7
    %v2824 = vsub.s32 0, %v2823
    %v2825 = vrot.slane %v2792, %v2824
    %v2827 = vmul.f32 %v2819, %v2825
    %v2828 = vmul.f32 %v2820, %v2825
    %v2830 = vlaneseq
    %v2831 = vshrl.u32 %v2830, 7
    %v2832 = vsub.s32 0, %v2831
    %v2833 = vrot.slane %v2794, %v2832
    %v2835 = vadd.f32 %v2827, %v2833
    %v2836 = vadd.f32 %v2828, %v2833
    %s2837 = scalar_lea.vmem %s15, 32
    %v2838 = vld [vmem:[%s2837] sm:$0xff]
    %v2839 = vld [vmem:[%s2837 + $0x8] sm:$0xff]
    %v2840 = vld [vmem:[%s2837 + $0x10] sm:$0xff]
    %v2841 = vld [vmem:[%s2837 + $0x18] sm:$0xff]
    %s2842 = scalar_lea.vmem %s16, 1
    %v2843 = vld [vmem:[%s2842] sm:$0x1]
    %v2845 = vlaneseq
    %v2846 = vshrl.u32 %v2845, 7
    %v2847 = vsub.s32 0, %v2846
    %v2848 = vrot.slane %v2843, %v2847
    %v2851 = vsel %vm231, %v2835, 0
    %v2854 = vsel %vm231, %v2836, 0
    %2856 = vmatprep.subr.mxu0 0.0
    %2857 = vmatpush1.msra.mxu0 0.0
    %2858 = vmatprep.subr.mxu0 0.0
    %2859 = vmatpush1.msra.mxu0 0.0
    %2860 = vmatprep.subr.mxu0 0.0
    %2861 = vmatpush1.msra.mxu0 0.0
    %2862 = vmatprep.subr.mxu0 0.0
    %2863 = vmatpush1.msra.mxu0 0.0
    %2864 = vmatprep.subr.mxu0 0.0
    %2865 = vmatpush1.msra.mxu0 0.0
    %2866 = vmatprep.subr.mxu0 0.0
    %2867 = vmatpush1.msra.mxu0 0.0
    %2868 = vmatprep.subr.mxu0 0.0
    %2869 = vmatpush1.msra.mxu0 0.0
    %2870 = vmatprep.subr.mxu0 0.0
    %2871 = vmatpush1.msra.mxu0 0.0
    %2872 = vmatprep.subr.mxu0 0.0
    %2873 = vmatpush1.msra.mxu0 0.0
    %2874 = vmatprep.subr.mxu0 0.0
    %2875 = vmatpush1.msra.mxu0 0.0
    %2876 = vmatprep.subr.mxu0 0.0
    %2877 = vmatpush1.msra.mxu0 0.0
    %2878 = vmatprep.subr.mxu0 0.0
    %2879 = vmatpush1.msra.mxu0 0.0
    %2880 = vmatprep.subr.mxu0 0.0
    %2881 = vmatpush1.msra.mxu0 %v2841
    %2882 = vmatprep.subr.mxu0 0.0
    %2883 = vmatpush1.msra.mxu0 %v2840
    %2884 = vmatprep.subr.mxu0 0.0
    %2885 = vmatpush1.msra.mxu0 %v2839
    %2886 = vmatprep.subr.mxu0 0.0
    %2887 = vmatpush1.msra.mxu0 %v2838
    %2888 = vmatprep.subr.mxu0 0.0
    %2889 = vmatpush2.msra.mxu0 0.0
    %2890 = vmatprep.subr.mxu0 0.0
    %2891 = vmatpush2.msra.mxu0 0.0
    %2892 = vmatprep.subr.mxu0 0.0
    %2893 = vmatpush2.msra.mxu0 0.0
    %2894 = vmatprep.subr.mxu0 0.0
    %2895 = vmatpush2.msra.mxu0 0.0
    %2896 = vmatprep.subr.mxu0 0.0
    %2897 = vmatpush2.msra.mxu0 0.0
    %2898 = vmatprep.subr.mxu0 0.0
    %2899 = vmatpush2.msra.mxu0 0.0
    %2900 = vmatprep.subr.mxu0 0.0
    %2901 = vmatpush2.msra.mxu0 0.0
    %2902 = vmatprep.subr.mxu0 0.0
    %2903 = vmatpush2.msra.mxu0 0.0
    %2904 = vmatprep.subr.mxu0 0.0
    %2905 = vmatpush2.msra.mxu0 0.0
    %2906 = vmatprep.subr.mxu0 0.0
    %2907 = vmatpush2.msra.mxu0 0.0
    %2908 = vmatprep.subr.mxu0 0.0
    %2909 = vmatpush2.msra.mxu0 0.0
    %2910 = vmatprep.subr.mxu0 0.0
    %2911 = vmatpush2.msra.mxu0 0.0
    %2912 = vmatprep.subr.mxu0 0.0
    %2913 = vmatpush2.msra.mxu0 0.0
    %2914 = vmatprep.subr.mxu0 0.0
    %2915 = vmatpush2.msra.mxu0 0.0
    %2916 = vmatprep.subr.mxu0 0.0
    %2917 = vmatpush2.msra.mxu0 0.0
    %2918 = vmatprep.subr.mxu0 0.0
    %2919 = vmatpush2.msra.mxu0 0.0
    %2920 = vmatprep.mubr.f32.mxu0 0.0
    %2921 = vmatmul.mubr.f32.gmra.mxu0 %v2851
    %v2922 = vpop.f32.mrf.mxu0
    %v2923 = vadd.f32 %v2848, %v2922
    %v2924 = vpop.f32.mrf.mxu0
    %2925 = vmatprep.mubr.f32.mxu0 0.0
    %2926 = vmatmul.mubr.f32.gmra.mxu0 %v2854
    %v2927 = vpop.f32.mrf.mxu0
    %v2928 = vadd.f32 %v2848, %v2927
    %v2929 = vpop.f32.mrf.mxu0
    %2930 = vdwg.mxu0
    %v2931 = vmul.f32 %v2923, 0.5
    %v2932 = vmul.f32 %v2928, 0.5
    %v2933 = vmul.f32 %v2923, 0.70710677
    %v2934 = vmul.f32 %v2928, 0.70710677
    %vm2935 = vcmp.ge.f32.partialorder %v2933, 0.0
    %vm2936 = vcmp.ge.f32.partialorder %v2934, 0.0
    %v2937 = vsel %vm2935, 1.0, -1.0
    %v2938 = vsel %vm2936, 1.0, -1.0
    %v2939 = vand.u32 2147483647, %v2933
    %v2940 = vand.u32 2147483647, %v2934
    %v2941 = vmul.f32 %v2939, 0.3275911
    %v2942 = vmul.f32 %v2940, 0.3275911
    %v2943 = vadd.f32 %v2941, 1.0
    %v2944 = vadd.f32 %v2942, 1.0
    %v2945 = vrcp.pop %v2943
    %v2946 = vmul.f32 1.0, %v2945
    %v2947 = vrcp.pop %v2944
    %v2948 = vmul.f32 1.0, %v2947
    %v2949 = vmul.f32 %v2946, 1.0614054
    %v2950 = vmul.f32 %v2948, 1.0614054
    %v2951 = vadd.f32 %v2949, -1.4531521
    %v2952 = vadd.f32 %v2950, -1.4531521
    %v2953 = vmul.f32 %v2951, %v2946
    %v2954 = vmul.f32 %v2952, %v2948
    %v2955 = vadd.f32 %v2953, 1.4214138
    %v2956 = vadd.f32 %v2954, 1.4214138
    %v2957 = vmul.f32 %v2955, %v2946
    %v2958 = vmul.f32 %v2956, %v2948
    %v2959 = vadd.f32 %v2957, -0.28449672
    %v2960 = vadd.f32 %v2958, -0.28449672
    %v2961 = vmul.f32 %v2959, %v2946
    %v2962 = vmul.f32 %v2960, %v2948
    %v2963 = vadd.f32 %v2961, 0.2548296
    %v2964 = vadd.f32 %v2962, 0.2548296
    %v2965 = vmul.f32 %v2963, %v2946
    %v2966 = vmul.f32 %v2964, %v2948
    %v2967 = vsub.f32 0.0, %v2939
    %v2968 = vsub.f32 0.0, %v2940
    %v2969 = vmul.f32 %v2967, %v2939
    %v2970 = vmul.f32 %v2968, %v2940
    %v2971 = vmul.f32 %v2969, 1.442695
    %v2972 = vpow.pop %v2971
    %v2973 = vmul.f32 %v2970, 1.442695
    %v2974 = vpow.pop %v2973
    %v2975 = vmul.f32 %v2965, %v2972
    %v2976 = vmul.f32 %v2966, %v2974
    %v2977 = vsub.f32 1.0, %v2975
    %v2978 = vsub.f32 1.0, %v2976
    %v2979 = vmul.f32 %v2937, %v2977
    %v2980 = vmul.f32 %v2938, %v2978
    %v2981 = vadd.f32 %v2979, 1.0
    %v2982 = vadd.f32 %v2980, 1.0
    %v2983 = vmul.f32 %v2931, %v2981
    %v2984 = vmul.f32 %v2932, %v2982
    %s2985 = scalar_lea.vmem %s17, 64
    %v2986 = vld [vmem:[%s2985] sm:$0xff]
    %v2987 = vld [vmem:[%s2985 + $0x8] sm:$0xff]
    %v2988 = vld [vmem:[%s2985 + $0x10] sm:$0xff]
    %v2989 = vld [vmem:[%s2985 + $0x18] sm:$0xff]
    %v2990 = vld [vmem:[%s2985 + $0x20] sm:$0xff]
    %v2991 = vld [vmem:[%s2985 + $0x28] sm:$0xff]
    %v2992 = vld [vmem:[%s2985 + $0x30] sm:$0xff]
    %v2993 = vld [vmem:[%s2985 + $0x38] sm:$0xff]
    %s2994 = scalar_lea.vmem %s18, 1
    %v2995 = vld [vmem:[%s2994] sm:$0x1]
    %v2997 = vlaneseq
    %v2998 = vshrl.u32 %v2997, 7
    %v2999 = vsub.s32 0, %v2998
    %v3000 = vrot.slane %v2995, %v2999
    %v3003 = vsel %vm1567, %v2983, 0
    %v3006 = vsel %vm1567, %v2984, 0
    %3008 = vmatprep.subr.mxu0 0.0
    %3009 = vmatpush1.msra.mxu0 0.0
    %3010 = vmatprep.subr.mxu0 0.0
    %3011 = vmatpush1.msra.mxu0 0.0
    %3012 = vmatprep.subr.mxu0 0.0
    %3013 = vmatpush1.msra.mxu0 0.0
    %3014 = vmatprep.subr.mxu0 0.0
    %3015 = vmatpush1.msra.mxu0 0.0
    %3016 = vmatprep.subr.mxu0 0.0
    %3017 = vmatpush1.msra.mxu0 0.0
    %3018 = vmatprep.subr.mxu0 0.0
    %3019 = vmatpush1.msra.mxu0 0.0
    %3020 = vmatprep.subr.mxu0 0.0
    %3021 = vmatpush1.msra.mxu0 0.0
    %3022 = vmatprep.subr.mxu0 0.0
    %3023 = vmatpush1.msra.mxu0 0.0
    %3024 = vmatprep.subr.mxu0 0.0
    %3025 = vmatpush1.msra.mxu0 %v2993
    %3026 = vmatprep.subr.mxu0 0.0
    %3027 = vmatpush1.msra.mxu0 %v2992
    %3028 = vmatprep.subr.mxu0 0.0
    %3029 = vmatpush1.msra.mxu0 %v2991
    %3030 = vmatprep.subr.mxu0 0.0
    %3031 = vmatpush1.msra.mxu0 %v2990
    %3032 = vmatprep.subr.mxu0 0.0
    %3033 = vmatpush1.msra.mxu0 %v2989
    %3034 = vmatprep.subr.mxu0 0.0
    %3035 = vmatpush1.msra.mxu0 %v2988
    %3036 = vmatprep.subr.mxu0 0.0
    %3037 = vmatpush1.msra.mxu0 %v2987
    %3038 = vmatprep.subr.mxu0 0.0
    %3039 = vmatpush1.msra.mxu0 %v2986
    %3040 = vmatprep.subr.mxu0 0.0
    %3041 = vmatpush2.msra.mxu0 0.0
    %3042 = vmatprep.subr.mxu0 0.0
    %3043 = vmatpush2.msra.mxu0 0.0
    %3044 = vmatprep.subr.mxu0 0.0
    %3045 = vmatpush2.msra.mxu0 0.0
    %3046 = vmatprep.subr.mxu0 0.0
    %3047 = vmatpush2.msra.mxu0 0.0
    %3048 = vmatprep.subr.mxu0 0.0
    %3049 = vmatpush2.msra.mxu0 0.0
    %3050 = vmatprep.subr.mxu0 0.0
    %3051 = vmatpush2.msra.mxu0 0.0
    %3052 = vmatprep.subr.mxu0 0.0
    %3053 = vmatpush2.msra.mxu0 0.0
    %3054 = vmatprep.subr.mxu0 0.0
    %3055 = vmatpush2.msra.mxu0 0.0
    %3056 = vmatprep.subr.mxu0 0.0
    %3057 = vmatpush2.msra.mxu0 0.0
    %3058 = vmatprep.subr.mxu0 0.0
    %3059 = vmatpush2.msra.mxu0 0.0
    %3060 = vmatprep.subr.mxu0 0.0
    %3061 = vmatpush2.msra.mxu0 0.0
    %3062 = vmatprep.subr.mxu0 0.0
    %3063 = vmatpush2.msra.mxu0 0.0
    %3064 = vmatprep.subr.mxu0 0.0
    %3065 = vmatpush2.msra.mxu0 0.0
    %3066 = vmatprep.subr.mxu0 0.0
    %3067 = vmatpush2.msra.mxu0 0.0
    %3068 = vmatprep.subr.mxu0 0.0
    %3069 = vmatpush2.msra.mxu0 0.0
    %3070 = vmatprep.subr.mxu0 0.0
    %3071 = vmatpush2.msra.mxu0 0.0
    %3072 = vmatprep.mubr.f32.mxu0 0.0
    %3073 = vmatmul.mubr.f32.gmra.mxu0 %v3003
    %v3074 = vpop.f32.mrf.mxu0
    %v3075 = vadd.f32 %v3000, %v3074
    %v3076 = vpop.f32.mrf.mxu0
    %3077 = vmatprep.mubr.f32.mxu0 0.0
    %3078 = vmatmul.mubr.f32.gmra.mxu0 %v3006
    %v3079 = vpop.f32.mrf.mxu0
    %v3080 = vadd.f32 %v3000, %v3079
    %v3081 = vpop.f32.mrf.mxu0
    %3082 = vdwg.mxu0
    %v3083 = vadd.f32 %v2789, %v3075
    %v3084 = vadd.f32 %v2790, %v3080
    %v3085 = vld [vmem:[%s19] sm:$0x1]
    %v3086 = vld [vmem:[%s20] sm:$0x1]
    %v3087 = vsel %vm231, %v3083, 0.0
    %3088 = vadd.xlane.f32.xlu0 %v3087
    %v3089 = vpop.xlane.xlu0 %3088
    %v3090 = vsel %vm231, %v3084, 0.0
    %3091 = vadd.xlane.f32.xlu0 %v3090
    %v3092 = vpop.xlane.xlu0 %3091
    %v3093 = vmul.f32 %v3089, %v238
    %v3094 = vmul.f32 %v3092, %v238
    %v3095 = vsub.f32 %v3083, %v3093
    %v3096 = vsub.f32 %v3084, %v3094
    %v3097 = vmul.f32 %v3095, %v3095
    %v3098 = vmul.f32 %v3096, %v3096
    %v3099 = vsel %vm231, %v3097, 0.0
    %3100 = vadd.xlane.f32.xlu0 %v3099
    %v3101 = vpop.xlane.xlu0 %3100
    %v3102 = vsel %vm231, %v3098, 0.0
    %3103 = vadd.xlane.f32.xlu0 %v3102
    %v3104 = vpop.xlane.xlu0 %3103
    %v3105 = vmul.f32 %v3101, %v238
    %v3106 = vmul.f32 %v3104, %v238
    %v3107 = vadd.f32 %v3105, 1e-05
    %v3108 = vadd.f32 %v3106, 1e-05
    %v3109 = vrsqrt.pop %v3107
    %v3110 = vrsqrt.pop %v3108
    %v3111 = vmul.f32 %v3095, %v3109
    %v3112 = vmul.f32 %v3096, %v3110
    %v3114 = vlaneseq
    %v3115 = vshrl.u32 %v3114, 7
    %v3116 = vsub.s32 0, %v3115
    %v3117 = vrot.slane %v3085, %v3116
    %v3119 = vmul.f32 %v3111, %v3117
    %v3120 = vmul.f32 %v3112, %v3117
    %v3122 = vlaneseq
    %v3123 = vshrl.u32 %v3122, 7
    %v3124 = vsub.s32 0, %v3123
    %v3125 = vrot.slane %v3086, %v3124
    %v3127 = vadd.f32 %v3119, %v3125
    %v3128 = vadd.f32 %v3120, %v3125
    %v3129 = vld [vmem:[%s21] sm:$0xff]
    %v3130 = vld [vmem:[%s21 + $0x8] sm:$0xff]
    %v3131 = vld [vmem:[%s21 + $0x10] sm:$0xff]
    %v3132 = vld [vmem:[%s21 + $0x18] sm:$0xff]
    %v3133 = vld [vmem:[%s22] sm:$0x1]
    %v3135 = vlaneseq
    %v3136 = vshrl.u32 %v3135, 7
    %v3137 = vsub.s32 0, %v3136
    %v3138 = vrot.slane %v3133, %v3137
    %v3141 = vsel %vm231, %v3127, 0
    %v3144 = vsel %vm231, %v3128, 0
    %3146 = vmatprep.subr.mxu0 0.0
    %3147 = vmatpush1.msra.mxu0 0.0
    %3148 = vmatprep.subr.mxu0 0.0
    %3149 = vmatpush1.msra.mxu0 0.0
    %3150 = vmatprep.subr.mxu0 0.0
    %3151 = vmatpush1.msra.mxu0 0.0
    %3152 = vmatprep.subr.mxu0 0.0
    %3153 = vmatpush1.msra.mxu0 0.0
    %3154 = vmatprep.subr.mxu0 0.0
    %3155 = vmatpush1.msra.mxu0 0.0
    %3156 = vmatprep.subr.mxu0 0.0
    %3157 = vmatpush1.msra.mxu0 0.0
    %3158 = vmatprep.subr.mxu0 0.0
    %3159 = vmatpush1.msra.mxu0 0.0
    %3160 = vmatprep.subr.mxu0 0.0
    %3161 = vmatpush1.msra.mxu0 0.0
    %3162 = vmatprep.subr.mxu0 0.0
    %3163 = vmatpush1.msra.mxu0 0.0
    %3164 = vmatprep.subr.mxu0 0.0
    %3165 = vmatpush1.msra.mxu0 0.0
    %3166 = vmatprep.subr.mxu0 0.0
    %3167 = vmatpush1.msra.mxu0 0.0
    %3168 = vmatprep.subr.mxu0 0.0
    %3169 = vmatpush1.msra.mxu0 0.0
    %3170 = vmatprep.subr.mxu0 0.0
    %3171 = vmatpush1.msra.mxu0 %v3132
    %3172 = vmatprep.subr.mxu0 0.0
    %3173 = vmatpush1.msra.mxu0 %v3131
    %3174 = vmatprep.subr.mxu0 0.0
    %3175 = vmatpush1.msra.mxu0 %v3130
    %3176 = vmatprep.subr.mxu0 0.0
    %3177 = vmatpush1.msra.mxu0 %v3129
    %3178 = vmatprep.subr.mxu0 0.0
    %3179 = vmatpush2.msra.mxu0 0.0
    %3180 = vmatprep.subr.mxu0 0.0
    %3181 = vmatpush2.msra.mxu0 0.0
    %3182 = vmatprep.subr.mxu0 0.0
    %3183 = vmatpush2.msra.mxu0 0.0
    %3184 = vmatprep.subr.mxu0 0.0
    %3185 = vmatpush2.msra.mxu0 0.0
    %3186 = vmatprep.subr.mxu0 0.0
    %3187 = vmatpush2.msra.mxu0 0.0
    %3188 = vmatprep.subr.mxu0 0.0
    %3189 = vmatpush2.msra.mxu0 0.0
    %3190 = vmatprep.subr.mxu0 0.0
    %3191 = vmatpush2.msra.mxu0 0.0
    %3192 = vmatprep.subr.mxu0 0.0
    %3193 = vmatpush2.msra.mxu0 0.0
    %3194 = vmatprep.subr.mxu0 0.0
    %3195 = vmatpush2.msra.mxu0 0.0
    %3196 = vmatprep.subr.mxu0 0.0
    %3197 = vmatpush2.msra.mxu0 0.0
    %3198 = vmatprep.subr.mxu0 0.0
    %3199 = vmatpush2.msra.mxu0 0.0
    %3200 = vmatprep.subr.mxu0 0.0
    %3201 = vmatpush2.msra.mxu0 0.0
    %3202 = vmatprep.subr.mxu0 0.0
    %3203 = vmatpush2.msra.mxu0 0.0
    %3204 = vmatprep.subr.mxu0 0.0
    %3205 = vmatpush2.msra.mxu0 0.0
    %3206 = vmatprep.subr.mxu0 0.0
    %3207 = vmatpush2.msra.mxu0 0.0
    %3208 = vmatprep.subr.mxu0 0.0
    %3209 = vmatpush2.msra.mxu0 0.0
    %3210 = vmatprep.mubr.f32.mxu0 0.0
    %3211 = vmatmul.mubr.f32.gmra.mxu0 %v3141
    %v3212 = vpop.f32.mrf.mxu0
    %v3213 = vadd.f32 %v3138, %v3212
    %v3214 = vpop.f32.mrf.mxu0
    %3215 = vmatprep.mubr.f32.mxu0 0.0
    %3216 = vmatmul.mubr.f32.gmra.mxu0 %v3144
    %v3217 = vpop.f32.mrf.mxu0
    %v3218 = vadd.f32 %v3138, %v3217
    %v3219 = vpop.f32.mrf.mxu0
    %3220 = vdwg.mxu0
    %3221 = vst [vmem:[#allocation2] sm:$0xff] %v3213
    %3222 = vst [vmem:[#allocation2 + $0x8] sm:$0xff] %v3218
    // Predicated region
    $region94: #{tpu_custom_call.1} parent=1 // pred_check
      _
    $region95: #{tpu_custom_call.1} parent=1 // pred_check_branch
      %3224 = sbr.rel (0) target = $region97
    $region96: #{tpu_custom_call.1} parent=1 // pred_region
      %s3226 = ssub.s32 256, 256
      %3227 = vsyncadd [#allocation3], %s3226
      %s3228 = sshll.u32 [#allocation2], 4
      %s3229 = int_to_ptr.vmem [resolvable:$true] %s3228
      %3234 = dma.vmem_to_hbm [thread:$0]  %s3229, 256, %s23, [#allocation3], 128, 128, 8
    $region97: #{tpu_custom_call.1} parent=1 // pred_fallthru
      _
    // Predicated region
    $region98: #{tpu_custom_call.1} parent=1 // pred_check
      _
    $region99: #{tpu_custom_call.1} parent=1 // pred_check_branch
      %3236 = sbr.rel (0) target = $region101
    $region100: #{tpu_custom_call.1} parent=1 // pred_region
      %3237 = dma.done [#allocation3], 256
    $region101: #{tpu_custom_call.1} parent=1 // pred_fallthru
      _
    %3238 = vsyncpa [#allocation3], 1

</llo_original>
